<compile_context>
chip_gen: v6e
topology: v6e:2x2x1
jax: 0.10.0
libtpu: 0.0.40
codegen_flags: <defaults>
</compile_context>

<pallas_src>
import numpy as np

import jax
import jax.numpy as jnp
from jax.experimental import pallas as pl
from jax.experimental.pallas import tpu as pltpu


# ---------------------------------------------------------------------------
# In-kernel helpers
# ---------------------------------------------------------------------------
def _dot(a, b):
    # bf16 MXU inputs, float32 accumulation.
    return jnp.dot(a.astype(jnp.bfloat16), b.astype(jnp.bfloat16),
                   preferred_element_type=jnp.float32)


def _conv_bn_pool_relu(pad_ref, wb_ref, shift_ref):
    """3x3 conv (banded matmuls) + folded BN + 2x2 maxpool + ReLU, packed layout.

    pad_ref:   (bb, h+2, w*cin) f32; rows 0 and h+1 are the zero H-halo,
               rows 1..h hold the lane-packed input.
    wb_ref:    (3, w*cin, w*cout) bf16 banded weight (BN scale + W-pad folded,
               output columns ordered even-x | odd-x).
    shift_ref: (1, w*cout) f32 folded BN shift (conv bias included).
    returns:   (bb, h//2, (w//2)*cout) f32 -- packed input of the next layer.
    """
    bb, hp, kw = pad_ref.shape
    h = hp - 2
    n_out = wb_ref.shape[-1]
    half = n_out // 2                      # = (w//2) * cout

    acc = jnp.zeros((bb * h, n_out), jnp.float32)
    for dh in range(3):                    # 3 MXU pushes, K = w*cin each
        lhs = pad_ref[:, dh:dh + h, :].reshape(bb * h, kw)
        acc = acc + _dot(lhs, wb_ref[dh])
    y = (acc + shift_ref[...]).reshape(bb, h // 2, 2, n_out)

    # 2x2 max-pool: row pairs via the split sublane axis, column pairs via the
    # even-x | odd-x lane halves baked into the banded-weight column ordering.
    yh = jnp.maximum(y[:, :, 0, :], y[:, :, 1, :])
    yp = jnp.maximum(yh[:, :, :half], yh[:, :, half:])
    return jnp.maximum(yp, 0.0)            # F.relu(F.max_pool2d(.., 2))


def _student_fused_kernel(x_ref,
                          wb1_ref, t1_ref,
                          wb2_ref, t2_ref,
                          wb3_ref, t3_ref,
                          fw1_ref, ft_ref, fw2_ref, fb2_ref,
                          o_ref,
                          pad0_ref, pad1_ref, pad2_ref):
    bb = x_ref.shape[0]

    # Keep only the 1-row H halos at zero (interiors are fully overwritten each
    # step).  ~10x cheaper than re-zeroing the whole scratches and stays
    # correct if the grid is sharded across TensorCores (scratch is per-core).
    for ref in (pad0_ref, pad1_ref, pad2_ref):
        hp, kw = ref.shape[1], ref.shape[2]
        z = jnp.zeros((bb, 1, kw), jnp.float32)
        ref[:, 0:1, :] = z
        ref[:, hp - 1:hp, :] = z

    # Pack the raw NCHW input into the lane-packed, H-padded scratch.
    # Column order is channel-major (col = c*32 + x); conv1's banded weight
    # rows were built with the same ordering, so no wrapper-side transpose.
    packed = jnp.concatenate(
        [x_ref[:, 0, :, :], x_ref[:, 1, :, :], x_ref[:, 2, :, :]], axis=-1)
    pad0_ref[:, 1:33, :] = packed                                 # (bb,32,96)

    # conv1/bn1/pool/relu  -> (bb, 16, 16*nc)
    a1 = _conv_bn_pool_relu(pad0_ref, wb1_ref, t1_ref)
    pad1_ref[:, 1:17, :] = a1

    # conv2/bn2/pool/relu  -> (bb, 8, 8*2nc)
    a2 = _conv_bn_pool_relu(pad1_ref, wb2_ref, t2_ref)
    pad2_ref[:, 1:9, :] = a2

    # conv3/bn3/pool/relu  -> (bb, 4, 4*4nc)
    a3 = _conv_bn_pool_relu(pad2_ref, wb3_ref, t3_ref)

    # MLP head: fc1 (+ folded BatchNorm1d) + ReLU (+ identity dropout) + fc2.
    # fc1 is 4 per-row matmuls on the packed slab (no flatten relayout); the
    # fcbn1 scale and PyTorch's (c, y, x) flatten order are folded into fw1.
    f_h = ft_ref.shape[-1]
    hdn = jnp.zeros((bb, f_h), jnp.float32)
    for y in range(4):
        hdn = hdn + _dot(a3[:, y, :], fw1_ref[y])
    hdn = jnp.maximum(hdn + ft_ref[...], 0.0)
    # TODO(synk): dropout is the identity (eval-mode semantics).
    o_ref[...] = _dot(hdn, fw2_ref[...]) + fb2_ref[...]           # (bb, 128)


# ---------------------------------------------------------------------------
# Wrapper: single fused pallas_call, gridded over the batch.
# ---------------------------------------------------------------------------
def _rep_spec(a):
    # Whole-array block with a constant index -> stays VMEM-resident.
    return pl.BlockSpec(a.shape, lambda i, _nd=a.ndim: (0,) * _nd)


def _pick_batch_block(n):
    """Largest divisor of n <= 64; prefer >=2 grid steps (v7x megacore) when
    that keeps the block reasonably large."""
    divs = [d for d in range(1, n + 1) if n % d == 0 and d <= 64]
    bb = max(divs)
    two_step = [d for d in divs if n // d >= 2]
    if two_step and max(two_step) >= 8:
        bb = max(two_step)
    return bb


@jax.jit
def student_net_forward(x_nchw, params):
    """x_nchw: (N, 3, 32, 32) float32  ->  logits (N, 10) float32."""
    n = x_nchw.shape[0]
    assert x_nchw.shape[1:] == (3, 32, 32)
    bb = _pick_batch_block(n)
    nc = params["t1"].shape[-1] // 32            # t1 is (1, 32*nc)

    out = pl.pallas_call(
        _student_fused_kernel,
        out_shape=jax.ShapeDtypeStruct((n, 128), jnp.float32),
        grid_spec=pltpu.PrefetchScalarGridSpec(
            num_scalar_prefetch=0,
            grid=(n // bb,),
            in_specs=[
                pl.BlockSpec((bb, 3, 32, 32), lambda i: (i, 0, 0, 0)),
                _rep_spec(params["wb1"]), _rep_spec(params["t1"]),
                _rep_spec(params["wb2"]), _rep_spec(params["t2"]),
                _rep_spec(params["wb3"]), _rep_spec(params["t3"]),
                _rep_spec(params["fw1"]), _rep_spec(params["ft"]),
                _rep_spec(params["fw2"]), _rep_spec(params["fb2"]),
            ],
            out_specs=pl.BlockSpec((bb, 128), lambda i: (i, 0)),
            scratch_shapes=[
                pltpu.VMEM((bb, 34, 32 * 3), jnp.float32),   # packed padded x
                pltpu.VMEM((bb, 18, 16 * nc), jnp.float32),  # packed padded a1
                pltpu.VMEM((bb, 10, 16 * nc), jnp.float32),  # packed padded a2
            ],
        ),
        compiler_params=pltpu.CompilerParams(
            dimension_semantics=("parallel",),
            vmem_limit_bytes=32 * 1024 * 1024),
    )(x_nchw,
      params["wb1"], params["t1"], params["wb2"], params["t2"],
      params["wb3"], params["t3"], params["fw1"], params["ft"],
      params["fw2"], params["fb2"])
    return out[:, :10]                           # lane-dense store, slice here


# ---------------------------------------------------------------------------
# Parameter construction (deterministic, synthetic), folded once at init into
# kernel layouts: banded conv weights (BN scale + W-pad + pool column order),
# tiled BN shifts, packed fc1 rows, lane-padded fc2.
# ---------------------------------------------------------------------------
def _banded_conv_weight(w_pt, scale, w_spatial, channel_major_in):
    """Per-dh banded weight for a 3x3 / stride-1 / pad-1 conv.

    Rows index the lane-packed input row (length w*cin); W padding is folded
    in by clipping the band at the edges.  Output columns are ordered even-x
    first, odd-x second, so the 2x2 W-pool is a lane-half max and the pooled
    result is already in the next layer's packed order.
    """
    cout, cin = w_pt.shape[:2]
    w = w_pt * scale[:, None, None, None]               # fold BN scale
    K, N = w_spatial * cin, w_spatial * cout
    half = (w_spatial // 2) * cout
    B = np.zeros((3, K, N), np.float32)
    for x_out in range(w_spatial):
        col0 = (x_out % 2) * half + (x_out // 2) * cout
        for dw in range(3):
            x_in = x_out + dw - 1
            if not (0 <= x_in < w_spatial):
                continue                                  # W padding (zeros)
            blk = np.transpose(w[:, :, :, dw], (1, 2, 0))  # (cin, 3, cout)
            for dh in range(3):
                for ci in range(cin):
                    row = (ci * w_spatial + x_in) if channel_major_in \
                        else (x_in * cin + ci)
                    B[dh, row, col0:col0 + cout] = blk[ci, dh]
    return B


def init_params(seed, num_channels):
    nc = num_channels
    rng = np.random.default_rng(seed)

    def bn_fold(c, bias):
        gamma = 1.0 + 0.1 * rng.standard_normal(c).astype(np.float32)
        beta = 0.1 * rng.standard_normal(c).astype(np.float32)
        mean = 0.1 * rng.standard_normal(c).astype(np.float32)
        var = 0.5 + rng.random(c).astype(np.float32)
        scale = gamma / np.sqrt(var + 1e-5)
        shift = (bias - mean) * scale + beta
        return scale.astype(np.float32), shift.astype(np.float32)

    def conv_block(cin, cout, w_spatial, channel_major_in):
        w_pt = (rng.standard_normal((cout, cin, 3, 3)).astype(np.float32)
                / np.sqrt(9.0 * cin))
        bias = 0.05 * rng.standard_normal(cout).astype(np.float32)
        scale, shift = bn_fold(cout, bias)
        wb = _banded_conv_weight(w_pt, scale, w_spatial, channel_major_in)
        t = np.tile(shift, w_spatial)[None, :]            # (1, w*cout)
        return jnp.asarray(wb, jnp.bfloat16), jnp.asarray(t, jnp.float32)

    p = {}
    p["wb1"], p["t1"] = conv_block(3, nc, 32, channel_major_in=True)
    p["wb2"], p["t2"] = conv_block(nc, 2 * nc, 16, channel_major_in=False)
    p["wb3"], p["t3"] = conv_block(2 * nc, 4 * nc, 8, channel_major_in=False)

    c3 = 4 * nc
    f_in, f_h = 4 * 4 * c3, c3
    w1_pt = rng.standard_normal((f_h, f_in)).astype(np.float32) / np.sqrt(f_in)
    b1 = 0.05 * rng.standard_normal(f_h).astype(np.float32)
    s1, sh1 = bn_fold(f_h, b1)
    # PyTorch's view(-1, 4*4*4nc) flattens NCHW as (c, y, x); fold the fcbn1
    # scale into the columns and permute rows to the kernel's packed (y, x*c+c)
    # order so no runtime transpose / flatten relayout is needed.
    w1_scaled = w1_pt * s1[:, None]                       # (f_h, f_in)
    fw1 = np.transpose(w1_scaled.reshape(f_h, c3, 4, 4), (2, 3, 1, 0))
    fw1 = fw1.reshape(4, 4 * c3, f_h)                     # (y, 4*c3, f_h)
    p["fw1"] = jnp.asarray(fw1, jnp.bfloat16)
    p["ft"] = jnp.asarray(sh1[None, :], jnp.float32)

    w2_pt = rng.standard_normal((10, f_h)).astype(np.float32) / np.sqrt(f_h)
    b2 = 0.05 * rng.standard_normal(10).astype(np.float32)
    fw2 = np.zeros((f_h, 128), np.float32)
    fw2[:, :10] = w2_pt.T                                  # lane-pad fc2 to 128
    fb2 = np.zeros((1, 128), np.float32)
    fb2[0, :10] = b2
    p["fw2"] = jnp.asarray(fw2, jnp.bfloat16)
    p["fb2"] = jnp.asarray(fb2, jnp.float32)
    return p


if __name__ == "__main__":
    num_channels = 8          # params.num_channels
    batch = 2

    key = jax.random.PRNGKey(0)
    x = jax.random.normal(key, (batch, 3, 32, 32), jnp.float32)
    params = init_params(0, num_channels)

    out = jax.block_until_ready(student_net_forward(x, params))
    assert out.shape == (batch, 10) and out.dtype == jnp.float32
    assert bool(jnp.all(jnp.isfinite(out)))
    print("KERNEL_OK")
</pallas_src>

<mosaic_0001>
module attributes {stable_mosaic.version = 11 : i64} {
  func.func @_student_fused_kernel(%arg0: i32, %arg1: memref<2x3x32x32xf32, #tpu.memory_space<vmem>>, %arg2: memref<3x96x256xbf16, #tpu.memory_space<vmem>>, %arg3: memref<1x256xf32, #tpu.memory_space<vmem>>, %arg4: memref<3x128x256xbf16, #tpu.memory_space<vmem>>, %arg5: memref<1x256xf32, #tpu.memory_space<vmem>>, %arg6: memref<3x128x256xbf16, #tpu.memory_space<vmem>>, %arg7: memref<1x256xf32, #tpu.memory_space<vmem>>, %arg8: memref<4x128x32xbf16, #tpu.memory_space<vmem>>, %arg9: memref<1x32xf32, #tpu.memory_space<vmem>>, %arg10: memref<32x128xbf16, #tpu.memory_space<vmem>>, %arg11: memref<1x128xf32, #tpu.memory_space<vmem>>, %arg12: memref<2x128xf32, #tpu.memory_space<vmem>>, %arg13: memref<2x34x96xf32, #tpu.memory_space<vmem>>, %arg14: memref<2x18x128xf32, #tpu.memory_space<vmem>>, %arg15: memref<2x10x128xf32, #tpu.memory_space<vmem>>) attributes {dimension_semantics = [#tpu.dimension_semantics<parallel>], iteration_bounds = array<i64: 1>, scalar_prefetch = 0 : i64, scratch_operands = 3 : i64, tpu.core_type = #tpu.core_type<tc>, window_params = [{transform_indices = @transform_0, window_bounds = array<i64: 2, 3, 32, 32>}, {pipeline_mode = #tpu.pipeline_mode<synchronous>, transform_indices = @transform_1, window_bounds = array<i64: 3, 96, 256>}, {pipeline_mode = #tpu.pipeline_mode<synchronous>, transform_indices = @transform_2, window_bounds = array<i64: 1, 256>}, {pipeline_mode = #tpu.pipeline_mode<synchronous>, transform_indices = @transform_3, window_bounds = array<i64: 3, 128, 256>}, {pipeline_mode = #tpu.pipeline_mode<synchronous>, transform_indices = @transform_4, window_bounds = array<i64: 1, 256>}, {pipeline_mode = #tpu.pipeline_mode<synchronous>, transform_indices = @transform_5, window_bounds = array<i64: 3, 128, 256>}, {pipeline_mode = #tpu.pipeline_mode<synchronous>, transform_indices = @transform_6, window_bounds = array<i64: 1, 256>}, {pipeline_mode = #tpu.pipeline_mode<synchronous>, transform_indices = @transform_7, window_bounds = array<i64: 4, 128, 32>}, {pipeline_mode = #tpu.pipeline_mode<synchronous>, transform_indices = @transform_8, window_bounds = array<i64: 1, 32>}, {pipeline_mode = #tpu.pipeline_mode<synchronous>, transform_indices = @transform_9, window_bounds = array<i64: 32, 128>}, {pipeline_mode = #tpu.pipeline_mode<synchronous>, transform_indices = @transform_10, window_bounds = array<i64: 1, 128>}, {transform_indices = @transform_11, window_bounds = array<i64: 2, 128>}]} {
    %cst = arith.constant 0.000000e+00 : f32
    %0 = vector.broadcast %cst : f32 to vector<2x1x96xf32>
    %c0 = arith.constant 0 : index
    %c0_0 = arith.constant 0 : index
    %c0_1 = arith.constant 0 : index
    %1 = vector.load %arg13[%c0, %c0_0, %c0_1] : memref<2x34x96xf32, #tpu.memory_space<vmem>>, vector<2x1x96xf32>
    tpu.vector_store %arg13[%c0, %c0_0, %c0_1], %0 {strides = array<i32>} : memref<2x34x96xf32, #tpu.memory_space<vmem>>, vector<2x1x96xf32>,
    %c0_2 = arith.constant 0 : index
    %c33 = arith.constant 33 : index
    %c0_3 = arith.constant 0 : index
    %2 = vector.load %arg13[%c0_2, %c33, %c0_3] : memref<2x34x96xf32, #tpu.memory_space<vmem>>, vector<2x1x96xf32>
    tpu.vector_store %arg13[%c0_2, %c33, %c0_3], %0 {strides = array<i32>} : memref<2x34x96xf32, #tpu.memory_space<vmem>>, vector<2x1x96xf32>,
    %cst_4 = arith.constant 0.000000e+00 : f32
    %3 = vector.broadcast %cst_4 : f32 to vector<2x1x128xf32>
    %c0_5 = arith.constant 0 : index
    %c0_6 = arith.constant 0 : index
    %c0_7 = arith.constant 0 : index
    %4 = vector.load %arg14[%c0_5, %c0_6, %c0_7] : memref<2x18x128xf32, #tpu.memory_space<vmem>>, vector<2x1x128xf32>
    tpu.vector_store %arg14[%c0_5, %c0_6, %c0_7], %3 {strides = array<i32>} : memref<2x18x128xf32, #tpu.memory_space<vmem>>, vector<2x1x128xf32>,
    %c0_8 = arith.constant 0 : index
    %c17 = arith.constant 17 : index
    %c0_9 = arith.constant 0 : index
    %5 = vector.load %arg14[%c0_8, %c17, %c0_9] : memref<2x18x128xf32, #tpu.memory_space<vmem>>, vector<2x1x128xf32>
    tpu.vector_store %arg14[%c0_8, %c17, %c0_9], %3 {strides = array<i32>} : memref<2x18x128xf32, #tpu.memory_space<vmem>>, vector<2x1x128xf32>,
    %cst_10 = arith.constant 0.000000e+00 : f32
    %6 = vector.broadcast %cst_10 : f32 to vector<2x1x128xf32>
    %c0_11 = arith.constant 0 : index
    %c0_12 = arith.constant 0 : index
    %c0_13 = arith.constant 0 : index
    %7 = vector.load %arg15[%c0_11, %c0_12, %c0_13] : memref<2x10x128xf32, #tpu.memory_space<vmem>>, vector<2x1x128xf32>
    tpu.vector_store %arg15[%c0_11, %c0_12, %c0_13], %6 {strides = array<i32>} : memref<2x10x128xf32, #tpu.memory_space<vmem>>, vector<2x1x128xf32>,
    %c0_14 = arith.constant 0 : index
    %c9 = arith.constant 9 : index
    %c0_15 = arith.constant 0 : index
    %8 = vector.load %arg15[%c0_14, %c9, %c0_15] : memref<2x10x128xf32, #tpu.memory_space<vmem>>, vector<2x1x128xf32>
    tpu.vector_store %arg15[%c0_14, %c9, %c0_15], %6 {strides = array<i32>} : memref<2x10x128xf32, #tpu.memory_space<vmem>>, vector<2x1x128xf32>,
    %c0_16 = arith.constant 0 : index
    %c0_17 = arith.constant 0 : index
    %c0_18 = arith.constant 0 : index
    %c0_19 = arith.constant 0 : index
    %9 = vector.load %arg1[%c0_16, %c0_17, %c0_18, %c0_19] : memref<2x3x32x32xf32, #tpu.memory_space<vmem>>, vector<2x1x32x32xf32>
    %10 = vector.shape_cast %9 : vector<2x1x32x32xf32> to vector<2x32x32xf32>
    %c0_20 = arith.constant 0 : index
    %c1 = arith.constant 1 : index
    %c0_21 = arith.constant 0 : index
    %c0_22 = arith.constant 0 : index
    %11 = vector.load %arg1[%c0_20, %c1, %c0_21, %c0_22] : memref<2x3x32x32xf32, #tpu.memory_space<vmem>>, vector<2x1x32x32xf32>
    %12 = vector.shape_cast %11 : vector<2x1x32x32xf32> to vector<2x32x32xf32>
    %c0_23 = arith.constant 0 : index
    %c2 = arith.constant 2 : index
    %c0_24 = arith.constant 0 : index
    %c0_25 = arith.constant 0 : index
    %13 = vector.load %arg1[%c0_23, %c2, %c0_24, %c0_25] : memref<2x3x32x32xf32, #tpu.memory_space<vmem>>, vector<2x1x32x32xf32>
    %14 = vector.shape_cast %13 : vector<2x1x32x32xf32> to vector<2x32x32xf32>
    %15 = tpu.concatenate %10, %12, %14 in 2 : vector<2x32x32xf32>, vector<2x32x32xf32>, vector<2x32x32xf32> -> vector<2x32x96xf32>
    %c0_26 = arith.constant 0 : index
    %c1_27 = arith.constant 1 : index
    %c0_28 = arith.constant 0 : index
    %16 = vector.load %arg13[%c0_26, %c1_27, %c0_28] : memref<2x34x96xf32, #tpu.memory_space<vmem>>, vector<2x32x96xf32>
    tpu.vector_store %arg13[%c0_26, %c1_27, %c0_28], %15 {strides = array<i32>} : memref<2x34x96xf32, #tpu.memory_space<vmem>>, vector<2x32x96xf32>,
    %cst_29 = arith.constant 0.000000e+00 : f32
    %17 = vector.broadcast %cst_29 : f32 to vector<64x256xf32>
    %c0_30 = arith.constant 0 : index
    %c0_31 = arith.constant 0 : index
    %c0_32 = arith.constant 0 : index
    %18 = vector.load %arg13[%c0_30, %c0_31, %c0_32] : memref<2x34x96xf32, #tpu.memory_space<vmem>>, vector<2x32x96xf32>
    %19 = vector.shape_cast %18 : vector<2x32x96xf32> to vector<64x96xf32>
    %c0_33 = arith.constant 0 : index
    %c0_34 = arith.constant 0 : index
    %c0_35 = arith.constant 0 : index
    %20 = vector.load %arg2[%c0_33, %c0_34, %c0_35] : memref<3x96x256xbf16, #tpu.memory_space<vmem>>, vector<1x96x256xbf16>
    %21 = vector.shape_cast %20 : vector<1x96x256xbf16> to vector<96x256xbf16>
    %22 = arith.truncf %19 : vector<64x96xf32> to vector<64x96xbf16>
    %cst_36 = arith.constant dense<0.000000e+00> : vector<64x256xf32>
    %23 = tpu.matmul %22, %21, %cst_36 {dimension_numbers = #tpu.dot_dimension_numbers<[1], [0], [0], [1], [0, 0, 1, 1], [], []>} : vector<64x96xbf16>, vector<96x256xbf16>, vector<64x256xf32> -> vector<64x256xf32>
    %24 = arith.addf %17, %23 : vector<64x256xf32>
    %c0_37 = arith.constant 0 : index
    %c1_38 = arith.constant 1 : index
    %c0_39 = arith.constant 0 : index
    %25 = vector.load %arg13[%c0_37, %c1_38, %c0_39] : memref<2x34x96xf32, #tpu.memory_space<vmem>>, vector<2x32x96xf32>
    %26 = vector.shape_cast %25 : vector<2x32x96xf32> to vector<64x96xf32>
    %c1_40 = arith.constant 1 : index
    %c0_41 = arith.constant 0 : index
    %c0_42 = arith.constant 0 : index
    %27 = vector.load %arg2[%c1_40, %c0_41, %c0_42] : memref<3x96x256xbf16, #tpu.memory_space<vmem>>, vector<1x96x256xbf16>
    %28 = vector.shape_cast %27 : vector<1x96x256xbf16> to vector<96x256xbf16>
    %29 = arith.truncf %26 : vector<64x96xf32> to vector<64x96xbf16>
    %cst_43 = arith.constant dense<0.000000e+00> : vector<64x256xf32>
    %30 = tpu.matmul %29, %28, %cst_43 {dimension_numbers = #tpu.dot_dimension_numbers<[1], [0], [0], [1], [0, 0, 1, 1], [], []>} : vector<64x96xbf16>, vector<96x256xbf16>, vector<64x256xf32> -> vector<64x256xf32>
    %31 = arith.addf %24, %30 : vector<64x256xf32>
    %c0_44 = arith.constant 0 : index
    %c2_45 = arith.constant 2 : index
    %c0_46 = arith.constant 0 : index
    %32 = vector.load %arg13[%c0_44, %c2_45, %c0_46] : memref<2x34x96xf32, #tpu.memory_space<vmem>>, vector<2x32x96xf32>
    %33 = vector.shape_cast %32 : vector<2x32x96xf32> to vector<64x96xf32>
    %c2_47 = arith.constant 2 : index
    %c0_48 = arith.constant 0 : index
    %c0_49 = arith.constant 0 : index
    %34 = vector.load %arg2[%c2_47, %c0_48, %c0_49] : memref<3x96x256xbf16, #tpu.memory_space<vmem>>, vector<1x96x256xbf16>
    %35 = vector.shape_cast %34 : vector<1x96x256xbf16> to vector<96x256xbf16>
    %36 = arith.truncf %33 : vector<64x96xf32> to vector<64x96xbf16>
    %cst_50 = arith.constant dense<0.000000e+00> : vector<64x256xf32>
    %37 = tpu.matmul %36, %35, %cst_50 {dimension_numbers = #tpu.dot_dimension_numbers<[1], [0], [0], [1], [0, 0, 1, 1], [], []>} : vector<64x96xbf16>, vector<96x256xbf16>, vector<64x256xf32> -> vector<64x256xf32>
    %38 = arith.addf %31, %37 : vector<64x256xf32>
    %c0_51 = arith.constant 0 : index
    %c0_52 = arith.constant 0 : index
    %39 = vector.load %arg3[%c0_51, %c0_52] : memref<1x256xf32, #tpu.memory_space<vmem>>, vector<1x256xf32>
    %40 = vector.broadcast %39 : vector<1x256xf32> to vector<64x256xf32>
    %41 = arith.addf %38, %40 : vector<64x256xf32>
    %42 = vector.shape_cast %41 : vector<64x256xf32> to vector<2x16x2x256xf32>
    %43 = vector.extract_strided_slice %42 {offsets = [0, 0, 0, 0], sizes = [2, 16, 1, 256], strides = [1, 1, 1, 1]} : vector<2x16x2x256xf32> to vector<2x16x1x256xf32>
    %44 = vector.shape_cast %43 : vector<2x16x1x256xf32> to vector<2x16x256xf32>
    %45 = vector.extract_strided_slice %42 {offsets = [0, 0, 1, 0], sizes = [2, 16, 1, 256], strides = [1, 1, 1, 1]} : vector<2x16x2x256xf32> to vector<2x16x1x256xf32>
    %46 = vector.shape_cast %45 : vector<2x16x1x256xf32> to vector<2x16x256xf32>
    %47 = arith.maximumf %44, %46 : vector<2x16x256xf32>
    %48 = vector.extract_strided_slice %47 {offsets = [0, 0, 0], sizes = [2, 16, 128], strides = [1, 1, 1]} : vector<2x16x256xf32> to vector<2x16x128xf32>
    %49 = vector.extract_strided_slice %47 {offsets = [0, 0, 128], sizes = [2, 16, 128], strides = [1, 1, 1]} : vector<2x16x256xf32> to vector<2x16x128xf32>
    %50 = arith.maximumf %48, %49 : vector<2x16x128xf32>
    %cst_53 = arith.constant 0.000000e+00 : f32
    %51 = vector.broadcast %cst_53 : f32 to vector<2x16x128xf32>
    %52 = arith.maximumf %50, %51 : vector<2x16x128xf32>
    %c0_54 = arith.constant 0 : index
    %c1_55 = arith.constant 1 : index
    %c0_56 = arith.constant 0 : index
    %53 = vector.load %arg14[%c0_54, %c1_55, %c0_56] : memref<2x18x128xf32, #tpu.memory_space<vmem>>, vector<2x16x128xf32>
    tpu.vector_store %arg14[%c0_54, %c1_55, %c0_56], %52 {strides = array<i32>} : memref<2x18x128xf32, #tpu.memory_space<vmem>>, vector<2x16x128xf32>,
    %cst_57 = arith.constant 0.000000e+00 : f32
    %54 = vector.broadcast %cst_57 : f32 to vector<32x256xf32>
    %c0_58 = arith.constant 0 : index
    %c0_59 = arith.constant 0 : index
    %c0_60 = arith.constant 0 : index
    %55 = vector.load %arg14[%c0_58, %c0_59, %c0_60] : memref<2x18x128xf32, #tpu.memory_space<vmem>>, vector<2x16x128xf32>
    %56 = vector.shape_cast %55 : vector<2x16x128xf32> to vector<32x128xf32>
    %c0_61 = arith.constant 0 : index
    %c0_62 = arith.constant 0 : index
    %c0_63 = arith.constant 0 : index
    %57 = vector.load %arg4[%c0_61, %c0_62, %c0_63] : memref<3x128x256xbf16, #tpu.memory_space<vmem>>, vector<1x128x256xbf16>
    %58 = vector.shape_cast %57 : vector<1x128x256xbf16> to vector<128x256xbf16>
    %59 = arith.truncf %56 : vector<32x128xf32> to vector<32x128xbf16>
    %cst_64 = arith.constant dense<0.000000e+00> : vector<32x256xf32>
    %60 = tpu.matmul %59, %58, %cst_64 {dimension_numbers = #tpu.dot_dimension_numbers<[1], [0], [0], [1], [0, 0, 1, 1], [], []>} : vector<32x128xbf16>, vector<128x256xbf16>, vector<32x256xf32> -> vector<32x256xf32>
    %61 = arith.addf %54, %60 : vector<32x256xf32>
    %c0_65 = arith.constant 0 : index
    %c1_66 = arith.constant 1 : index
    %c0_67 = arith.constant 0 : index
    %62 = vector.load %arg14[%c0_65, %c1_66, %c0_67] : memref<2x18x128xf32, #tpu.memory_space<vmem>>, vector<2x16x128xf32>
    %63 = vector.shape_cast %62 : vector<2x16x128xf32> to vector<32x128xf32>
    %c1_68 = arith.constant 1 : index
    %c0_69 = arith.constant 0 : index
    %c0_70 = arith.constant 0 : index
    %64 = vector.load %arg4[%c1_68, %c0_69, %c0_70] : memref<3x128x256xbf16, #tpu.memory_space<vmem>>, vector<1x128x256xbf16>
    %65 = vector.shape_cast %64 : vector<1x128x256xbf16> to vector<128x256xbf16>
    %66 = arith.truncf %63 : vector<32x128xf32> to vector<32x128xbf16>
    %cst_71 = arith.constant dense<0.000000e+00> : vector<32x256xf32>
    %67 = tpu.matmul %66, %65, %cst_71 {dimension_numbers = #tpu.dot_dimension_numbers<[1], [0], [0], [1], [0, 0, 1, 1], [], []>} : vector<32x128xbf16>, vector<128x256xbf16>, vector<32x256xf32> -> vector<32x256xf32>
    %68 = arith.addf %61, %67 : vector<32x256xf32>
    %c0_72 = arith.constant 0 : index
    %c2_73 = arith.constant 2 : index
    %c0_74 = arith.constant 0 : index
    %69 = vector.load %arg14[%c0_72, %c2_73, %c0_74] : memref<2x18x128xf32, #tpu.memory_space<vmem>>, vector<2x16x128xf32>
    %70 = vector.shape_cast %69 : vector<2x16x128xf32> to vector<32x128xf32>
    %c2_75 = arith.constant 2 : index
    %c0_76 = arith.constant 0 : index
    %c0_77 = arith.constant 0 : index
    %71 = vector.load %arg4[%c2_75, %c0_76, %c0_77] : memref<3x128x256xbf16, #tpu.memory_space<vmem>>, vector<1x128x256xbf16>
    %72 = vector.shape_cast %71 : vector<1x128x256xbf16> to vector<128x256xbf16>
    %73 = arith.truncf %70 : vector<32x128xf32> to vector<32x128xbf16>
    %cst_78 = arith.constant dense<0.000000e+00> : vector<32x256xf32>
    %74 = tpu.matmul %73, %72, %cst_78 {dimension_numbers = #tpu.dot_dimension_numbers<[1], [0], [0], [1], [0, 0, 1, 1], [], []>} : vector<32x128xbf16>, vector<128x256xbf16>, vector<32x256xf32> -> vector<32x256xf32>
    %75 = arith.addf %68, %74 : vector<32x256xf32>
    %c0_79 = arith.constant 0 : index
    %c0_80 = arith.constant 0 : index
    %76 = vector.load %arg5[%c0_79, %c0_80] : memref<1x256xf32, #tpu.memory_space<vmem>>, vector<1x256xf32>
    %77 = vector.broadcast %76 : vector<1x256xf32> to vector<32x256xf32>
    %78 = arith.addf %75, %77 : vector<32x256xf32>
    %79 = vector.shape_cast %78 : vector<32x256xf32> to vector<2x8x2x256xf32>
    %80 = vector.extract_strided_slice %79 {offsets = [0, 0, 0, 0], sizes = [2, 8, 1, 256], strides = [1, 1, 1, 1]} : vector<2x8x2x256xf32> to vector<2x8x1x256xf32>
    %81 = vector.shape_cast %80 : vector<2x8x1x256xf32> to vector<2x8x256xf32>
    %82 = vector.extract_strided_slice %79 {offsets = [0, 0, 1, 0], sizes = [2, 8, 1, 256], strides = [1, 1, 1, 1]} : vector<2x8x2x256xf32> to vector<2x8x1x256xf32>
    %83 = vector.shape_cast %82 : vector<2x8x1x256xf32> to vector<2x8x256xf32>
    %84 = arith.maximumf %81, %83 : vector<2x8x256xf32>
    %85 = vector.extract_strided_slice %84 {offsets = [0, 0, 0], sizes = [2, 8, 128], strides = [1, 1, 1]} : vector<2x8x256xf32> to vector<2x8x128xf32>
    %86 = vector.extract_strided_slice %84 {offsets = [0, 0, 128], sizes = [2, 8, 128], strides = [1, 1, 1]} : vector<2x8x256xf32> to vector<2x8x128xf32>
    %87 = arith.maximumf %85, %86 : vector<2x8x128xf32>
    %cst_81 = arith.constant 0.000000e+00 : f32
    %88 = vector.broadcast %cst_81 : f32 to vector<2x8x128xf32>
    %89 = arith.maximumf %87, %88 : vector<2x8x128xf32>
    %c0_82 = arith.constant 0 : index
    %c1_83 = arith.constant 1 : index
    %c0_84 = arith.constant 0 : index
    %90 = vector.load %arg15[%c0_82, %c1_83, %c0_84] : memref<2x10x128xf32, #tpu.memory_space<vmem>>, vector<2x8x128xf32>
    tpu.vector_store %arg15[%c0_82, %c1_83, %c0_84], %89 {strides = array<i32>} : memref<2x10x128xf32, #tpu.memory_space<vmem>>, vector<2x8x128xf32>,
    %cst_85 = arith.constant 0.000000e+00 : f32
    %91 = vector.broadcast %cst_85 : f32 to vector<16x256xf32>
    %c0_86 = arith.constant 0 : index
    %c0_87 = arith.constant 0 : index
    %c0_88 = arith.constant 0 : index
    %92 = vector.load %arg15[%c0_86, %c0_87, %c0_88] : memref<2x10x128xf32, #tpu.memory_space<vmem>>, vector<2x8x128xf32>
    %93 = vector.shape_cast %92 : vector<2x8x128xf32> to vector<16x128xf32>
    %c0_89 = arith.constant 0 : index
    %c0_90 = arith.constant 0 : index
    %c0_91 = arith.constant 0 : index
    %94 = vector.load %arg6[%c0_89, %c0_90, %c0_91] : memref<3x128x256xbf16, #tpu.memory_space<vmem>>, vector<1x128x256xbf16>
    %95 = vector.shape_cast %94 : vector<1x128x256xbf16> to vector<128x256xbf16>
    %96 = arith.truncf %93 : vector<16x128xf32> to vector<16x128xbf16>
    %cst_92 = arith.constant dense<0.000000e+00> : vector<16x256xf32>
    %97 = tpu.matmul %96, %95, %cst_92 {dimension_numbers = #tpu.dot_dimension_numbers<[1], [0], [0], [1], [0, 0, 1, 1], [], []>} : vector<16x128xbf16>, vector<128x256xbf16>, vector<16x256xf32> -> vector<16x256xf32>
    %98 = arith.addf %91, %97 : vector<16x256xf32>
    %c0_93 = arith.constant 0 : index
    %c1_94 = arith.constant 1 : index
    %c0_95 = arith.constant 0 : index
    %99 = vector.load %arg15[%c0_93, %c1_94, %c0_95] : memref<2x10x128xf32, #tpu.memory_space<vmem>>, vector<2x8x128xf32>
    %100 = vector.shape_cast %99 : vector<2x8x128xf32> to vector<16x128xf32>
    %c1_96 = arith.constant 1 : index
    %c0_97 = arith.constant 0 : index
    %c0_98 = arith.constant 0 : index
    %101 = vector.load %arg6[%c1_96, %c0_97, %c0_98] : memref<3x128x256xbf16, #tpu.memory_space<vmem>>, vector<1x128x256xbf16>
    %102 = vector.shape_cast %101 : vector<1x128x256xbf16> to vector<128x256xbf16>
    %103 = arith.truncf %100 : vector<16x128xf32> to vector<16x128xbf16>
    %cst_99 = arith.constant dense<0.000000e+00> : vector<16x256xf32>
    %104 = tpu.matmul %103, %102, %cst_99 {dimension_numbers = #tpu.dot_dimension_numbers<[1], [0], [0], [1], [0, 0, 1, 1], [], []>} : vector<16x128xbf16>, vector<128x256xbf16>, vector<16x256xf32> -> vector<16x256xf32>
    %105 = arith.addf %98, %104 : vector<16x256xf32>
    %c0_100 = arith.constant 0 : index
    %c2_101 = arith.constant 2 : index
    %c0_102 = arith.constant 0 : index
    %106 = vector.load %arg15[%c0_100, %c2_101, %c0_102] : memref<2x10x128xf32, #tpu.memory_space<vmem>>, vector<2x8x128xf32>
    %107 = vector.shape_cast %106 : vector<2x8x128xf32> to vector<16x128xf32>
    %c2_103 = arith.constant 2 : index
    %c0_104 = arith.constant 0 : index
    %c0_105 = arith.constant 0 : index
    %108 = vector.load %arg6[%c2_103, %c0_104, %c0_105] : memref<3x128x256xbf16, #tpu.memory_space<vmem>>, vector<1x128x256xbf16>
    %109 = vector.shape_cast %108 : vector<1x128x256xbf16> to vector<128x256xbf16>
    %110 = arith.truncf %107 : vector<16x128xf32> to vector<16x128xbf16>
    %cst_106 = arith.constant dense<0.000000e+00> : vector<16x256xf32>
    %111 = tpu.matmul %110, %109, %cst_106 {dimension_numbers = #tpu.dot_dimension_numbers<[1], [0], [0], [1], [0, 0, 1, 1], [], []>} : vector<16x128xbf16>, vector<128x256xbf16>, vector<16x256xf32> -> vector<16x256xf32>
    %112 = arith.addf %105, %111 : vector<16x256xf32>
    %c0_107 = arith.constant 0 : index
    %c0_108 = arith.constant 0 : index
    %113 = vector.load %arg7[%c0_107, %c0_108] : memref<1x256xf32, #tpu.memory_space<vmem>>, vector<1x256xf32>
    %114 = vector.broadcast %113 : vector<1x256xf32> to vector<16x256xf32>
    %115 = arith.addf %112, %114 : vector<16x256xf32>
    %116 = vector.shape_cast %115 : vector<16x256xf32> to vector<2x4x2x256xf32>
    %117 = vector.extract_strided_slice %116 {offsets = [0, 0, 0, 0], sizes = [2, 4, 1, 256], strides = [1, 1, 1, 1]} : vector<2x4x2x256xf32> to vector<2x4x1x256xf32>
    %118 = vector.shape_cast %117 : vector<2x4x1x256xf32> to vector<2x4x256xf32>
    %119 = vector.extract_strided_slice %116 {offsets = [0, 0, 1, 0], sizes = [2, 4, 1, 256], strides = [1, 1, 1, 1]} : vector<2x4x2x256xf32> to vector<2x4x1x256xf32>
    %120 = vector.shape_cast %119 : vector<2x4x1x256xf32> to vector<2x4x256xf32>
    %121 = arith.maximumf %118, %120 : vector<2x4x256xf32>
    %122 = vector.extract_strided_slice %121 {offsets = [0, 0, 0], sizes = [2, 4, 128], strides = [1, 1, 1]} : vector<2x4x256xf32> to vector<2x4x128xf32>
    %123 = vector.extract_strided_slice %121 {offsets = [0, 0, 128], sizes = [2, 4, 128], strides = [1, 1, 1]} : vector<2x4x256xf32> to vector<2x4x128xf32>
    %124 = arith.maximumf %122, %123 : vector<2x4x128xf32>
    %cst_109 = arith.constant 0.000000e+00 : f32
    %125 = vector.broadcast %cst_109 : f32 to vector<2x4x128xf32>
    %126 = arith.maximumf %124, %125 : vector<2x4x128xf32>
    %cst_110 = arith.constant 0.000000e+00 : f32
    %127 = vector.broadcast %cst_110 : f32 to vector<2x32xf32>
    %128 = vector.extract_strided_slice %126 {offsets = [0, 0, 0], sizes = [2, 1, 128], strides = [1, 1, 1]} : vector<2x4x128xf32> to vector<2x1x128xf32>
    %129 = vector.shape_cast %128 : vector<2x1x128xf32> to vector<2x128xf32>
    %c0_111 = arith.constant 0 : index
    %c0_112 = arith.constant 0 : index
    %c0_113 = arith.constant 0 : index
    %130 = vector.load %arg8[%c0_111, %c0_112, %c0_113] : memref<4x128x32xbf16, #tpu.memory_space<vmem>>, vector<1x128x32xbf16>
    %131 = vector.shape_cast %130 : vector<1x128x32xbf16> to vector<128x32xbf16>
    %132 = arith.truncf %129 : vector<2x128xf32> to vector<2x128xbf16>
    %cst_114 = arith.constant dense<0.000000e+00> : vector<2x32xf32>
    %133 = tpu.matmul %132, %131, %cst_114 {dimension_numbers = #tpu.dot_dimension_numbers<[1], [0], [0], [1], [0, 0, 1, 1], [], []>} : vector<2x128xbf16>, vector<128x32xbf16>, vector<2x32xf32> -> vector<2x32xf32>
    %134 = arith.addf %127, %133 : vector<2x32xf32>
    %135 = vector.extract_strided_slice %126 {offsets = [0, 1, 0], sizes = [2, 1, 128], strides = [1, 1, 1]} : vector<2x4x128xf32> to vector<2x1x128xf32>
    %136 = vector.shape_cast %135 : vector<2x1x128xf32> to vector<2x128xf32>
    %c1_115 = arith.constant 1 : index
    %c0_116 = arith.constant 0 : index
    %c0_117 = arith.constant 0 : index
    %137 = vector.load %arg8[%c1_115, %c0_116, %c0_117] : memref<4x128x32xbf16, #tpu.memory_space<vmem>>, vector<1x128x32xbf16>
    %138 = vector.shape_cast %137 : vector<1x128x32xbf16> to vector<128x32xbf16>
    %139 = arith.truncf %136 : vector<2x128xf32> to vector<2x128xbf16>
    %cst_118 = arith.constant dense<0.000000e+00> : vector<2x32xf32>
    %140 = tpu.matmul %139, %138, %cst_118 {dimension_numbers = #tpu.dot_dimension_numbers<[1], [0], [0], [1], [0, 0, 1, 1], [], []>} : vector<2x128xbf16>, vector<128x32xbf16>, vector<2x32xf32> -> vector<2x32xf32>
    %141 = arith.addf %134, %140 : vector<2x32xf32>
    %142 = vector.extract_strided_slice %126 {offsets = [0, 2, 0], sizes = [2, 1, 128], strides = [1, 1, 1]} : vector<2x4x128xf32> to vector<2x1x128xf32>
    %143 = vector.shape_cast %142 : vector<2x1x128xf32> to vector<2x128xf32>
    %c2_119 = arith.constant 2 : index
    %c0_120 = arith.constant 0 : index
    %c0_121 = arith.constant 0 : index
    %144 = vector.load %arg8[%c2_119, %c0_120, %c0_121] : memref<4x128x32xbf16, #tpu.memory_space<vmem>>, vector<1x128x32xbf16>
    %145 = vector.shape_cast %144 : vector<1x128x32xbf16> to vector<128x32xbf16>
    %146 = arith.truncf %143 : vector<2x128xf32> to vector<2x128xbf16>
    %cst_122 = arith.constant dense<0.000000e+00> : vector<2x32xf32>
    %147 = tpu.matmul %146, %145, %cst_122 {dimension_numbers = #tpu.dot_dimension_numbers<[1], [0], [0], [1], [0, 0, 1, 1], [], []>} : vector<2x128xbf16>, vector<128x32xbf16>, vector<2x32xf32> -> vector<2x32xf32>
    %148 = arith.addf %141, %147 : vector<2x32xf32>
    %149 = vector.extract_strided_slice %126 {offsets = [0, 3, 0], sizes = [2, 1, 128], strides = [1, 1, 1]} : vector<2x4x128xf32> to vector<2x1x128xf32>
    %150 = vector.shape_cast %149 : vector<2x1x128xf32> to vector<2x128xf32>
    %c3 = arith.constant 3 : index
    %c0_123 = arith.constant 0 : index
    %c0_124 = arith.constant 0 : index
    %151 = vector.load %arg8[%c3, %c0_123, %c0_124] : memref<4x128x32xbf16, #tpu.memory_space<vmem>>, vector<1x128x32xbf16>
    %152 = vector.shape_cast %151 : vector<1x128x32xbf16> to vector<128x32xbf16>
    %153 = arith.truncf %150 : vector<2x128xf32> to vector<2x128xbf16>
    %cst_125 = arith.constant dense<0.000000e+00> : vector<2x32xf32>
    %154 = tpu.matmul %153, %152, %cst_125 {dimension_numbers = #tpu.dot_dimension_numbers<[1], [0], [0], [1], [0, 0, 1, 1], [], []>} : vector<2x128xbf16>, vector<128x32xbf16>, vector<2x32xf32> -> vector<2x32xf32>
    %155 = arith.addf %148, %154 : vector<2x32xf32>
    %c0_126 = arith.constant 0 : index
    %c0_127 = arith.constant 0 : index
    %156 = vector.load %arg9[%c0_126, %c0_127] : memref<1x32xf32, #tpu.memory_space<vmem>>, vector<1x32xf32>
    %157 = vector.broadcast %156 : vector<1x32xf32> to vector<2x32xf32>
    %158 = arith.addf %155, %157 : vector<2x32xf32>
    %cst_128 = arith.constant 0.000000e+00 : f32
    %159 = vector.broadcast %cst_128 : f32 to vector<2x32xf32>
    %160 = arith.maximumf %158, %159 : vector<2x32xf32>
    %c0_129 = arith.constant 0 : index
    %c0_130 = arith.constant 0 : index
    %161 = vector.load %arg10[%c0_129, %c0_130] : memref<32x128xbf16, #tpu.memory_space<vmem>>, vector<32x128xbf16>
    %162 = arith.truncf %160 : vector<2x32xf32> to vector<2x32xbf16>
    %cst_131 = arith.constant dense<0.000000e+00> : vector<2x128xf32>
    %163 = tpu.matmul %162, %161, %cst_131 {dimension_numbers = #tpu.dot_dimension_numbers<[1], [0], [0], [1], [0, 0, 1, 1], [], []>} : vector<2x32xbf16>, vector<32x128xbf16>, vector<2x128xf32> -> vector<2x128xf32>
    %c0_132 = arith.constant 0 : index
    %c0_133 = arith.constant 0 : index
    %164 = vector.load %arg11[%c0_132, %c0_133] : memref<1x128xf32, #tpu.memory_space<vmem>>, vector<1x128xf32>
    %165 = vector.broadcast %164 : vector<1x128xf32> to vector<2x128xf32>
    %166 = arith.addf %163, %165 : vector<2x128xf32>
    %c0_134 = arith.constant 0 : index
    %c0_135 = arith.constant 0 : index
    %167 = vector.load %arg12[%c0_134, %c0_135] : memref<2x128xf32, #tpu.memory_space<vmem>>, vector<2x128xf32>
    tpu.vector_store %arg12[%c0_134, %c0_135], %166 {strides = array<i32>} : memref<2x128xf32, #tpu.memory_space<vmem>>, vector<2x128xf32>,
    return
  }
  func.func @transform_0(%arg0: i32) -> (i32, i32, i32, i32) {
    %c0_i32 = arith.constant 0 : i32
    %c0_i32_0 = arith.constant 0 : i32
    %c0_i32_1 = arith.constant 0 : i32
    %c0_i32_2 = arith.constant 0 : i32
    return %arg0, %c0_i32, %c0_i32_0, %c0_i32_1 : i32, i32, i32, i32
  }
  func.func @transform_1(%arg0: i32) -> (i32, i32, i32) {
    %c0_i32 = arith.constant 0 : i32
    %c0_i32_0 = arith.constant 0 : i32
    %c0_i32_1 = arith.constant 0 : i32
    %c0_i32_2 = arith.constant 0 : i32
    return %c0_i32, %c0_i32_0, %c0_i32_1 : i32, i32, i32
  }
  func.func @transform_2(%arg0: i32) -> (i32, i32) {
    %c0_i32 = arith.constant 0 : i32
    %c0_i32_0 = arith.constant 0 : i32
    %c0_i32_1 = arith.constant 0 : i32
    return %c0_i32, %c0_i32_0 : i32, i32
  }
  func.func @transform_3(%arg0: i32) -> (i32, i32, i32) {
    %c0_i32 = arith.constant 0 : i32
    %c0_i32_0 = arith.constant 0 : i32
    %c0_i32_1 = arith.constant 0 : i32
    %c0_i32_2 = arith.constant 0 : i32
    return %c0_i32, %c0_i32_0, %c0_i32_1 : i32, i32, i32
  }
  func.func @transform_4(%arg0: i32) -> (i32, i32) {
    %c0_i32 = arith.constant 0 : i32
    %c0_i32_0 = arith.constant 0 : i32
    %c0_i32_1 = arith.constant 0 : i32
    return %c0_i32, %c0_i32_0 : i32, i32
  }
  func.func @transform_5(%arg0: i32) -> (i32, i32, i32) {
    %c0_i32 = arith.constant 0 : i32
    %c0_i32_0 = arith.constant 0 : i32
    %c0_i32_1 = arith.constant 0 : i32
    %c0_i32_2 = arith.constant 0 : i32
    return %c0_i32, %c0_i32_0, %c0_i32_1 : i32, i32, i32
  }
  func.func @transform_6(%arg0: i32) -> (i32, i32) {
    %c0_i32 = arith.constant 0 : i32
    %c0_i32_0 = arith.constant 0 : i32
    %c0_i32_1 = arith.constant 0 : i32
    return %c0_i32, %c0_i32_0 : i32, i32
  }
  func.func @transform_7(%arg0: i32) -> (i32, i32, i32) {
    %c0_i32 = arith.constant 0 : i32
    %c0_i32_0 = arith.constant 0 : i32
    %c0_i32_1 = arith.constant 0 : i32
    %c0_i32_2 = arith.constant 0 : i32
    return %c0_i32, %c0_i32_0, %c0_i32_1 : i32, i32, i32
  }
  func.func @transform_8(%arg0: i32) -> (i32, i32) {
    %c0_i32 = arith.constant 0 : i32
    %c0_i32_0 = arith.constant 0 : i32
    %c0_i32_1 = arith.constant 0 : i32
    return %c0_i32, %c0_i32_0 : i32, i32
  }
  func.func @transform_9(%arg0: i32) -> (i32, i32) {
    %c0_i32 = arith.constant 0 : i32
    %c0_i32_0 = arith.constant 0 : i32
    %c0_i32_1 = arith.constant 0 : i32
    return %c0_i32, %c0_i32_0 : i32, i32
  }
  func.func @transform_10(%arg0: i32) -> (i32, i32) {
    %c0_i32 = arith.constant 0 : i32
    %c0_i32_0 = arith.constant 0 : i32
    %c0_i32_1 = arith.constant 0 : i32
    return %c0_i32, %c0_i32_0 : i32, i32
  }
  func.func @transform_11(%arg0: i32) -> (i32, i32) {
    %c0_i32 = arith.constant 0 : i32
    %c0_i32_0 = arith.constant 0 : i32
    return %arg0, %c0_i32 : i32, i32
  }
}

</mosaic_0001>

<llo_original>
// kernel: student_net_forward.1
$region0: #{student_net_forward.1}
  #allocation0 [shape = 'u32[]', space=smem, size = 0x4, offset = 0x4, fixed_abs, tag = 'smem constant byte address 0x4 - core index']
  #allocation1 [shape = 'u32[144,128]{1,0:T(1,128)}', space=vmem, size = 0x12000, scoped, tag = 'internal scratch']
  #allocation2 [shape = 'f32[2,34,96]{2,1,0:T(8,128)}', space=vmem, size = 0xa000, scoped, tag = 'scratch operand']
  #allocation3 [shape = 'f32[2,18,128]{2,1,0:T(8,128)}', space=vmem, size = 0x6000, scoped, tag = 'scratch operand']
  #allocation4 [shape = 'f32[2,10,128]{2,1,0:T(8,128)}', space=vmem, size = 0x4000, scoped, tag = 'scratch operand']
  %s0 = inlined_call_operand.hbm [shape: f32[2,3,32,32], index: 0, kind: input, shape index: {}]
  %s1 = inlined_call_operand.vmem [shape: bf16[3,96,256], index: 1, kind: input, shape index: {}]
  %s2 = inlined_call_operand.vmem [shape: f32[1,256], index: 2, kind: input, shape index: {}]
  %s3 = inlined_call_operand.hbm [shape: bf16[3,128,256], index: 3, kind: input, shape index: {}]
  %s4 = inlined_call_operand.vmem [shape: f32[1,256], index: 4, kind: input, shape index: {}]
  %s5 = inlined_call_operand.hbm [shape: bf16[3,128,256], index: 5, kind: input, shape index: {}]
  %s6 = inlined_call_operand.vmem [shape: f32[1,256], index: 6, kind: input, shape index: {}]
  %s7 = inlined_call_operand.vmem [shape: bf16[4,128,32], index: 7, kind: input, shape index: {}]
  %s8 = inlined_call_operand.vmem [shape: f32[1,32], index: 8, kind: input, shape index: {}]
  %s9 = inlined_call_operand.vmem [shape: bf16[32,128], index: 9, kind: input, shape index: {}]
  %s10 = inlined_call_operand.vmem [shape: f32[1,128], index: 10, kind: input, shape index: {}]
  %s11 = inlined_call_operand.hbm [shape: f32[2,128], index: 11, kind: output, shape index: {}]
  %s12 = sld [smem:[#allocation0]]
  $region66: #{student_net_forward.1} parent=0
    _
  %s14 = ssub.s32 1, %s12
  %s15 = scalar_select 0, %s14, %s12
  $region1: #{student_net_forward.1} parent=0
    #allocation5 [shape = 'u8[98304]{0}', space=vmem, size = 0x18000, scoped, tag = 'input window, operand 0, single buffered']
    #allocation6 [shape = 's32[1]{0}', space=sflag, size = 0x4, scoped, tag = 'scoped memory for student_net_forward.1']
    #allocation7 [shape = 's32[1]{0}', space=sflag, size = 0x4, scoped, tag = 'scoped memory for student_net_forward.1']
    #allocation8 [shape = 'u8[196608]{0}', space=vmem, size = 0x30000, scoped, tag = 'input window, operand 3, single buffered']
    #allocation9 [shape = 's32[1]{0}', space=sflag, size = 0x4, scoped, tag = 'scoped memory for student_net_forward.1']
    #allocation10 [shape = 'u8[196608]{0}', space=vmem, size = 0x30000, scoped, tag = 'input window, operand 5, single buffered']
    #allocation11 [shape = 'u8[1024]{0}', space=vmem, size = 0x400, scoped, tag = 'output window, operand 0, single buffered']
    %16 = vsyncpa [#allocation6], 0
    %17 = vsyncpa [#allocation9], 0
    %18 = vsyncpa [#allocation7], 0
    // Predicated region
    $region2: #{student_net_forward.1} parent=1 // pred_check
      _
    $region3: #{student_net_forward.1} parent=1 // pred_check_branch
      %20 = sbr.rel (0) target = $region5
    $region4: #{student_net_forward.1} parent=1 // pred_region
      %s22 = ssub.s32 3072, 3072
      %23 = vsyncadd [#allocation6], %s22
      %s24 = sshll.u32 [#allocation5], 4
      %s25 = int_to_ptr.vmem [resolvable:$true] %s24
      %30 = dma.hbm_to_vmem [thread:$0]  %s0, 3072, %s25, [#allocation6], 128, 128, 8
    $region5: #{student_net_forward.1} parent=1 // pred_fallthru
      _
    // Predicated region
    $region6: #{student_net_forward.1} parent=1 // pred_check
      _
    $region7: #{student_net_forward.1} parent=1 // pred_check_branch
      %32 = sbr.rel (0) target = $region9
    $region8: #{student_net_forward.1} parent=1 // pred_region
      _
    $region9: #{student_net_forward.1} parent=1 // pred_fallthru
      _
    // Predicated region
    $region10: #{student_net_forward.1} parent=1 // pred_check
      _
    $region11: #{student_net_forward.1} parent=1 // pred_check_branch
      %34 = sbr.rel (0) target = $region13
    $region12: #{student_net_forward.1} parent=1 // pred_region
      _
    $region13: #{student_net_forward.1} parent=1 // pred_fallthru
      _
    // Predicated region
    $region14: #{student_net_forward.1} parent=1 // pred_check
      _
    $region15: #{student_net_forward.1} parent=1 // pred_check_branch
      %36 = sbr.rel (0) target = $region17
    $region16: #{student_net_forward.1} parent=1 // pred_region
      %s38 = ssub.s32 6144, 6144
      %39 = vsyncadd [#allocation9], %s38
      %s40 = sshll.u32 [#allocation8], 4
      %s41 = int_to_ptr.vmem [resolvable:$true] %s40
      %46 = dma.hbm_to_vmem [thread:$0]  %s3, 6144, %s41, [#allocation9], 128, 128, 8
    $region17: #{student_net_forward.1} parent=1 // pred_fallthru
      _
    // Predicated region
    $region18: #{student_net_forward.1} parent=1 // pred_check
      _
    $region19: #{student_net_forward.1} parent=1 // pred_check_branch
      %48 = sbr.rel (0) target = $region21
    $region20: #{student_net_forward.1} parent=1 // pred_region
      _
    $region21: #{student_net_forward.1} parent=1 // pred_fallthru
      _
    // Predicated region
    $region22: #{student_net_forward.1} parent=1 // pred_check
      _
    $region23: #{student_net_forward.1} parent=1 // pred_check_branch
      %50 = sbr.rel (0) target = $region25
    $region24: #{student_net_forward.1} parent=1 // pred_region
      %s52 = ssub.s32 6144, 6144
      %53 = vsyncadd [#allocation9], %s52
      %s54 = sshll.u32 [#allocation10], 4
      %s55 = int_to_ptr.vmem [resolvable:$true] %s54
      %60 = dma.hbm_to_vmem [thread:$0]  %s5, 6144, %s55, [#allocation9], 128, 128, 8
    $region25: #{student_net_forward.1} parent=1 // pred_fallthru
      _
    // Predicated region
    $region26: #{student_net_forward.1} parent=1 // pred_check
      _
    $region27: #{student_net_forward.1} parent=1 // pred_check_branch
      %62 = sbr.rel (0) target = $region29
    $region28: #{student_net_forward.1} parent=1 // pred_region
      _
    $region29: #{student_net_forward.1} parent=1 // pred_fallthru
      _
    // Predicated region
    $region30: #{student_net_forward.1} parent=1 // pred_check
      _
    $region31: #{student_net_forward.1} parent=1 // pred_check_branch
      %64 = sbr.rel (0) target = $region33
    $region32: #{student_net_forward.1} parent=1 // pred_region
      _
    $region33: #{student_net_forward.1} parent=1 // pred_fallthru
      _
    // Predicated region
    $region34: #{student_net_forward.1} parent=1 // pred_check
      _
    $region35: #{student_net_forward.1} parent=1 // pred_check_branch
      %66 = sbr.rel (0) target = $region37
    $region36: #{student_net_forward.1} parent=1 // pred_region
      _
    $region37: #{student_net_forward.1} parent=1 // pred_fallthru
      _
    // Predicated region
    $region38: #{student_net_forward.1} parent=1 // pred_check
      _
    $region39: #{student_net_forward.1} parent=1 // pred_check_branch
      %68 = sbr.rel (0) target = $region41
    $region40: #{student_net_forward.1} parent=1 // pred_region
      _
    $region41: #{student_net_forward.1} parent=1 // pred_fallthru
      _
    // Predicated region
    $region42: #{student_net_forward.1} parent=1 // pred_check
      _
    $region43: #{student_net_forward.1} parent=1 // pred_check_branch
      %70 = sbr.rel (0) target = $region45
    $region44: #{student_net_forward.1} parent=1 // pred_region
      _
    $region45: #{student_net_forward.1} parent=1 // pred_fallthru
      _
    // Predicated region
    $region46: #{student_net_forward.1} parent=1 // pred_check
      _
    $region47: #{student_net_forward.1} parent=1 // pred_check_branch
      %72 = sbr.rel (0) target = $region49
    $region48: #{student_net_forward.1} parent=1 // pred_region
      %73 = dma.done [#allocation6], 3072
    $region49: #{student_net_forward.1} parent=1 // pred_fallthru
      _
    // Predicated region
    $region50: #{student_net_forward.1} parent=1 // pred_check
      _
    $region51: #{student_net_forward.1} parent=1 // pred_check_branch
      %75 = sbr.rel (0) target = $region53
    $region52: #{student_net_forward.1} parent=1 // pred_region
      %76 = dma.done [#allocation9], 6144
    $region53: #{student_net_forward.1} parent=1 // pred_fallthru
      _
    // Predicated region
    $region54: #{student_net_forward.1} parent=1 // pred_check
      _
    $region55: #{student_net_forward.1} parent=1 // pred_check_branch
      %78 = sbr.rel (0) target = $region57
    $region56: #{student_net_forward.1} parent=1 // pred_region
      %79 = dma.done [#allocation9], 6144
    $region57: #{student_net_forward.1} parent=1 // pred_fallthru
      _
    %vm81 = vcmask 778240
    %82 = vst.msk [vmem:[#allocation2] sm:$0x1] %vm81, 0.0
    %83 = vst.msk [vmem:[#allocation2 + $0x28] sm:$0x1] %vm81, 0.0
    %84 = vst.msk [vmem:[#allocation2 + $0x21] sm:$0x1] %vm81, 0.0
    %85 = vst.msk [vmem:[#allocation2 + $0x49] sm:$0x1] %vm81, 0.0
    %86 = vst [vmem:[#allocation3] sm:$0x1] 0.0
    %87 = vst [vmem:[#allocation3 + $0x18] sm:$0x1] 0.0
    %88 = vst [vmem:[#allocation3 + $0x11] sm:$0x1] 0.0
    %89 = vst [vmem:[#allocation3 + $0x29] sm:$0x1] 0.0
    %90 = vst [vmem:[#allocation4] sm:$0x1] 0.0
    %91 = vst [vmem:[#allocation4 + $0x10] sm:$0x1] 0.0
    %92 = vst [vmem:[#allocation4 + $0x9] sm:$0x1] 0.0
    %93 = vst [vmem:[#allocation4 + $0x19] sm:$0x1] 0.0
    %v94 = vld [vmem:[#allocation5] sm:$0xff]
    %v95 = vld [vmem:[#allocation5 + $0x8] sm:$0xff]
    %v96 = vld [vmem:[#allocation5 + $0x10] sm:$0xff]
    %v97 = vld [vmem:[#allocation5 + $0x18] sm:$0xff]
    %v98 = vld [vmem:[#allocation5 + $0x60] sm:$0xff]
    %v99 = vld [vmem:[#allocation5 + $0x68] sm:$0xff]
    %v100 = vld [vmem:[#allocation5 + $0x70] sm:$0xff]
    %v101 = vld [vmem:[#allocation5 + $0x78] sm:$0xff]
    %s102 = scalar_lea.vmem [#allocation5], 32
    %v103 = vld [vmem:[%s102] sm:$0xff]
    %v104 = vld [vmem:[%s102 + $0x8] sm:$0xff]
    %v105 = vld [vmem:[%s102 + $0x10] sm:$0xff]
    %v106 = vld [vmem:[%s102 + $0x18] sm:$0xff]
    %v107 = vld [vmem:[%s102 + $0x60] sm:$0xff]
    %v108 = vld [vmem:[%s102 + $0x68] sm:$0xff]
    %v109 = vld [vmem:[%s102 + $0x70] sm:$0xff]
    %v110 = vld [vmem:[%s102 + $0x78] sm:$0xff]
    %s111 = scalar_lea.vmem [#allocation5], 64
    %v112 = vld [vmem:[%s111] sm:$0xff]
    %v113 = vld [vmem:[%s111 + $0x8] sm:$0xff]
    %v114 = vld [vmem:[%s111 + $0x10] sm:$0xff]
    %v115 = vld [vmem:[%s111 + $0x18] sm:$0xff]
    %v116 = vld [vmem:[%s111 + $0x60] sm:$0xff]
    %v117 = vld [vmem:[%s111 + $0x68] sm:$0xff]
    %v118 = vld [vmem:[%s111 + $0x70] sm:$0xff]
    %v119 = vld [vmem:[%s111 + $0x78] sm:$0xff]
    %128 = vrot.lane.b32.xlu0 %v103, 32
    %v129 = vpop.permute.xlu0 %128
    %130 = vrot.lane.b32.xlu0 %v104, 32
    %v131 = vpop.permute.xlu0 %130
    %132 = vrot.lane.b32.xlu0 %v105, 32
    %v133 = vpop.permute.xlu0 %132
    %134 = vrot.lane.b32.xlu0 %v106, 32
    %v135 = vpop.permute.xlu0 %134
    %136 = vrot.lane.b32.xlu0 %v107, 32
    %v137 = vpop.permute.xlu0 %136
    %138 = vrot.lane.b32.xlu0 %v108, 32
    %v139 = vpop.permute.xlu0 %138
    %140 = vrot.lane.b32.xlu0 %v109, 32
    %v141 = vpop.permute.xlu0 %140
    %142 = vrot.lane.b32.xlu0 %v110, 32
    %v143 = vpop.permute.xlu0 %142
    %160 = vrot.lane.b32.xlu0 %v112, 64
    %v161 = vpop.permute.xlu0 %160
    %162 = vrot.lane.b32.xlu0 %v113, 64
    %v163 = vpop.permute.xlu0 %162
    %164 = vrot.lane.b32.xlu0 %v114, 64
    %v165 = vpop.permute.xlu0 %164
    %166 = vrot.lane.b32.xlu0 %v115, 64
    %v167 = vpop.permute.xlu0 %166
    %168 = vrot.lane.b32.xlu0 %v116, 64
    %v169 = vpop.permute.xlu0 %168
    %170 = vrot.lane.b32.xlu0 %v117, 64
    %v171 = vpop.permute.xlu0 %170
    %172 = vrot.lane.b32.xlu0 %v118, 64
    %v173 = vpop.permute.xlu0 %172
    %174 = vrot.lane.b32.xlu0 %v119, 64
    %v175 = vpop.permute.xlu0 %174
    %vm184 = vcmask 261120
    %v185 = vsel %vm184, %v94, %v129
    %v186 = vsel %vm184, %v95, %v131
    %v187 = vsel %vm184, %v96, %v133
    %v188 = vsel %vm184, %v97, %v135
    %v189 = vsel %vm184, %v98, %v137
    %v190 = vsel %vm184, %v99, %v139
    %v191 = vsel %vm184, %v100, %v141
    %v192 = vsel %vm184, %v101, %v143
    %vm193 = vcmask 523264
    %v194 = vsel %vm193, %v185, %v161
    %v195 = vsel %vm193, %v186, %v163
    %v196 = vsel %vm193, %v187, %v165
    %v197 = vsel %vm193, %v188, %v167
    %v198 = vsel %vm193, %v189, %v169
    %v199 = vsel %vm193, %v190, %v171
    %v200 = vsel %vm193, %v191, %v173
    %v201 = vsel %vm193, %v192, %v175
    %vm202 = vcmask 785408
    %203 = vst.msk [vmem:[#allocation2 + $0x1] sm:$0xff] %vm202, %v194
    %204 = vst.msk [vmem:[#allocation2 + $0x9] sm:$0xff] %vm202, %v195
    %205 = vst.msk [vmem:[#allocation2 + $0x11] sm:$0xff] %vm202, %v196
    %206 = vst.msk [vmem:[#allocation2 + $0x19] sm:$0xff] %vm202, %v197
    %207 = vst.msk [vmem:[#allocation2 + $0x29] sm:$0xff] %vm202, %v198
    %208 = vst.msk [vmem:[#allocation2 + $0x31] sm:$0xff] %vm202, %v199
    %209 = vst.msk [vmem:[#allocation2 + $0x39] sm:$0xff] %vm202, %v200
    %210 = vst.msk [vmem:[#allocation2 + $0x41] sm:$0xff] %vm202, %v201
    %v211 = vld [vmem:[#allocation2] sm:$0xff]
    %v212 = vld [vmem:[#allocation2 + $0x8] sm:$0xff]
    %v213 = vld [vmem:[#allocation2 + $0x10] sm:$0xff]
    %v214 = vld [vmem:[#allocation2 + $0x18] sm:$0xff]
    %v215 = vld [vmem:[#allocation2 + $0x28] sm:$0xff]
    %v216 = vld [vmem:[#allocation2 + $0x30] sm:$0xff]
    %v217 = vld [vmem:[#allocation2 + $0x38] sm:$0xff]
    %v218 = vld [vmem:[#allocation2 + $0x40] sm:$0xff]
    %v219 = vld [vmem:[%s1] sm:$0xff]
    %v220 = vld [vmem:[%s1 + $0x8] sm:$0xff]
    %v221 = vld [vmem:[%s1 + $0x10] sm:$0xff]
    %v222 = vld [vmem:[%s1 + $0x18] sm:$0xff]
    %v223 = vld [vmem:[%s1 + $0x20] sm:$0xff]
    %v224 = vld [vmem:[%s1 + $0x28] sm:$0xff]
    %v225 = vld [vmem:[%s1 + $0x30] sm:$0xff]
    %v226 = vld [vmem:[%s1 + $0x38] sm:$0xff]
    %v227 = vld [vmem:[%s1 + $0x40] sm:$0xff]
    %v228 = vld [vmem:[%s1 + $0x48] sm:$0xff]
    %v229 = vld [vmem:[%s1 + $0x50] sm:$0xff]
    %v230 = vld [vmem:[%s1 + $0x58] sm:$0xff]
    %v231 = vpack.c.bf16 %v212, %v211
    %v232 = vpack.c.bf16 %v214, %v213
    %v233 = vpack.c.bf16 %v216, %v215
    %v234 = vpack.c.bf16 %v218, %v217
    %v235 = vld [vmem:[#allocation2 + $0x1] sm:$0xff]
    %v236 = vld [vmem:[#allocation2 + $0x9] sm:$0xff]
    %v237 = vld [vmem:[#allocation2 + $0x11] sm:$0xff]
    %v238 = vld [vmem:[#allocation2 + $0x19] sm:$0xff]
    %v239 = vld [vmem:[#allocation2 + $0x29] sm:$0xff]
    %v240 = vld [vmem:[#allocation2 + $0x31] sm:$0xff]
    %v241 = vld [vmem:[#allocation2 + $0x39] sm:$0xff]
    %v242 = vld [vmem:[#allocation2 + $0x41] sm:$0xff]
    %s243 = scalar_lea.vmem %s1, 96
    %v244 = vld [vmem:[%s243] sm:$0xff]
    %v245 = vld [vmem:[%s243 + $0x8] sm:$0xff]
    %v246 = vld [vmem:[%s243 + $0x10] sm:$0xff]
    %v247 = vld [vmem:[%s243 + $0x18] sm:$0xff]
    %v248 = vld [vmem:[%s243 + $0x20] sm:$0xff]
    %v249 = vld [vmem:[%s243 + $0x28] sm:$0xff]
    %v250 = vld [vmem:[%s243 + $0x30] sm:$0xff]
    %v251 = vld [vmem:[%s243 + $0x38] sm:$0xff]
    %v252 = vld [vmem:[%s243 + $0x40] sm:$0xff]
    %v253 = vld [vmem:[%s243 + $0x48] sm:$0xff]
    %v254 = vld [vmem:[%s243 + $0x50] sm:$0xff]
    %v255 = vld [vmem:[%s243 + $0x58] sm:$0xff]
    %v256 = vpack.c.bf16 %v236, %v235
    %v257 = vpack.c.bf16 %v238, %v237
    %v258 = vpack.c.bf16 %v240, %v239
    %v259 = vpack.c.bf16 %v242, %v241
    %v272 = vunpack.c.l.b16 %v244
    %v273 = vunpack.c.h.b16 %v244
    %v274 = vunpack.c.l.b16 %v245
    %v275 = vunpack.c.h.b16 %v245
    %v276 = vunpack.c.l.b16 %v246
    %v277 = vunpack.c.h.b16 %v246
    %v278 = vunpack.c.l.b16 %v247
    %v279 = vunpack.c.h.b16 %v247
    %v280 = vunpack.c.l.b16 %v248
    %v281 = vunpack.c.h.b16 %v248
    %v282 = vunpack.c.l.b16 %v249
    %v283 = vunpack.c.h.b16 %v249
    %v284 = vunpack.c.l.b16 %v250
    %v285 = vunpack.c.h.b16 %v250
    %v286 = vunpack.c.l.b16 %v251
    %v287 = vunpack.c.h.b16 %v251
    %v288 = vunpack.c.l.b16 %v252
    %v289 = vunpack.c.h.b16 %v252
    %v290 = vunpack.c.l.b16 %v253
    %v291 = vunpack.c.h.b16 %v253
    %v292 = vunpack.c.l.b16 %v254
    %v293 = vunpack.c.h.b16 %v254
    %v294 = vunpack.c.l.b16 %v255
    %v295 = vunpack.c.h.b16 %v255
    %v296 = vpack.c.b16 %v274, %v272
    %v297 = vpack.c.b16 %v275, %v273
    %v298 = vpack.c.b16 %v278, %v276
    %v299 = vpack.c.b16 %v279, %v277
    %v300 = vpack.c.b16 %v282, %v280
    %v301 = vpack.c.b16 %v283, %v281
    %v302 = vpack.c.b16 %v286, %v284
    %v303 = vpack.c.b16 %v287, %v285
    %v304 = vpack.c.b16 %v290, %v288
    %v305 = vpack.c.b16 %v291, %v289
    %v306 = vpack.c.b16 %v294, %v292
    %v307 = vpack.c.b16 %v295, %v293
    %v321 = vsel %vm202, %v256, 0
    %v324 = vsel %vm202, %v257, 0
    %v327 = vsel %vm202, %v258, 0
    %v330 = vsel %vm202, %v259, 0
    %332 = vmatprep.subr.bf16.mxu0 0
    %333 = vmatpush1.bf16.msra.mxu0 0
    %334 = vmatprep.subr.bf16.mxu0 0
    %335 = vmatpush1.bf16.msra.mxu0 0
    %336 = vmatprep.subr.bf16.mxu0 %v307
    %337 = vmatpush1.bf16.msra.mxu0 %v306
    %338 = vmatprep.subr.bf16.mxu0 %v305
    %339 = vmatpush1.bf16.msra.mxu0 %v304
    %340 = vmatprep.subr.bf16.mxu0 %v303
    %341 = vmatpush1.bf16.msra.mxu0 %v302
    %342 = vmatprep.subr.bf16.mxu0 %v301
    %343 = vmatpush1.bf16.msra.mxu0 %v300
    %344 = vmatprep.subr.bf16.mxu0 %v299
    %345 = vmatpush1.bf16.msra.mxu0 %v298
    %346 = vmatprep.subr.bf16.mxu0 %v297
    %347 = vmatpush1.bf16.msra.mxu0 %v296
    %348 = vmatprep.subr.bf16.mxu0 0
    %349 = vmatpush2.bf16.msra.mxu0 0
    %350 = vmatprep.subr.bf16.mxu0 0
    %351 = vmatpush2.bf16.msra.mxu0 0
    %352 = vmatprep.subr.bf16.mxu0 0
    %353 = vmatpush2.bf16.msra.mxu0 0
    %354 = vmatprep.subr.bf16.mxu0 0
    %355 = vmatpush2.bf16.msra.mxu0 0
    %356 = vmatprep.subr.bf16.mxu0 0
    %357 = vmatpush2.bf16.msra.mxu0 0
    %358 = vmatprep.subr.bf16.mxu0 0
    %359 = vmatpush2.bf16.msra.mxu0 0
    %360 = vmatprep.subr.bf16.mxu0 0
    %361 = vmatpush2.bf16.msra.mxu0 0
    %362 = vmatprep.subr.bf16.mxu0 0
    %363 = vmatpush2.bf16.msra.mxu0 0
    %364 = vmatprep.mubr.bf16.mxu0 0
    %365 = vmatmul.mubr.bf16.gmra.mxu0 %v321
    %v366 = vpop.f32.mrf.mxu0
    %v367 = vadd.f32 0.0, %v366
    %v368 = vpop.f32.mrf.mxu0
    %v369 = vadd.f32 0.0, %v368
    %v370 = vpop.f32.mrf.mxu0
    %v371 = vadd.f32 0.0, %v370
    %v372 = vpop.f32.mrf.mxu0
    %v373 = vadd.f32 0.0, %v372
    %374 = vmatprep.mubr.bf16.mxu0 0
    %375 = vmatmul.mubr.bf16.gmra.mxu0 %v324
    %v376 = vpop.f32.mrf.mxu0
    %v377 = vadd.f32 0.0, %v376
    %v378 = vpop.f32.mrf.mxu0
    %v379 = vadd.f32 0.0, %v378
    %v380 = vpop.f32.mrf.mxu0
    %v381 = vadd.f32 0.0, %v380
    %v382 = vpop.f32.mrf.mxu0
    %v383 = vadd.f32 0.0, %v382
    %384 = vmatprep.mubr.bf16.mxu0 0
    %385 = vmatmul.mubr.bf16.gmra.mxu0 %v327
    %v386 = vpop.f32.mrf.mxu0
    %v387 = vadd.f32 0.0, %v386
    %v388 = vpop.f32.mrf.mxu0
    %v389 = vadd.f32 0.0, %v388
    %v390 = vpop.f32.mrf.mxu0
    %v391 = vadd.f32 0.0, %v390
    %v392 = vpop.f32.mrf.mxu0
    %v393 = vadd.f32 0.0, %v392
    %394 = vmatprep.mubr.bf16.mxu0 0
    %395 = vmatmul.mubr.bf16.gmra.mxu0 %v330
    %v396 = vpop.f32.mrf.mxu0
    %v397 = vadd.f32 0.0, %v396
    %v398 = vpop.f32.mrf.mxu0
    %v399 = vadd.f32 0.0, %v398
    %v400 = vpop.f32.mrf.mxu0
    %v401 = vadd.f32 0.0, %v400
    %v402 = vpop.f32.mrf.mxu0
    %v403 = vadd.f32 0.0, %v402
    %404 = vdwg.mxu0
    %v417 = vunpack.c.l.b16 %v219
    %v418 = vunpack.c.h.b16 %v219
    %v419 = vunpack.c.l.b16 %v220
    %v420 = vunpack.c.h.b16 %v220
    %v421 = vunpack.c.l.b16 %v221
    %v422 = vunpack.c.h.b16 %v221
    %v423 = vunpack.c.l.b16 %v222
    %v424 = vunpack.c.h.b16 %v222
    %v425 = vunpack.c.l.b16 %v223
    %v426 = vunpack.c.h.b16 %v223
    %v427 = vunpack.c.l.b16 %v224
    %v428 = vunpack.c.h.b16 %v224
    %v429 = vunpack.c.l.b16 %v225
    %v430 = vunpack.c.h.b16 %v225
    %v431 = vunpack.c.l.b16 %v226
    %v432 = vunpack.c.h.b16 %v226
    %v433 = vunpack.c.l.b16 %v227
    %v434 = vunpack.c.h.b16 %v227
    %v435 = vunpack.c.l.b16 %v228
    %v436 = vunpack.c.h.b16 %v228
    %v437 = vunpack.c.l.b16 %v229
    %v438 = vunpack.c.h.b16 %v229
    %v439 = vunpack.c.l.b16 %v230
    %v440 = vunpack.c.h.b16 %v230
    %v441 = vpack.c.b16 %v419, %v417
    %v442 = vpack.c.b16 %v420, %v418
    %v443 = vpack.c.b16 %v423, %v421
    %v444 = vpack.c.b16 %v424, %v422
    %v445 = vpack.c.b16 %v427, %v425
    %v446 = vpack.c.b16 %v428, %v426
    %v447 = vpack.c.b16 %v431, %v429
    %v448 = vpack.c.b16 %v432, %v430
    %v449 = vpack.c.b16 %v435, %v433
    %v450 = vpack.c.b16 %v436, %v434
    %v451 = vpack.c.b16 %v439, %v437
    %v452 = vpack.c.b16 %v440, %v438
    %v466 = vsel %vm202, %v231, 0
    %v469 = vsel %vm202, %v232, 0
    %v472 = vsel %vm202, %v233, 0
    %v475 = vsel %vm202, %v234, 0
    %477 = vmatprep.subr.bf16.mxu0 0
    %478 = vmatpush1.bf16.msra.mxu0 0
    %479 = vmatprep.subr.bf16.mxu0 0
    %480 = vmatpush1.bf16.msra.mxu0 0
    %481 = vmatprep.subr.bf16.mxu0 %v452
    %482 = vmatpush1.bf16.msra.mxu0 %v451
    %483 = vmatprep.subr.bf16.mxu0 %v450
    %484 = vmatpush1.bf16.msra.mxu0 %v449
    %485 = vmatprep.subr.bf16.mxu0 %v448
    %486 = vmatpush1.bf16.msra.mxu0 %v447
    %487 = vmatprep.subr.bf16.mxu0 %v446
    %488 = vmatpush1.bf16.msra.mxu0 %v445
    %489 = vmatprep.subr.bf16.mxu0 %v444
    %490 = vmatpush1.bf16.msra.mxu0 %v443
    %491 = vmatprep.subr.bf16.mxu0 %v442
    %492 = vmatpush1.bf16.msra.mxu0 %v441
    %493 = vmatprep.subr.bf16.mxu0 0
    %494 = vmatpush2.bf16.msra.mxu0 0
    %495 = vmatprep.subr.bf16.mxu0 0
    %496 = vmatpush2.bf16.msra.mxu0 0
    %497 = vmatprep.subr.bf16.mxu0 0
    %498 = vmatpush2.bf16.msra.mxu0 0
    %499 = vmatprep.subr.bf16.mxu0 0
    %500 = vmatpush2.bf16.msra.mxu0 0
    %501 = vmatprep.subr.bf16.mxu0 0
    %502 = vmatpush2.bf16.msra.mxu0 0
    %503 = vmatprep.subr.bf16.mxu0 0
    %504 = vmatpush2.bf16.msra.mxu0 0
    %505 = vmatprep.subr.bf16.mxu0 0
    %506 = vmatpush2.bf16.msra.mxu0 0
    %507 = vmatprep.subr.bf16.mxu0 0
    %508 = vmatpush2.bf16.msra.mxu0 0
    %509 = vmatprep.mubr.bf16.mxu0 0
    %510 = vmatmul.mubr.bf16.gmra.mxu0 %v466
    %v511 = vpop.f32.mrf.mxu0
    %v512 = vadd.f32 %v367, %v511
    %v513 = vpop.f32.mrf.mxu0
    %v514 = vadd.f32 %v369, %v513
    %v515 = vpop.f32.mrf.mxu0
    %v516 = vadd.f32 %v371, %v515
    %v517 = vpop.f32.mrf.mxu0
    %v518 = vadd.f32 %v373, %v517
    %519 = vmatprep.mubr.bf16.mxu0 0
    %520 = vmatmul.mubr.bf16.gmra.mxu0 %v469
    %v521 = vpop.f32.mrf.mxu0
    %v522 = vadd.f32 %v377, %v521
    %v523 = vpop.f32.mrf.mxu0
    %v524 = vadd.f32 %v379, %v523
    %v525 = vpop.f32.mrf.mxu0
    %v526 = vadd.f32 %v381, %v525
    %v527 = vpop.f32.mrf.mxu0
    %v528 = vadd.f32 %v383, %v527
    %529 = vmatprep.mubr.bf16.mxu0 0
    %530 = vmatmul.mubr.bf16.gmra.mxu0 %v472
    %v531 = vpop.f32.mrf.mxu0
    %v532 = vadd.f32 %v387, %v531
    %v533 = vpop.f32.mrf.mxu0
    %v534 = vadd.f32 %v389, %v533
    %v535 = vpop.f32.mrf.mxu0
    %v536 = vadd.f32 %v391, %v535
    %v537 = vpop.f32.mrf.mxu0
    %v538 = vadd.f32 %v393, %v537
    %539 = vmatprep.mubr.bf16.mxu0 0
    %540 = vmatmul.mubr.bf16.gmra.mxu0 %v475
    %v541 = vpop.f32.mrf.mxu0
    %v542 = vadd.f32 %v397, %v541
    %v543 = vpop.f32.mrf.mxu0
    %v544 = vadd.f32 %v399, %v543
    %v545 = vpop.f32.mrf.mxu0
    %v546 = vadd.f32 %v401, %v545
    %v547 = vpop.f32.mrf.mxu0
    %v548 = vadd.f32 %v403, %v547
    %549 = vdwg.mxu0
    %v550 = vld [vmem:[#allocation2 + $0x2] sm:$0xff]
    %v551 = vld [vmem:[#allocation2 + $0xa] sm:$0xff]
    %v552 = vld [vmem:[#allocation2 + $0x12] sm:$0xff]
    %v553 = vld [vmem:[#allocation2 + $0x1a] sm:$0xff]
    %v554 = vld [vmem:[#allocation2 + $0x2a] sm:$0xff]
    %v555 = vld [vmem:[#allocation2 + $0x32] sm:$0xff]
    %v556 = vld [vmem:[#allocation2 + $0x3a] sm:$0xff]
    %v557 = vld [vmem:[#allocation2 + $0x42] sm:$0xff]
    %s558 = scalar_lea.vmem %s1, 192
    %v559 = vld [vmem:[%s558] sm:$0xff]
    %v560 = vld [vmem:[%s558 + $0x8] sm:$0xff]
    %v561 = vld [vmem:[%s558 + $0x10] sm:$0xff]
    %v562 = vld [vmem:[%s558 + $0x18] sm:$0xff]
    %v563 = vld [vmem:[%s558 + $0x20] sm:$0xff]
    %v564 = vld [vmem:[%s558 + $0x28] sm:$0xff]
    %v565 = vld [vmem:[%s558 + $0x30] sm:$0xff]
    %v566 = vld [vmem:[%s558 + $0x38] sm:$0xff]
    %v567 = vld [vmem:[%s558 + $0x40] sm:$0xff]
    %v568 = vld [vmem:[%s558 + $0x48] sm:$0xff]
    %v569 = vld [vmem:[%s558 + $0x50] sm:$0xff]
    %v570 = vld [vmem:[%s558 + $0x58] sm:$0xff]
    %v571 = vpack.c.bf16 %v551, %v550
    %v572 = vpack.c.bf16 %v553, %v552
    %v573 = vpack.c.bf16 %v555, %v554
    %v574 = vpack.c.bf16 %v557, %v556
    %v587 = vunpack.c.l.b16 %v559
    %v588 = vunpack.c.h.b16 %v559
    %v589 = vunpack.c.l.b16 %v560
    %v590 = vunpack.c.h.b16 %v560
    %v591 = vunpack.c.l.b16 %v561
    %v592 = vunpack.c.h.b16 %v561
    %v593 = vunpack.c.l.b16 %v562
    %v594 = vunpack.c.h.b16 %v562
    %v595 = vunpack.c.l.b16 %v563
    %v596 = vunpack.c.h.b16 %v563
    %v597 = vunpack.c.l.b16 %v564
    %v598 = vunpack.c.h.b16 %v564
    %v599 = vunpack.c.l.b16 %v565
    %v600 = vunpack.c.h.b16 %v565
    %v601 = vunpack.c.l.b16 %v566
    %v602 = vunpack.c.h.b16 %v566
    %v603 = vunpack.c.l.b16 %v567
    %v604 = vunpack.c.h.b16 %v567
    %v605 = vunpack.c.l.b16 %v568
    %v606 = vunpack.c.h.b16 %v568
    %v607 = vunpack.c.l.b16 %v569
    %v608 = vunpack.c.h.b16 %v569
    %v609 = vunpack.c.l.b16 %v570
    %v610 = vunpack.c.h.b16 %v570
    %v611 = vpack.c.b16 %v589, %v587
    %v612 = vpack.c.b16 %v590, %v588
    %v613 = vpack.c.b16 %v593, %v591
    %v614 = vpack.c.b16 %v594, %v592
    %v615 = vpack.c.b16 %v597, %v595
    %v616 = vpack.c.b16 %v598, %v596
    %v617 = vpack.c.b16 %v601, %v599
    %v618 = vpack.c.b16 %v602, %v600
    %v619 = vpack.c.b16 %v605, %v603
    %v620 = vpack.c.b16 %v606, %v604
    %v621 = vpack.c.b16 %v609, %v607
    %v622 = vpack.c.b16 %v610, %v608
    %v636 = vsel %vm202, %v571, 0
    %v639 = vsel %vm202, %v572, 0
    %v642 = vsel %vm202, %v573, 0
    %v645 = vsel %vm202, %v574, 0
    %647 = vmatprep.subr.bf16.mxu0 0
    %648 = vmatpush1.bf16.msra.mxu0 0
    %649 = vmatprep.subr.bf16.mxu0 0
    %650 = vmatpush1.bf16.msra.mxu0 0
    %651 = vmatprep.subr.bf16.mxu0 %v622
    %652 = vmatpush1.bf16.msra.mxu0 %v621
    %653 = vmatprep.subr.bf16.mxu0 %v620
    %654 = vmatpush1.bf16.msra.mxu0 %v619
    %655 = vmatprep.subr.bf16.mxu0 %v618
    %656 = vmatpush1.bf16.msra.mxu0 %v617
    %657 = vmatprep.subr.bf16.mxu0 %v616
    %658 = vmatpush1.bf16.msra.mxu0 %v615
    %659 = vmatprep.subr.bf16.mxu0 %v614
    %660 = vmatpush1.bf16.msra.mxu0 %v613
    %661 = vmatprep.subr.bf16.mxu0 %v612
    %662 = vmatpush1.bf16.msra.mxu0 %v611
    %663 = vmatprep.subr.bf16.mxu0 0
    %664 = vmatpush2.bf16.msra.mxu0 0
    %665 = vmatprep.subr.bf16.mxu0 0
    %666 = vmatpush2.bf16.msra.mxu0 0
    %667 = vmatprep.subr.bf16.mxu0 0
    %668 = vmatpush2.bf16.msra.mxu0 0
    %669 = vmatprep.subr.bf16.mxu0 0
    %670 = vmatpush2.bf16.msra.mxu0 0
    %671 = vmatprep.subr.bf16.mxu0 0
    %672 = vmatpush2.bf16.msra.mxu0 0
    %673 = vmatprep.subr.bf16.mxu0 0
    %674 = vmatpush2.bf16.msra.mxu0 0
    %675 = vmatprep.subr.bf16.mxu0 0
    %676 = vmatpush2.bf16.msra.mxu0 0
    %677 = vmatprep.subr.bf16.mxu0 0
    %678 = vmatpush2.bf16.msra.mxu0 0
    %679 = vmatprep.mubr.bf16.mxu0 0
    %680 = vmatmul.mubr.bf16.gmra.mxu0 %v636
    %v681 = vpop.f32.mrf.mxu0
    %v682 = vadd.f32 0.0, %v681
    %v683 = vpop.f32.mrf.mxu0
    %v684 = vadd.f32 0.0, %v683
    %v685 = vpop.f32.mrf.mxu0
    %v686 = vadd.f32 0.0, %v685
    %v687 = vpop.f32.mrf.mxu0
    %v688 = vadd.f32 0.0, %v687
    %689 = vmatprep.mubr.bf16.mxu0 0
    %690 = vmatmul.mubr.bf16.gmra.mxu0 %v639
    %v691 = vpop.f32.mrf.mxu0
    %v692 = vadd.f32 0.0, %v691
    %v693 = vpop.f32.mrf.mxu0
    %v694 = vadd.f32 0.0, %v693
    %v695 = vpop.f32.mrf.mxu0
    %v696 = vadd.f32 0.0, %v695
    %v697 = vpop.f32.mrf.mxu0
    %v698 = vadd.f32 0.0, %v697
    %699 = vmatprep.mubr.bf16.mxu0 0
    %700 = vmatmul.mubr.bf16.gmra.mxu0 %v642
    %v701 = vpop.f32.mrf.mxu0
    %v702 = vadd.f32 0.0, %v701
    %v703 = vpop.f32.mrf.mxu0
    %v704 = vadd.f32 0.0, %v703
    %v705 = vpop.f32.mrf.mxu0
    %v706 = vadd.f32 0.0, %v705
    %v707 = vpop.f32.mrf.mxu0
    %v708 = vadd.f32 0.0, %v707
    %709 = vmatprep.mubr.bf16.mxu0 0
    %710 = vmatmul.mubr.bf16.gmra.mxu0 %v645
    %v711 = vpop.f32.mrf.mxu0
    %v712 = vadd.f32 0.0, %v711
    %v713 = vpop.f32.mrf.mxu0
    %v714 = vadd.f32 0.0, %v713
    %v715 = vpop.f32.mrf.mxu0
    %v716 = vadd.f32 0.0, %v715
    %v717 = vpop.f32.mrf.mxu0
    %v718 = vadd.f32 0.0, %v717
    %719 = vdwg.mxu0
    %v720 = vadd.f32 %v512, %v682
    %v721 = vadd.f32 %v514, %v684
    %v722 = vadd.f32 %v516, %v686
    %v723 = vadd.f32 %v518, %v688
    %v724 = vadd.f32 %v522, %v692
    %v725 = vadd.f32 %v524, %v694
    %v726 = vadd.f32 %v526, %v696
    %v727 = vadd.f32 %v528, %v698
    %v728 = vadd.f32 %v532, %v702
    %v729 = vadd.f32 %v534, %v704
    %v730 = vadd.f32 %v536, %v706
    %v731 = vadd.f32 %v538, %v708
    %v732 = vadd.f32 %v542, %v712
    %v733 = vadd.f32 %v544, %v714
    %v734 = vadd.f32 %v546, %v716
    %v735 = vadd.f32 %v548, %v718
    %v736 = vld [vmem:[%s2] sm:$0x3]
    %v738 = vlaneseq
    %v739 = vshrl.u32 %v738, 7
    %v740 = vsub.s32 0, %v739
    %v741 = vrot.slane %v736, %v740
    %v742 = vlaneseq
    %v743 = vshrl.u32 %v742, 7
    %v744 = vsub.s32 1, %v743
    %v745 = vrot.slane %v736, %v744
    %v748 = vadd.f32 %v720, %v741
    %v749 = vadd.f32 %v721, %v745
    %v750 = vadd.f32 %v722, %v741
    %v751 = vadd.f32 %v723, %v745
    %v752 = vadd.f32 %v724, %v741
    %v753 = vadd.f32 %v725, %v745
    %v754 = vadd.f32 %v726, %v741
    %v755 = vadd.f32 %v727, %v745
    %v756 = vadd.f32 %v728, %v741
    %v757 = vadd.f32 %v729, %v745
    %v758 = vadd.f32 %v730, %v741
    %v759 = vadd.f32 %v731, %v745
    %v760 = vadd.f32 %v732, %v741
    %v761 = vadd.f32 %v733, %v745
    %v762 = vadd.f32 %v734, %v741
    %v763 = vadd.f32 %v735, %v745
    %v780 = vcombine.low %v748, %v749
    %v781 = vcombine.high %v748, %v749
    %v783 = vunpack.c.l.s4 1983009808
    %v784 = vunpack.c.0.s8 %v783
    %v785 = vlaneseq
    %v786 = vshrl.u32 %v785, 7
    %v787 = vsub.s32 %v784, %v786
    %v788 = vrot.slane %v780, %v787
    %v790 = vunpack.c.l.s4 1983009808
    %v791 = vunpack.c.0.s8 %v790
    %v792 = vlaneseq
    %v793 = vshrl.u32 %v792, 7
    %v794 = vsub.s32 %v791, %v793
    %v795 = vrot.slane %v781, %v794
    %v796 = vcombine.high %v788, %v788
    %v797 = vcombine.high %v795, %v795
    %v798 = vcombine.low %v750, %v751
    %v799 = vcombine.high %v750, %v751
    %v801 = vunpack.c.l.s4 1983009808
    %v802 = vunpack.c.0.s8 %v801
    %v803 = vlaneseq
    %v804 = vshrl.u32 %v803, 7
    %v805 = vsub.s32 %v802, %v804
    %v806 = vrot.slane %v798, %v805
    %v808 = vunpack.c.l.s4 1983009808
    %v809 = vunpack.c.0.s8 %v808
    %v810 = vlaneseq
    %v811 = vshrl.u32 %v810, 7
    %v812 = vsub.s32 %v809, %v811
    %v813 = vrot.slane %v799, %v812
    %v814 = vcombine.high %v806, %v806
    %v815 = vcombine.high %v813, %v813
    %v816 = vcombine.low %v752, %v753
    %v817 = vcombine.high %v752, %v753
    %v819 = vunpack.c.l.s4 1983009808
    %v820 = vunpack.c.0.s8 %v819
    %v821 = vlaneseq
    %v822 = vshrl.u32 %v821, 7
    %v823 = vsub.s32 %v820, %v822
    %v824 = vrot.slane %v816, %v823
    %v826 = vunpack.c.l.s4 1983009808
    %v827 = vunpack.c.0.s8 %v826
    %v828 = vlaneseq
    %v829 = vshrl.u32 %v828, 7
    %v830 = vsub.s32 %v827, %v829
    %v831 = vrot.slane %v817, %v830
    %v832 = vcombine.high %v824, %v824
    %v833 = vcombine.high %v831, %v831
    %v834 = vcombine.low %v754, %v755
    %v835 = vcombine.high %v754, %v755
    %v837 = vunpack.c.l.s4 1983009808
    %v838 = vunpack.c.0.s8 %v837
    %v839 = vlaneseq
    %v840 = vshrl.u32 %v839, 7
    %v841 = vsub.s32 %v838, %v840
    %v842 = vrot.slane %v834, %v841
    %v844 = vunpack.c.l.s4 1983009808
    %v845 = vunpack.c.0.s8 %v844
    %v846 = vlaneseq
    %v847 = vshrl.u32 %v846, 7
    %v848 = vsub.s32 %v845, %v847
    %v849 = vrot.slane %v835, %v848
    %v850 = vcombine.high %v842, %v842
    %v851 = vcombine.high %v849, %v849
    %v852 = vcombine.low %v756, %v757
    %v853 = vcombine.high %v756, %v757
    %v855 = vunpack.c.l.s4 1983009808
    %v856 = vunpack.c.0.s8 %v855
    %v857 = vlaneseq
    %v858 = vshrl.u32 %v857, 7
    %v859 = vsub.s32 %v856, %v858
    %v860 = vrot.slane %v852, %v859
    %v862 = vunpack.c.l.s4 1983009808
    %v863 = vunpack.c.0.s8 %v862
    %v864 = vlaneseq
    %v865 = vshrl.u32 %v864, 7
    %v866 = vsub.s32 %v863, %v865
    %v867 = vrot.slane %v853, %v866
    %v868 = vcombine.high %v860, %v860
    %v869 = vcombine.high %v867, %v867
    %v870 = vcombine.low %v758, %v759
    %v871 = vcombine.high %v758, %v759
    %v873 = vunpack.c.l.s4 1983009808
    %v874 = vunpack.c.0.s8 %v873
    %v875 = vlaneseq
    %v876 = vshrl.u32 %v875, 7
    %v877 = vsub.s32 %v874, %v876
    %v878 = vrot.slane %v870, %v877
    %v880 = vunpack.c.l.s4 1983009808
    %v881 = vunpack.c.0.s8 %v880
    %v882 = vlaneseq
    %v883 = vshrl.u32 %v882, 7
    %v884 = vsub.s32 %v881, %v883
    %v885 = vrot.slane %v871, %v884
    %v886 = vcombine.high %v878, %v878
    %v887 = vcombine.high %v885, %v885
    %v888 = vcombine.low %v760, %v761
    %v889 = vcombine.high %v760, %v761
    %v891 = vunpack.c.l.s4 1983009808
    %v892 = vunpack.c.0.s8 %v891
    %v893 = vlaneseq
    %v894 = vshrl.u32 %v893, 7
    %v895 = vsub.s32 %v892, %v894
    %v896 = vrot.slane %v888, %v895
    %v898 = vunpack.c.l.s4 1983009808
    %v899 = vunpack.c.0.s8 %v898
    %v900 = vlaneseq
    %v901 = vshrl.u32 %v900, 7
    %v902 = vsub.s32 %v899, %v901
    %v903 = vrot.slane %v889, %v902
    %v904 = vcombine.high %v896, %v896
    %v905 = vcombine.high %v903, %v903
    %v906 = vcombine.low %v762, %v763
    %v907 = vcombine.high %v762, %v763
    %v909 = vunpack.c.l.s4 1983009808
    %v910 = vunpack.c.0.s8 %v909
    %v911 = vlaneseq
    %v912 = vshrl.u32 %v911, 7
    %v913 = vsub.s32 %v910, %v912
    %v914 = vrot.slane %v906, %v913
    %v916 = vunpack.c.l.s4 1983009808
    %v917 = vunpack.c.0.s8 %v916
    %v918 = vlaneseq
    %v919 = vshrl.u32 %v918, 7
    %v920 = vsub.s32 %v917, %v919
    %v921 = vrot.slane %v907, %v920
    %v922 = vcombine.high %v914, %v914
    %v923 = vcombine.high %v921, %v921
    %v956 = vrot.slane %v788, 7
    %v957 = vrot.slane %v956, 2
    %v958 = vrot.slane %v796, 7
    %v959 = vrot.slane %v958, 2
    %v960 = vrot.slane %v795, 7
    %v961 = vrot.slane %v960, 2
    %v962 = vrot.slane %v797, 7
    %v963 = vrot.slane %v962, 2
    %v964 = vrot.slane %v806, 7
    %v965 = vrot.slane %v964, 2
    %v966 = vrot.slane %v814, 7
    %v967 = vrot.slane %v966, 2
    %v968 = vrot.slane %v813, 7
    %v969 = vrot.slane %v968, 2
    %v970 = vrot.slane %v815, 7
    %v971 = vrot.slane %v970, 2
    %v972 = vrot.slane %v824, 7
    %v973 = vrot.slane %v972, 2
    %v974 = vrot.slane %v832, 7
    %v975 = vrot.slane %v974, 2
    %v976 = vrot.slane %v831, 7
    %v977 = vrot.slane %v976, 2
    %v978 = vrot.slane %v833, 7
    %v979 = vrot.slane %v978, 2
    %v980 = vrot.slane %v842, 7
    %v981 = vrot.slane %v980, 2
    %v982 = vrot.slane %v850, 7
    %v983 = vrot.slane %v982, 2
    %v984 = vrot.slane %v849, 7
    %v985 = vrot.slane %v984, 2
    %v986 = vrot.slane %v851, 7
    %v987 = vrot.slane %v986, 2
    %v988 = vrot.slane %v860, 7
    %v989 = vrot.slane %v988, 2
    %v990 = vrot.slane %v868, 7
    %v991 = vrot.slane %v990, 2
    %v992 = vrot.slane %v867, 7
    %v993 = vrot.slane %v992, 2
    %v994 = vrot.slane %v869, 7
    %v995 = vrot.slane %v994, 2
    %v996 = vrot.slane %v878, 7
    %v997 = vrot.slane %v996, 2
    %v998 = vrot.slane %v886, 7
    %v999 = vrot.slane %v998, 2
    %v1000 = vrot.slane %v885, 7
    %v1001 = vrot.slane %v1000, 2
    %v1002 = vrot.slane %v887, 7
    %v1003 = vrot.slane %v1002, 2
    %v1004 = vrot.slane %v896, 7
    %v1005 = vrot.slane %v1004, 2
    %v1006 = vrot.slane %v904, 7
    %v1007 = vrot.slane %v1006, 2
    %v1008 = vrot.slane %v903, 7
    %v1009 = vrot.slane %v1008, 2
    %v1010 = vrot.slane %v905, 7
    %v1011 = vrot.slane %v1010, 2
    %v1012 = vrot.slane %v914, 7
    %v1013 = vrot.slane %v1012, 2
    %v1014 = vrot.slane %v922, 7
    %v1015 = vrot.slane %v1014, 2
    %v1016 = vrot.slane %v921, 7
    %v1017 = vrot.slane %v1016, 2
    %v1018 = vrot.slane %v923, 7
    %v1019 = vrot.slane %v1018, 2
    %v1052 = vmax.f32 %v788, %v957
    %v1053 = vmax.f32 %v796, %v959
    %v1054 = vmax.f32 %v795, %v961
    %v1055 = vmax.f32 %v797, %v963
    %v1056 = vmax.f32 %v806, %v965
    %v1057 = vmax.f32 %v814, %v967
    %v1058 = vmax.f32 %v813, %v969
    %v1059 = vmax.f32 %v815, %v971
    %v1060 = vmax.f32 %v824, %v973
    %v1061 = vmax.f32 %v832, %v975
    %v1062 = vmax.f32 %v831, %v977
    %v1063 = vmax.f32 %v833, %v979
    %v1064 = vmax.f32 %v842, %v981
    %v1065 = vmax.f32 %v850, %v983
    %v1066 = vmax.f32 %v849, %v985
    %v1067 = vmax.f32 %v851, %v987
    %v1068 = vmax.f32 %v860, %v989
    %v1069 = vmax.f32 %v868, %v991
    %v1070 = vmax.f32 %v867, %v993
    %v1071 = vmax.f32 %v869, %v995
    %v1072 = vmax.f32 %v878, %v997
    %v1073 = vmax.f32 %v886, %v999
    %v1074 = vmax.f32 %v885, %v1001
    %v1075 = vmax.f32 %v887, %v1003
    %v1076 = vmax.f32 %v896, %v1005
    %v1077 = vmax.f32 %v904, %v1007
    %v1078 = vmax.f32 %v903, %v1009
    %v1079 = vmax.f32 %v905, %v1011
    %v1080 = vmax.f32 %v914, %v1013
    %v1081 = vmax.f32 %v922, %v1015
    %v1082 = vmax.f32 %v921, %v1017
    %v1083 = vmax.f32 %v923, %v1019
    %v1116 = vrot.slane %v1052, 2
    %v1117 = vrot.slane %v1053, 2
    %v1118 = vrot.slane %v1054, 2
    %v1119 = vrot.slane %v1055, 2
    %v1120 = vrot.slane %v1056, 2
    %v1121 = vrot.slane %v1057, 2
    %v1122 = vrot.slane %v1058, 2
    %v1123 = vrot.slane %v1059, 2
    %v1124 = vrot.slane %v1060, 2
    %v1125 = vrot.slane %v1061, 2
    %v1126 = vrot.slane %v1062, 2
    %v1127 = vrot.slane %v1063, 2
    %v1128 = vrot.slane %v1064, 2
    %v1129 = vrot.slane %v1065, 2
    %v1130 = vrot.slane %v1066, 2
    %v1131 = vrot.slane %v1067, 2
    %v1132 = vrot.slane %v1068, 2
    %v1133 = vrot.slane %v1069, 2
    %v1134 = vrot.slane %v1070, 2
    %v1135 = vrot.slane %v1071, 2
    %v1136 = vrot.slane %v1072, 2
    %v1137 = vrot.slane %v1073, 2
    %v1138 = vrot.slane %v1074, 2
    %v1139 = vrot.slane %v1075, 2
    %v1140 = vrot.slane %v1076, 2
    %v1141 = vrot.slane %v1077, 2
    %v1142 = vrot.slane %v1078, 2
    %v1143 = vrot.slane %v1079, 2
    %v1144 = vrot.slane %v1080, 2
    %v1145 = vrot.slane %v1081, 2
    %v1146 = vrot.slane %v1082, 2
    %v1147 = vrot.slane %v1083, 2
    %v1180 = vmax.f32 %v1052, %v1116
    %v1181 = vmax.f32 %v1053, %v1117
    %v1182 = vmax.f32 %v1054, %v1118
    %v1183 = vmax.f32 %v1055, %v1119
    %v1184 = vmax.f32 %v1056, %v1120
    %v1185 = vmax.f32 %v1057, %v1121
    %v1186 = vmax.f32 %v1058, %v1122
    %v1187 = vmax.f32 %v1059, %v1123
    %v1188 = vmax.f32 %v1060, %v1124
    %v1189 = vmax.f32 %v1061, %v1125
    %v1190 = vmax.f32 %v1062, %v1126
    %v1191 = vmax.f32 %v1063, %v1127
    %v1192 = vmax.f32 %v1064, %v1128
    %v1193 = vmax.f32 %v1065, %v1129
    %v1194 = vmax.f32 %v1066, %v1130
    %v1195 = vmax.f32 %v1067, %v1131
    %v1196 = vmax.f32 %v1068, %v1132
    %v1197 = vmax.f32 %v1069, %v1133
    %v1198 = vmax.f32 %v1070, %v1134
    %v1199 = vmax.f32 %v1071, %v1135
    %v1200 = vmax.f32 %v1072, %v1136
    %v1201 = vmax.f32 %v1073, %v1137
    %v1202 = vmax.f32 %v1074, %v1138
    %v1203 = vmax.f32 %v1075, %v1139
    %v1204 = vmax.f32 %v1076, %v1140
    %v1205 = vmax.f32 %v1077, %v1141
    %v1206 = vmax.f32 %v1078, %v1142
    %v1207 = vmax.f32 %v1079, %v1143
    %v1208 = vmax.f32 %v1080, %v1144
    %v1209 = vmax.f32 %v1081, %v1145
    %v1210 = vmax.f32 %v1082, %v1146
    %v1211 = vmax.f32 %v1083, %v1147
    %v1212 = vmax.f32 %v1180, 0.0
    %v1213 = vmax.f32 %v1181, 0.0
    %v1214 = vmax.f32 %v1182, 0.0
    %v1215 = vmax.f32 %v1183, 0.0
    %v1216 = vmax.f32 %v1184, 0.0
    %v1217 = vmax.f32 %v1185, 0.0
    %v1218 = vmax.f32 %v1186, 0.0
    %v1219 = vmax.f32 %v1187, 0.0
    %v1220 = vmax.f32 %v1188, 0.0
    %v1221 = vmax.f32 %v1189, 0.0
    %v1222 = vmax.f32 %v1190, 0.0
    %v1223 = vmax.f32 %v1191, 0.0
    %v1224 = vmax.f32 %v1192, 0.0
    %v1225 = vmax.f32 %v1193, 0.0
    %v1226 = vmax.f32 %v1194, 0.0
    %v1227 = vmax.f32 %v1195, 0.0
    %v1228 = vmax.f32 %v1196, 0.0
    %v1229 = vmax.f32 %v1197, 0.0
    %v1230 = vmax.f32 %v1198, 0.0
    %v1231 = vmax.f32 %v1199, 0.0
    %v1232 = vmax.f32 %v1200, 0.0
    %v1233 = vmax.f32 %v1201, 0.0
    %v1234 = vmax.f32 %v1202, 0.0
    %v1235 = vmax.f32 %v1203, 0.0
    %v1236 = vmax.f32 %v1204, 0.0
    %v1237 = vmax.f32 %v1205, 0.0
    %v1238 = vmax.f32 %v1206, 0.0
    %v1239 = vmax.f32 %v1207, 0.0
    %v1240 = vmax.f32 %v1208, 0.0
    %v1241 = vmax.f32 %v1209, 0.0
    %v1242 = vmax.f32 %v1210, 0.0
    %v1243 = vmax.f32 %v1211, 0.0
    %v1276 = vlaneseq
    %v1277 = vshrl.u32 %v1276, 7
    %v1278 = vsub.s32 0, %v1277
    %v1279 = vrot.slane %v1212, %v1278
    %v1280 = vlaneseq
    %v1281 = vshrl.u32 %v1280, 7
    %v1282 = vsub.s32 0, %v1281
    %v1283 = vrot.slane %v1213, %v1282
    %v1284 = vlaneseq
    %v1285 = vshrl.u32 %v1284, 7
    %v1286 = vsub.s32 0, %v1285
    %v1287 = vrot.slane %v1214, %v1286
    %v1288 = vlaneseq
    %v1289 = vshrl.u32 %v1288, 7
    %v1290 = vsub.s32 0, %v1289
    %v1291 = vrot.slane %v1215, %v1290
    %v1292 = vlaneseq
    %v1293 = vshrl.u32 %v1292, 7
    %v1294 = vsub.s32 0, %v1293
    %v1295 = vrot.slane %v1216, %v1294
    %v1296 = vlaneseq
    %v1297 = vshrl.u32 %v1296, 7
    %v1298 = vsub.s32 0, %v1297
    %v1299 = vrot.slane %v1217, %v1298
    %v1300 = vlaneseq
    %v1301 = vshrl.u32 %v1300, 7
    %v1302 = vsub.s32 0, %v1301
    %v1303 = vrot.slane %v1218, %v1302
    %v1304 = vlaneseq
    %v1305 = vshrl.u32 %v1304, 7
    %v1306 = vsub.s32 0, %v1305
    %v1307 = vrot.slane %v1219, %v1306
    %v1308 = vlaneseq
    %v1309 = vshrl.u32 %v1308, 7
    %v1310 = vsub.s32 0, %v1309
    %v1311 = vrot.slane %v1220, %v1310
    %v1312 = vlaneseq
    %v1313 = vshrl.u32 %v1312, 7
    %v1314 = vsub.s32 0, %v1313
    %v1315 = vrot.slane %v1221, %v1314
    %v1316 = vlaneseq
    %v1317 = vshrl.u32 %v1316, 7
    %v1318 = vsub.s32 0, %v1317
    %v1319 = vrot.slane %v1222, %v1318
    %v1320 = vlaneseq
    %v1321 = vshrl.u32 %v1320, 7
    %v1322 = vsub.s32 0, %v1321
    %v1323 = vrot.slane %v1223, %v1322
    %v1324 = vlaneseq
    %v1325 = vshrl.u32 %v1324, 7
    %v1326 = vsub.s32 0, %v1325
    %v1327 = vrot.slane %v1224, %v1326
    %v1328 = vlaneseq
    %v1329 = vshrl.u32 %v1328, 7
    %v1330 = vsub.s32 0, %v1329
    %v1331 = vrot.slane %v1225, %v1330
    %v1332 = vlaneseq
    %v1333 = vshrl.u32 %v1332, 7
    %v1334 = vsub.s32 0, %v1333
    %v1335 = vrot.slane %v1226, %v1334
    %v1336 = vlaneseq
    %v1337 = vshrl.u32 %v1336, 7
    %v1338 = vsub.s32 0, %v1337
    %v1339 = vrot.slane %v1227, %v1338
    %v1340 = vlaneseq
    %v1341 = vshrl.u32 %v1340, 7
    %v1342 = vsub.s32 0, %v1341
    %v1343 = vrot.slane %v1228, %v1342
    %v1344 = vlaneseq
    %v1345 = vshrl.u32 %v1344, 7
    %v1346 = vsub.s32 0, %v1345
    %v1347 = vrot.slane %v1229, %v1346
    %v1348 = vlaneseq
    %v1349 = vshrl.u32 %v1348, 7
    %v1350 = vsub.s32 0, %v1349
    %v1351 = vrot.slane %v1230, %v1350
    %v1352 = vlaneseq
    %v1353 = vshrl.u32 %v1352, 7
    %v1354 = vsub.s32 0, %v1353
    %v1355 = vrot.slane %v1231, %v1354
    %v1356 = vlaneseq
    %v1357 = vshrl.u32 %v1356, 7
    %v1358 = vsub.s32 0, %v1357
    %v1359 = vrot.slane %v1232, %v1358
    %v1360 = vlaneseq
    %v1361 = vshrl.u32 %v1360, 7
    %v1362 = vsub.s32 0, %v1361
    %v1363 = vrot.slane %v1233, %v1362
    %v1364 = vlaneseq
    %v1365 = vshrl.u32 %v1364, 7
    %v1366 = vsub.s32 0, %v1365
    %v1367 = vrot.slane %v1234, %v1366
    %v1368 = vlaneseq
    %v1369 = vshrl.u32 %v1368, 7
    %v1370 = vsub.s32 0, %v1369
    %v1371 = vrot.slane %v1235, %v1370
    %v1372 = vlaneseq
    %v1373 = vshrl.u32 %v1372, 7
    %v1374 = vsub.s32 0, %v1373
    %v1375 = vrot.slane %v1236, %v1374
    %v1376 = vlaneseq
    %v1377 = vshrl.u32 %v1376, 7
    %v1378 = vsub.s32 0, %v1377
    %v1379 = vrot.slane %v1237, %v1378
    %v1380 = vlaneseq
    %v1381 = vshrl.u32 %v1380, 7
    %v1382 = vsub.s32 0, %v1381
    %v1383 = vrot.slane %v1238, %v1382
    %v1384 = vlaneseq
    %v1385 = vshrl.u32 %v1384, 7
    %v1386 = vsub.s32 0, %v1385
    %v1387 = vrot.slane %v1239, %v1386
    %v1388 = vlaneseq
    %v1389 = vshrl.u32 %v1388, 7
    %v1390 = vsub.s32 0, %v1389
    %v1391 = vrot.slane %v1240, %v1390
    %v1392 = vlaneseq
    %v1393 = vshrl.u32 %v1392, 7
    %v1394 = vsub.s32 0, %v1393
    %v1395 = vrot.slane %v1241, %v1394
    %v1396 = vlaneseq
    %v1397 = vshrl.u32 %v1396, 7
    %v1398 = vsub.s32 0, %v1397
    %v1399 = vrot.slane %v1242, %v1398
    %v1400 = vlaneseq
    %v1401 = vshrl.u32 %v1400, 7
    %v1402 = vsub.s32 0, %v1401
    %v1403 = vrot.slane %v1243, %v1402
    %vm1404 = vcmask 1041409
    %v1405 = vsel %vm1404, %v1283, %v1279
    %vm1406 = vcmask 1042434
    %v1407 = vsel %vm1406, %v1287, %v1405
    %vm1408 = vcmask 1043459
    %v1409 = vsel %vm1408, %v1291, %v1407
    %vm1410 = vcmask 1044484
    %v1411 = vsel %vm1410, %v1295, %v1409
    %vm1412 = vcmask 1045509
    %v1413 = vsel %vm1412, %v1299, %v1411
    %vm1414 = vcmask 1046534
    %v1415 = vsel %vm1414, %v1303, %v1413
    %vm1416 = vcmask 1047559
    %v1417 = vsel %vm1416, %v1307, %v1415
    %v1418 = vsel %vm1404, %v1315, %v1311
    %v1419 = vsel %vm1406, %v1319, %v1418
    %v1420 = vsel %vm1408, %v1323, %v1419
    %v1421 = vsel %vm1410, %v1327, %v1420
    %v1422 = vsel %vm1412, %v1331, %v1421
    %v1423 = vsel %vm1414, %v1335, %v1422
    %v1424 = vsel %vm1416, %v1339, %v1423
    %v1425 = vsel %vm1404, %v1347, %v1343
    %v1426 = vsel %vm1406, %v1351, %v1425
    %v1427 = vsel %vm1408, %v1355, %v1426
    %v1428 = vsel %vm1410, %v1359, %v1427
    %v1429 = vsel %vm1412, %v1363, %v1428
    %v1430 = vsel %vm1414, %v1367, %v1429
    %v1431 = vsel %vm1416, %v1371, %v1430
    %v1432 = vsel %vm1404, %v1379, %v1375
    %v1433 = vsel %vm1406, %v1383, %v1432
    %v1434 = vsel %vm1408, %v1387, %v1433
    %v1435 = vsel %vm1410, %v1391, %v1434
    %v1436 = vsel %vm1412, %v1395, %v1435
    %v1437 = vsel %vm1414, %v1399, %v1436
    %v1438 = vsel %vm1416, %v1403, %v1437
    %1443 = vst [vmem:[#allocation3 + $0x1] sm:$0xff] %v1417
    %1444 = vst [vmem:[#allocation3 + $0x9] sm:$0xff] %v1424
    %1445 = vst [vmem:[#allocation3 + $0x19] sm:$0xff] %v1431
    %1446 = vst [vmem:[#allocation3 + $0x21] sm:$0xff] %v1438
    %v1447 = vld [vmem:[#allocation3] sm:$0xff]
    %v1448 = vld [vmem:[#allocation3 + $0x8] sm:$0xff]
    %v1449 = vld [vmem:[#allocation3 + $0x18] sm:$0xff]
    %v1450 = vld [vmem:[#allocation3 + $0x20] sm:$0xff]
    %v1451 = vld [vmem:[#allocation8] sm:$0xff]
    %v1452 = vld [vmem:[#allocation8 + $0x8] sm:$0xff]
    %v1453 = vld [vmem:[#allocation8 + $0x10] sm:$0xff]
    %v1454 = vld [vmem:[#allocation8 + $0x18] sm:$0xff]
    %v1455 = vld [vmem:[#allocation8 + $0x20] sm:$0xff]
    %v1456 = vld [vmem:[#allocation8 + $0x28] sm:$0xff]
    %v1457 = vld [vmem:[#allocation8 + $0x30] sm:$0xff]
    %v1458 = vld [vmem:[#allocation8 + $0x38] sm:$0xff]
    %v1459 = vld [vmem:[#allocation8 + $0x40] sm:$0xff]
    %v1460 = vld [vmem:[#allocation8 + $0x48] sm:$0xff]
    %v1461 = vld [vmem:[#allocation8 + $0x50] sm:$0xff]
    %v1462 = vld [vmem:[#allocation8 + $0x58] sm:$0xff]
    %v1463 = vld [vmem:[#allocation8 + $0x60] sm:$0xff]
    %v1464 = vld [vmem:[#allocation8 + $0x68] sm:$0xff]
    %v1465 = vld [vmem:[#allocation8 + $0x70] sm:$0xff]
    %v1466 = vld [vmem:[#allocation8 + $0x78] sm:$0xff]
    %v1467 = vpack.c.bf16 %v1448, %v1447
    %v1468 = vpack.c.bf16 %v1450, %v1449
    %v1469 = vld [vmem:[#allocation3 + $0x1] sm:$0xff]
    %v1470 = vld [vmem:[#allocation3 + $0x9] sm:$0xff]
    %v1471 = vld [vmem:[#allocation3 + $0x19] sm:$0xff]
    %v1472 = vld [vmem:[#allocation3 + $0x21] sm:$0xff]
    %s1473 = scalar_lea.vmem [#allocation8], 128
    %v1474 = vld [vmem:[%s1473] sm:$0xff]
    %v1475 = vld [vmem:[%s1473 + $0x8] sm:$0xff]
    %v1476 = vld [vmem:[%s1473 + $0x10] sm:$0xff]
    %v1477 = vld [vmem:[%s1473 + $0x18] sm:$0xff]
    %v1478 = vld [vmem:[%s1473 + $0x20] sm:$0xff]
    %v1479 = vld [vmem:[%s1473 + $0x28] sm:$0xff]
    %v1480 = vld [vmem:[%s1473 + $0x30] sm:$0xff]
    %v1481 = vld [vmem:[%s1473 + $0x38] sm:$0xff]
    %v1482 = vld [vmem:[%s1473 + $0x40] sm:$0xff]
    %v1483 = vld [vmem:[%s1473 + $0x48] sm:$0xff]
    %v1484 = vld [vmem:[%s1473 + $0x50] sm:$0xff]
    %v1485 = vld [vmem:[%s1473 + $0x58] sm:$0xff]
    %v1486 = vld [vmem:[%s1473 + $0x60] sm:$0xff]
    %v1487 = vld [vmem:[%s1473 + $0x68] sm:$0xff]
    %v1488 = vld [vmem:[%s1473 + $0x70] sm:$0xff]
    %v1489 = vld [vmem:[%s1473 + $0x78] sm:$0xff]
    %v1490 = vpack.c.bf16 %v1470, %v1469
    %v1491 = vpack.c.bf16 %v1472, %v1471
    %v1508 = vunpack.c.l.b16 %v1474
    %v1509 = vunpack.c.h.b16 %v1474
    %v1510 = vunpack.c.l.b16 %v1475
    %v1511 = vunpack.c.h.b16 %v1475
    %v1512 = vunpack.c.l.b16 %v1476
    %v1513 = vunpack.c.h.b16 %v1476
    %v1514 = vunpack.c.l.b16 %v1477
    %v1515 = vunpack.c.h.b16 %v1477
    %v1516 = vunpack.c.l.b16 %v1478
    %v1517 = vunpack.c.h.b16 %v1478
    %v1518 = vunpack.c.l.b16 %v1479
    %v1519 = vunpack.c.h.b16 %v1479
    %v1520 = vunpack.c.l.b16 %v1480
    %v1521 = vunpack.c.h.b16 %v1480
    %v1522 = vunpack.c.l.b16 %v1481
    %v1523 = vunpack.c.h.b16 %v1481
    %v1524 = vunpack.c.l.b16 %v1482
    %v1525 = vunpack.c.h.b16 %v1482
    %v1526 = vunpack.c.l.b16 %v1483
    %v1527 = vunpack.c.h.b16 %v1483
    %v1528 = vunpack.c.l.b16 %v1484
    %v1529 = vunpack.c.h.b16 %v1484
    %v1530 = vunpack.c.l.b16 %v1485
    %v1531 = vunpack.c.h.b16 %v1485
    %v1532 = vunpack.c.l.b16 %v1486
    %v1533 = vunpack.c.h.b16 %v1486
    %v1534 = vunpack.c.l.b16 %v1487
    %v1535 = vunpack.c.h.b16 %v1487
    %v1536 = vunpack.c.l.b16 %v1488
    %v1537 = vunpack.c.h.b16 %v1488
    %v1538 = vunpack.c.l.b16 %v1489
    %v1539 = vunpack.c.h.b16 %v1489
    %v1540 = vpack.c.b16 %v1510, %v1508
    %v1541 = vpack.c.b16 %v1511, %v1509
    %v1542 = vpack.c.b16 %v1514, %v1512
    %v1543 = vpack.c.b16 %v1515, %v1513
    %v1544 = vpack.c.b16 %v1518, %v1516
    %v1545 = vpack.c.b16 %v1519, %v1517
    %v1546 = vpack.c.b16 %v1522, %v1520
    %v1547 = vpack.c.b16 %v1523, %v1521
    %v1548 = vpack.c.b16 %v1526, %v1524
    %v1549 = vpack.c.b16 %v1527, %v1525
    %v1550 = vpack.c.b16 %v1530, %v1528
    %v1551 = vpack.c.b16 %v1531, %v1529
    %v1552 = vpack.c.b16 %v1534, %v1532
    %v1553 = vpack.c.b16 %v1535, %v1533
    %v1554 = vpack.c.b16 %v1538, %v1536
    %v1555 = vpack.c.b16 %v1539, %v1537
    %1572 = vmatprep.subr.bf16.mxu0 %v1555
    %1573 = vmatpush1.bf16.msra.mxu0 %v1554
    %1574 = vmatprep.subr.bf16.mxu0 %v1553
    %1575 = vmatpush1.bf16.msra.mxu0 %v1552
    %1576 = vmatprep.subr.bf16.mxu0 %v1551
    %1577 = vmatpush1.bf16.msra.mxu0 %v1550
    %1578 = vmatprep.subr.bf16.mxu0 %v1549
    %1579 = vmatpush1.bf16.msra.mxu0 %v1548
    %1580 = vmatprep.subr.bf16.mxu0 %v1547
    %1581 = vmatpush1.bf16.msra.mxu0 %v1546
    %1582 = vmatprep.subr.bf16.mxu0 %v1545
    %1583 = vmatpush1.bf16.msra.mxu0 %v1544
    %1584 = vmatprep.subr.bf16.mxu0 %v1543
    %1585 = vmatpush1.bf16.msra.mxu0 %v1542
    %1586 = vmatprep.subr.bf16.mxu0 %v1541
    %1587 = vmatpush1.bf16.msra.mxu0 %v1540
    %1588 = vmatprep.subr.bf16.mxu0 0
    %1589 = vmatpush2.bf16.msra.mxu0 0
    %1590 = vmatprep.subr.bf16.mxu0 0
    %1591 = vmatpush2.bf16.msra.mxu0 0
    %1592 = vmatprep.subr.bf16.mxu0 0
    %1593 = vmatpush2.bf16.msra.mxu0 0
    %1594 = vmatprep.subr.bf16.mxu0 0
    %1595 = vmatpush2.bf16.msra.mxu0 0
    %1596 = vmatprep.subr.bf16.mxu0 0
    %1597 = vmatpush2.bf16.msra.mxu0 0
    %1598 = vmatprep.subr.bf16.mxu0 0
    %1599 = vmatpush2.bf16.msra.mxu0 0
    %1600 = vmatprep.subr.bf16.mxu0 0
    %1601 = vmatpush2.bf16.msra.mxu0 0
    %1602 = vmatprep.subr.bf16.mxu0 0
    %1603 = vmatpush2.bf16.msra.mxu0 0
    %1604 = vmatprep.mubr.bf16.mxu0 0
    %1605 = vmatmul.mubr.bf16.gmra.mxu0 %v1490
    %v1606 = vpop.f32.mrf.mxu0
    %v1607 = vadd.f32 0.0, %v1606
    %v1608 = vpop.f32.mrf.mxu0
    %v1609 = vadd.f32 0.0, %v1608
    %v1610 = vpop.f32.mrf.mxu0
    %v1611 = vadd.f32 0.0, %v1610
    %v1612 = vpop.f32.mrf.mxu0
    %v1613 = vadd.f32 0.0, %v1612
    %1614 = vmatprep.mubr.bf16.mxu0 0
    %1615 = vmatmul.mubr.bf16.gmra.mxu0 %v1491
    %v1616 = vpop.f32.mrf.mxu0
    %v1617 = vadd.f32 0.0, %v1616
    %v1618 = vpop.f32.mrf.mxu0
    %v1619 = vadd.f32 0.0, %v1618
    %v1620 = vpop.f32.mrf.mxu0
    %v1621 = vadd.f32 0.0, %v1620
    %v1622 = vpop.f32.mrf.mxu0
    %v1623 = vadd.f32 0.0, %v1622
    %1624 = vdwg.mxu0
    %v1641 = vunpack.c.l.b16 %v1451
    %v1642 = vunpack.c.h.b16 %v1451
    %v1643 = vunpack.c.l.b16 %v1452
    %v1644 = vunpack.c.h.b16 %v1452
    %v1645 = vunpack.c.l.b16 %v1453
    %v1646 = vunpack.c.h.b16 %v1453
    %v1647 = vunpack.c.l.b16 %v1454
    %v1648 = vunpack.c.h.b16 %v1454
    %v1649 = vunpack.c.l.b16 %v1455
    %v1650 = vunpack.c.h.b16 %v1455
    %v1651 = vunpack.c.l.b16 %v1456
    %v1652 = vunpack.c.h.b16 %v1456
    %v1653 = vunpack.c.l.b16 %v1457
    %v1654 = vunpack.c.h.b16 %v1457
    %v1655 = vunpack.c.l.b16 %v1458
    %v1656 = vunpack.c.h.b16 %v1458
    %v1657 = vunpack.c.l.b16 %v1459
    %v1658 = vunpack.c.h.b16 %v1459
    %v1659 = vunpack.c.l.b16 %v1460
    %v1660 = vunpack.c.h.b16 %v1460
    %v1661 = vunpack.c.l.b16 %v1461
    %v1662 = vunpack.c.h.b16 %v1461
    %v1663 = vunpack.c.l.b16 %v1462
    %v1664 = vunpack.c.h.b16 %v1462
    %v1665 = vunpack.c.l.b16 %v1463
    %v1666 = vunpack.c.h.b16 %v1463
    %v1667 = vunpack.c.l.b16 %v1464
    %v1668 = vunpack.c.h.b16 %v1464
    %v1669 = vunpack.c.l.b16 %v1465
    %v1670 = vunpack.c.h.b16 %v1465
    %v1671 = vunpack.c.l.b16 %v1466
    %v1672 = vunpack.c.h.b16 %v1466
    %v1673 = vpack.c.b16 %v1643, %v1641
    %v1674 = vpack.c.b16 %v1644, %v1642
    %v1675 = vpack.c.b16 %v1647, %v1645
    %v1676 = vpack.c.b16 %v1648, %v1646
    %v1677 = vpack.c.b16 %v1651, %v1649
    %v1678 = vpack.c.b16 %v1652, %v1650
    %v1679 = vpack.c.b16 %v1655, %v1653
    %v1680 = vpack.c.b16 %v1656, %v1654
    %v1681 = vpack.c.b16 %v1659, %v1657
    %v1682 = vpack.c.b16 %v1660, %v1658
    %v1683 = vpack.c.b16 %v1663, %v1661
    %v1684 = vpack.c.b16 %v1664, %v1662
    %v1685 = vpack.c.b16 %v1667, %v1665
    %v1686 = vpack.c.b16 %v1668, %v1666
    %v1687 = vpack.c.b16 %v1671, %v1669
    %v1688 = vpack.c.b16 %v1672, %v1670
    %1705 = vmatprep.subr.bf16.mxu0 %v1688
    %1706 = vmatpush1.bf16.msra.mxu0 %v1687
    %1707 = vmatprep.subr.bf16.mxu0 %v1686
    %1708 = vmatpush1.bf16.msra.mxu0 %v1685
    %1709 = vmatprep.subr.bf16.mxu0 %v1684
    %1710 = vmatpush1.bf16.msra.mxu0 %v1683
    %1711 = vmatprep.subr.bf16.mxu0 %v1682
    %1712 = vmatpush1.bf16.msra.mxu0 %v1681
    %1713 = vmatprep.subr.bf16.mxu0 %v1680
    %1714 = vmatpush1.bf16.msra.mxu0 %v1679
    %1715 = vmatprep.subr.bf16.mxu0 %v1678
    %1716 = vmatpush1.bf16.msra.mxu0 %v1677
    %1717 = vmatprep.subr.bf16.mxu0 %v1676
    %1718 = vmatpush1.bf16.msra.mxu0 %v1675
    %1719 = vmatprep.subr.bf16.mxu0 %v1674
    %1720 = vmatpush1.bf16.msra.mxu0 %v1673
    %1721 = vmatprep.subr.bf16.mxu0 0
    %1722 = vmatpush2.bf16.msra.mxu0 0
    %1723 = vmatprep.subr.bf16.mxu0 0
    %1724 = vmatpush2.bf16.msra.mxu0 0
    %1725 = vmatprep.subr.bf16.mxu0 0
    %1726 = vmatpush2.bf16.msra.mxu0 0
    %1727 = vmatprep.subr.bf16.mxu0 0
    %1728 = vmatpush2.bf16.msra.mxu0 0
    %1729 = vmatprep.subr.bf16.mxu0 0
    %1730 = vmatpush2.bf16.msra.mxu0 0
    %1731 = vmatprep.subr.bf16.mxu0 0
    %1732 = vmatpush2.bf16.msra.mxu0 0
    %1733 = vmatprep.subr.bf16.mxu0 0
    %1734 = vmatpush2.bf16.msra.mxu0 0
    %1735 = vmatprep.subr.bf16.mxu0 0
    %1736 = vmatpush2.bf16.msra.mxu0 0
    %1737 = vmatprep.mubr.bf16.mxu0 0
    %1738 = vmatmul.mubr.bf16.gmra.mxu0 %v1467
    %v1739 = vpop.f32.mrf.mxu0
    %v1740 = vadd.f32 %v1607, %v1739
    %v1741 = vpop.f32.mrf.mxu0
    %v1742 = vadd.f32 %v1609, %v1741
    %v1743 = vpop.f32.mrf.mxu0
    %v1744 = vadd.f32 %v1611, %v1743
    %v1745 = vpop.f32.mrf.mxu0
    %v1746 = vadd.f32 %v1613, %v1745
    %1747 = vmatprep.mubr.bf16.mxu0 0
    %1748 = vmatmul.mubr.bf16.gmra.mxu0 %v1468
    %v1749 = vpop.f32.mrf.mxu0
    %v1750 = vadd.f32 %v1617, %v1749
    %v1751 = vpop.f32.mrf.mxu0
    %v1752 = vadd.f32 %v1619, %v1751
    %v1753 = vpop.f32.mrf.mxu0
    %v1754 = vadd.f32 %v1621, %v1753
    %v1755 = vpop.f32.mrf.mxu0
    %v1756 = vadd.f32 %v1623, %v1755
    %1757 = vdwg.mxu0
    %v1758 = vld [vmem:[#allocation3 + $0x2] sm:$0xff]
    %v1759 = vld [vmem:[#allocation3 + $0xa] sm:$0xff]
    %v1760 = vld [vmem:[#allocation3 + $0x1a] sm:$0xff]
    %v1761 = vld [vmem:[#allocation3 + $0x22] sm:$0xff]
    %s1762 = scalar_lea.vmem [#allocation8], 256
    %v1763 = vld [vmem:[%s1762] sm:$0xff]
    %v1764 = vld [vmem:[%s1762 + $0x8] sm:$0xff]
    %v1765 = vld [vmem:[%s1762 + $0x10] sm:$0xff]
    %v1766 = vld [vmem:[%s1762 + $0x18] sm:$0xff]
    %v1767 = vld [vmem:[%s1762 + $0x20] sm:$0xff]
    %v1768 = vld [vmem:[%s1762 + $0x28] sm:$0xff]
    %v1769 = vld [vmem:[%s1762 + $0x30] sm:$0xff]
    %v1770 = vld [vmem:[%s1762 + $0x38] sm:$0xff]
    %v1771 = vld [vmem:[%s1762 + $0x40] sm:$0xff]
    %v1772 = vld [vmem:[%s1762 + $0x48] sm:$0xff]
    %v1773 = vld [vmem:[%s1762 + $0x50] sm:$0xff]
    %v1774 = vld [vmem:[%s1762 + $0x58] sm:$0xff]
    %v1775 = vld [vmem:[%s1762 + $0x60] sm:$0xff]
    %v1776 = vld [vmem:[%s1762 + $0x68] sm:$0xff]
    %v1777 = vld [vmem:[%s1762 + $0x70] sm:$0xff]
    %v1778 = vld [vmem:[%s1762 + $0x78] sm:$0xff]
    %v1779 = vpack.c.bf16 %v1759, %v1758
    %v1780 = vpack.c.bf16 %v1761, %v1760
    %v1797 = vunpack.c.l.b16 %v1763
    %v1798 = vunpack.c.h.b16 %v1763
    %v1799 = vunpack.c.l.b16 %v1764
    %v1800 = vunpack.c.h.b16 %v1764
    %v1801 = vunpack.c.l.b16 %v1765
    %v1802 = vunpack.c.h.b16 %v1765
    %v1803 = vunpack.c.l.b16 %v1766
    %v1804 = vunpack.c.h.b16 %v1766
    %v1805 = vunpack.c.l.b16 %v1767
    %v1806 = vunpack.c.h.b16 %v1767
    %v1807 = vunpack.c.l.b16 %v1768
    %v1808 = vunpack.c.h.b16 %v1768
    %v1809 = vunpack.c.l.b16 %v1769
    %v1810 = vunpack.c.h.b16 %v1769
    %v1811 = vunpack.c.l.b16 %v1770
    %v1812 = vunpack.c.h.b16 %v1770
    %v1813 = vunpack.c.l.b16 %v1771
    %v1814 = vunpack.c.h.b16 %v1771
    %v1815 = vunpack.c.l.b16 %v1772
    %v1816 = vunpack.c.h.b16 %v1772
    %v1817 = vunpack.c.l.b16 %v1773
    %v1818 = vunpack.c.h.b16 %v1773
    %v1819 = vunpack.c.l.b16 %v1774
    %v1820 = vunpack.c.h.b16 %v1774
    %v1821 = vunpack.c.l.b16 %v1775
    %v1822 = vunpack.c.h.b16 %v1775
    %v1823 = vunpack.c.l.b16 %v1776
    %v1824 = vunpack.c.h.b16 %v1776
    %v1825 = vunpack.c.l.b16 %v1777
    %v1826 = vunpack.c.h.b16 %v1777
    %v1827 = vunpack.c.l.b16 %v1778
    %v1828 = vunpack.c.h.b16 %v1778
    %v1829 = vpack.c.b16 %v1799, %v1797
    %v1830 = vpack.c.b16 %v1800, %v1798
    %v1831 = vpack.c.b16 %v1803, %v1801
    %v1832 = vpack.c.b16 %v1804, %v1802
    %v1833 = vpack.c.b16 %v1807, %v1805
    %v1834 = vpack.c.b16 %v1808, %v1806
    %v1835 = vpack.c.b16 %v1811, %v1809
    %v1836 = vpack.c.b16 %v1812, %v1810
    %v1837 = vpack.c.b16 %v1815, %v1813
    %v1838 = vpack.c.b16 %v1816, %v1814
    %v1839 = vpack.c.b16 %v1819, %v1817
    %v1840 = vpack.c.b16 %v1820, %v1818
    %v1841 = vpack.c.b16 %v1823, %v1821
    %v1842 = vpack.c.b16 %v1824, %v1822
    %v1843 = vpack.c.b16 %v1827, %v1825
    %v1844 = vpack.c.b16 %v1828, %v1826
    %1861 = vmatprep.subr.bf16.mxu0 %v1844
    %1862 = vmatpush1.bf16.msra.mxu0 %v1843
    %1863 = vmatprep.subr.bf16.mxu0 %v1842
    %1864 = vmatpush1.bf16.msra.mxu0 %v1841
    %1865 = vmatprep.subr.bf16.mxu0 %v1840
    %1866 = vmatpush1.bf16.msra.mxu0 %v1839
    %1867 = vmatprep.subr.bf16.mxu0 %v1838
    %1868 = vmatpush1.bf16.msra.mxu0 %v1837
    %1869 = vmatprep.subr.bf16.mxu0 %v1836
    %1870 = vmatpush1.bf16.msra.mxu0 %v1835
    %1871 = vmatprep.subr.bf16.mxu0 %v1834
    %1872 = vmatpush1.bf16.msra.mxu0 %v1833
    %1873 = vmatprep.subr.bf16.mxu0 %v1832
    %1874 = vmatpush1.bf16.msra.mxu0 %v1831
    %1875 = vmatprep.subr.bf16.mxu0 %v1830
    %1876 = vmatpush1.bf16.msra.mxu0 %v1829
    %1877 = vmatprep.subr.bf16.mxu0 0
    %1878 = vmatpush2.bf16.msra.mxu0 0
    %1879 = vmatprep.subr.bf16.mxu0 0
    %1880 = vmatpush2.bf16.msra.mxu0 0
    %1881 = vmatprep.subr.bf16.mxu0 0
    %1882 = vmatpush2.bf16.msra.mxu0 0
    %1883 = vmatprep.subr.bf16.mxu0 0
    %1884 = vmatpush2.bf16.msra.mxu0 0
    %1885 = vmatprep.subr.bf16.mxu0 0
    %1886 = vmatpush2.bf16.msra.mxu0 0
    %1887 = vmatprep.subr.bf16.mxu0 0
    %1888 = vmatpush2.bf16.msra.mxu0 0
    %1889 = vmatprep.subr.bf16.mxu0 0
    %1890 = vmatpush2.bf16.msra.mxu0 0
    %1891 = vmatprep.subr.bf16.mxu0 0
    %1892 = vmatpush2.bf16.msra.mxu0 0
    %1893 = vmatprep.mubr.bf16.mxu0 0
    %1894 = vmatmul.mubr.bf16.gmra.mxu0 %v1779
    %v1895 = vpop.f32.mrf.mxu0
    %v1896 = vadd.f32 0.0, %v1895
    %v1897 = vpop.f32.mrf.mxu0
    %v1898 = vadd.f32 0.0, %v1897
    %v1899 = vpop.f32.mrf.mxu0
    %v1900 = vadd.f32 0.0, %v1899
    %v1901 = vpop.f32.mrf.mxu0
    %v1902 = vadd.f32 0.0, %v1901
    %1903 = vmatprep.mubr.bf16.mxu0 0
    %1904 = vmatmul.mubr.bf16.gmra.mxu0 %v1780
    %v1905 = vpop.f32.mrf.mxu0
    %v1906 = vadd.f32 0.0, %v1905
    %v1907 = vpop.f32.mrf.mxu0
    %v1908 = vadd.f32 0.0, %v1907
    %v1909 = vpop.f32.mrf.mxu0
    %v1910 = vadd.f32 0.0, %v1909
    %v1911 = vpop.f32.mrf.mxu0
    %v1912 = vadd.f32 0.0, %v1911
    %1913 = vdwg.mxu0
    %v1914 = vadd.f32 %v1740, %v1896
    %v1915 = vadd.f32 %v1742, %v1898
    %v1916 = vadd.f32 %v1744, %v1900
    %v1917 = vadd.f32 %v1746, %v1902
    %v1918 = vadd.f32 %v1750, %v1906
    %v1919 = vadd.f32 %v1752, %v1908
    %v1920 = vadd.f32 %v1754, %v1910
    %v1921 = vadd.f32 %v1756, %v1912
    %v1922 = vld [vmem:[%s4] sm:$0x3]
    %v1924 = vlaneseq
    %v1925 = vshrl.u32 %v1924, 7
    %v1926 = vsub.s32 0, %v1925
    %v1927 = vrot.slane %v1922, %v1926
    %v1928 = vlaneseq
    %v1929 = vshrl.u32 %v1928, 7
    %v1930 = vsub.s32 1, %v1929
    %v1931 = vrot.slane %v1922, %v1930
    %v1934 = vadd.f32 %v1914, %v1927
    %v1935 = vadd.f32 %v1915, %v1931
    %v1936 = vadd.f32 %v1916, %v1927
    %v1937 = vadd.f32 %v1917, %v1931
    %v1938 = vadd.f32 %v1918, %v1927
    %v1939 = vadd.f32 %v1919, %v1931
    %v1940 = vadd.f32 %v1920, %v1927
    %v1941 = vadd.f32 %v1921, %v1931
    %v1950 = vcombine.low %v1934, %v1935
    %v1951 = vcombine.high %v1934, %v1935
    %v1953 = vunpack.c.l.s4 1983009808
    %v1954 = vunpack.c.0.s8 %v1953
    %v1955 = vlaneseq
    %v1956 = vshrl.u32 %v1955, 7
    %v1957 = vsub.s32 %v1954, %v1956
    %v1958 = vrot.slane %v1950, %v1957
    %v1960 = vunpack.c.l.s4 1983009808
    %v1961 = vunpack.c.0.s8 %v1960
    %v1962 = vlaneseq
    %v1963 = vshrl.u32 %v1962, 7
    %v1964 = vsub.s32 %v1961, %v1963
    %v1965 = vrot.slane %v1951, %v1964
    %v1966 = vcombine.high %v1958, %v1958
    %v1967 = vcombine.high %v1965, %v1965
    %v1968 = vcombine.low %v1936, %v1937
    %v1969 = vcombine.high %v1936, %v1937
    %v1971 = vunpack.c.l.s4 1983009808
    %v1972 = vunpack.c.0.s8 %v1971
    %v1973 = vlaneseq
    %v1974 = vshrl.u32 %v1973, 7
    %v1975 = vsub.s32 %v1972, %v1974
    %v1976 = vrot.slane %v1968, %v1975
    %v1978 = vunpack.c.l.s4 1983009808
    %v1979 = vunpack.c.0.s8 %v1978
    %v1980 = vlaneseq
    %v1981 = vshrl.u32 %v1980, 7
    %v1982 = vsub.s32 %v1979, %v1981
    %v1983 = vrot.slane %v1969, %v1982
    %v1984 = vcombine.high %v1976, %v1976
    %v1985 = vcombine.high %v1983, %v1983
    %v1986 = vcombine.low %v1938, %v1939
    %v1987 = vcombine.high %v1938, %v1939
    %v1989 = vunpack.c.l.s4 1983009808
    %v1990 = vunpack.c.0.s8 %v1989
    %v1991 = vlaneseq
    %v1992 = vshrl.u32 %v1991, 7
    %v1993 = vsub.s32 %v1990, %v1992
    %v1994 = vrot.slane %v1986, %v1993
    %v1996 = vunpack.c.l.s4 1983009808
    %v1997 = vunpack.c.0.s8 %v1996
    %v1998 = vlaneseq
    %v1999 = vshrl.u32 %v1998, 7
    %v2000 = vsub.s32 %v1997, %v1999
    %v2001 = vrot.slane %v1987, %v2000
    %v2002 = vcombine.high %v1994, %v1994
    %v2003 = vcombine.high %v2001, %v2001
    %v2004 = vcombine.low %v1940, %v1941
    %v2005 = vcombine.high %v1940, %v1941
    %v2007 = vunpack.c.l.s4 1983009808
    %v2008 = vunpack.c.0.s8 %v2007
    %v2009 = vlaneseq
    %v2010 = vshrl.u32 %v2009, 7
    %v2011 = vsub.s32 %v2008, %v2010
    %v2012 = vrot.slane %v2004, %v2011
    %v2014 = vunpack.c.l.s4 1983009808
    %v2015 = vunpack.c.0.s8 %v2014
    %v2016 = vlaneseq
    %v2017 = vshrl.u32 %v2016, 7
    %v2018 = vsub.s32 %v2015, %v2017
    %v2019 = vrot.slane %v2005, %v2018
    %v2020 = vcombine.high %v2012, %v2012
    %v2021 = vcombine.high %v2019, %v2019
    %v2038 = vrot.slane %v1958, 7
    %v2039 = vrot.slane %v2038, 2
    %v2040 = vrot.slane %v1966, 7
    %v2041 = vrot.slane %v2040, 2
    %v2042 = vrot.slane %v1965, 7
    %v2043 = vrot.slane %v2042, 2
    %v2044 = vrot.slane %v1967, 7
    %v2045 = vrot.slane %v2044, 2
    %v2046 = vrot.slane %v1976, 7
    %v2047 = vrot.slane %v2046, 2
    %v2048 = vrot.slane %v1984, 7
    %v2049 = vrot.slane %v2048, 2
    %v2050 = vrot.slane %v1983, 7
    %v2051 = vrot.slane %v2050, 2
    %v2052 = vrot.slane %v1985, 7
    %v2053 = vrot.slane %v2052, 2
    %v2054 = vrot.slane %v1994, 7
    %v2055 = vrot.slane %v2054, 2
    %v2056 = vrot.slane %v2002, 7
    %v2057 = vrot.slane %v2056, 2
    %v2058 = vrot.slane %v2001, 7
    %v2059 = vrot.slane %v2058, 2
    %v2060 = vrot.slane %v2003, 7
    %v2061 = vrot.slane %v2060, 2
    %v2062 = vrot.slane %v2012, 7
    %v2063 = vrot.slane %v2062, 2
    %v2064 = vrot.slane %v2020, 7
    %v2065 = vrot.slane %v2064, 2
    %v2066 = vrot.slane %v2019, 7
    %v2067 = vrot.slane %v2066, 2
    %v2068 = vrot.slane %v2021, 7
    %v2069 = vrot.slane %v2068, 2
    %v2086 = vmax.f32 %v1958, %v2039
    %v2087 = vmax.f32 %v1966, %v2041
    %v2088 = vmax.f32 %v1965, %v2043
    %v2089 = vmax.f32 %v1967, %v2045
    %v2090 = vmax.f32 %v1976, %v2047
    %v2091 = vmax.f32 %v1984, %v2049
    %v2092 = vmax.f32 %v1983, %v2051
    %v2093 = vmax.f32 %v1985, %v2053
    %v2094 = vmax.f32 %v1994, %v2055
    %v2095 = vmax.f32 %v2002, %v2057
    %v2096 = vmax.f32 %v2001, %v2059
    %v2097 = vmax.f32 %v2003, %v2061
    %v2098 = vmax.f32 %v2012, %v2063
    %v2099 = vmax.f32 %v2020, %v2065
    %v2100 = vmax.f32 %v2019, %v2067
    %v2101 = vmax.f32 %v2021, %v2069
    %v2118 = vrot.slane %v2086, 2
    %v2119 = vrot.slane %v2087, 2
    %v2120 = vrot.slane %v2088, 2
    %v2121 = vrot.slane %v2089, 2
    %v2122 = vrot.slane %v2090, 2
    %v2123 = vrot.slane %v2091, 2
    %v2124 = vrot.slane %v2092, 2
    %v2125 = vrot.slane %v2093, 2
    %v2126 = vrot.slane %v2094, 2
    %v2127 = vrot.slane %v2095, 2
    %v2128 = vrot.slane %v2096, 2
    %v2129 = vrot.slane %v2097, 2
    %v2130 = vrot.slane %v2098, 2
    %v2131 = vrot.slane %v2099, 2
    %v2132 = vrot.slane %v2100, 2
    %v2133 = vrot.slane %v2101, 2
    %v2150 = vmax.f32 %v2086, %v2118
    %v2151 = vmax.f32 %v2087, %v2119
    %v2152 = vmax.f32 %v2088, %v2120
    %v2153 = vmax.f32 %v2089, %v2121
    %v2154 = vmax.f32 %v2090, %v2122
    %v2155 = vmax.f32 %v2091, %v2123
    %v2156 = vmax.f32 %v2092, %v2124
    %v2157 = vmax.f32 %v2093, %v2125
    %v2158 = vmax.f32 %v2094, %v2126
    %v2159 = vmax.f32 %v2095, %v2127
    %v2160 = vmax.f32 %v2096, %v2128
    %v2161 = vmax.f32 %v2097, %v2129
    %v2162 = vmax.f32 %v2098, %v2130
    %v2163 = vmax.f32 %v2099, %v2131
    %v2164 = vmax.f32 %v2100, %v2132
    %v2165 = vmax.f32 %v2101, %v2133
    %v2166 = vmax.f32 %v2150, 0.0
    %v2167 = vmax.f32 %v2151, 0.0
    %v2168 = vmax.f32 %v2152, 0.0
    %v2169 = vmax.f32 %v2153, 0.0
    %v2170 = vmax.f32 %v2154, 0.0
    %v2171 = vmax.f32 %v2155, 0.0
    %v2172 = vmax.f32 %v2156, 0.0
    %v2173 = vmax.f32 %v2157, 0.0
    %v2174 = vmax.f32 %v2158, 0.0
    %v2175 = vmax.f32 %v2159, 0.0
    %v2176 = vmax.f32 %v2160, 0.0
    %v2177 = vmax.f32 %v2161, 0.0
    %v2178 = vmax.f32 %v2162, 0.0
    %v2179 = vmax.f32 %v2163, 0.0
    %v2180 = vmax.f32 %v2164, 0.0
    %v2181 = vmax.f32 %v2165, 0.0
    %v2198 = vlaneseq
    %v2199 = vshrl.u32 %v2198, 7
    %v2200 = vsub.s32 0, %v2199
    %v2201 = vrot.slane %v2166, %v2200
    %v2202 = vlaneseq
    %v2203 = vshrl.u32 %v2202, 7
    %v2204 = vsub.s32 0, %v2203
    %v2205 = vrot.slane %v2167, %v2204
    %v2206 = vlaneseq
    %v2207 = vshrl.u32 %v2206, 7
    %v2208 = vsub.s32 0, %v2207
    %v2209 = vrot.slane %v2168, %v2208
    %v2210 = vlaneseq
    %v2211 = vshrl.u32 %v2210, 7
    %v2212 = vsub.s32 0, %v2211
    %v2213 = vrot.slane %v2169, %v2212
    %v2214 = vlaneseq
    %v2215 = vshrl.u32 %v2214, 7
    %v2216 = vsub.s32 0, %v2215
    %v2217 = vrot.slane %v2170, %v2216
    %v2218 = vlaneseq
    %v2219 = vshrl.u32 %v2218, 7
    %v2220 = vsub.s32 0, %v2219
    %v2221 = vrot.slane %v2171, %v2220
    %v2222 = vlaneseq
    %v2223 = vshrl.u32 %v2222, 7
    %v2224 = vsub.s32 0, %v2223
    %v2225 = vrot.slane %v2172, %v2224
    %v2226 = vlaneseq
    %v2227 = vshrl.u32 %v2226, 7
    %v2228 = vsub.s32 0, %v2227
    %v2229 = vrot.slane %v2173, %v2228
    %v2230 = vlaneseq
    %v2231 = vshrl.u32 %v2230, 7
    %v2232 = vsub.s32 0, %v2231
    %v2233 = vrot.slane %v2174, %v2232
    %v2234 = vlaneseq
    %v2235 = vshrl.u32 %v2234, 7
    %v2236 = vsub.s32 0, %v2235
    %v2237 = vrot.slane %v2175, %v2236
    %v2238 = vlaneseq
    %v2239 = vshrl.u32 %v2238, 7
    %v2240 = vsub.s32 0, %v2239
    %v2241 = vrot.slane %v2176, %v2240
    %v2242 = vlaneseq
    %v2243 = vshrl.u32 %v2242, 7
    %v2244 = vsub.s32 0, %v2243
    %v2245 = vrot.slane %v2177, %v2244
    %v2246 = vlaneseq
    %v2247 = vshrl.u32 %v2246, 7
    %v2248 = vsub.s32 0, %v2247
    %v2249 = vrot.slane %v2178, %v2248
    %v2250 = vlaneseq
    %v2251 = vshrl.u32 %v2250, 7
    %v2252 = vsub.s32 0, %v2251
    %v2253 = vrot.slane %v2179, %v2252
    %v2254 = vlaneseq
    %v2255 = vshrl.u32 %v2254, 7
    %v2256 = vsub.s32 0, %v2255
    %v2257 = vrot.slane %v2180, %v2256
    %v2258 = vlaneseq
    %v2259 = vshrl.u32 %v2258, 7
    %v2260 = vsub.s32 0, %v2259
    %v2261 = vrot.slane %v2181, %v2260
    %v2262 = vsel %vm1404, %v2205, %v2201
    %v2263 = vsel %vm1406, %v2209, %v2262
    %v2264 = vsel %vm1408, %v2213, %v2263
    %v2265 = vsel %vm1410, %v2217, %v2264
    %v2266 = vsel %vm1412, %v2221, %v2265
    %v2267 = vsel %vm1414, %v2225, %v2266
    %v2268 = vsel %vm1416, %v2229, %v2267
    %v2269 = vsel %vm1404, %v2237, %v2233
    %v2270 = vsel %vm1406, %v2241, %v2269
    %v2271 = vsel %vm1408, %v2245, %v2270
    %v2272 = vsel %vm1410, %v2249, %v2271
    %v2273 = vsel %vm1412, %v2253, %v2272
    %v2274 = vsel %vm1414, %v2257, %v2273
    %v2275 = vsel %vm1416, %v2261, %v2274
    %2278 = vst [vmem:[#allocation4 + $0x1] sm:$0xff] %v2268
    %2279 = vst [vmem:[#allocation4 + $0x11] sm:$0xff] %v2275
    %v2280 = vld [vmem:[#allocation4] sm:$0xff]
    %v2281 = vld [vmem:[#allocation4 + $0x10] sm:$0xff]
    %v2282 = vld [vmem:[#allocation10] sm:$0xff]
    %v2283 = vld [vmem:[#allocation10 + $0x8] sm:$0xff]
    %v2284 = vld [vmem:[#allocation10 + $0x10] sm:$0xff]
    %v2285 = vld [vmem:[#allocation10 + $0x18] sm:$0xff]
    %v2286 = vld [vmem:[#allocation10 + $0x20] sm:$0xff]
    %v2287 = vld [vmem:[#allocation10 + $0x28] sm:$0xff]
    %v2288 = vld [vmem:[#allocation10 + $0x30] sm:$0xff]
    %v2289 = vld [vmem:[#allocation10 + $0x38] sm:$0xff]
    %v2290 = vld [vmem:[#allocation10 + $0x40] sm:$0xff]
    %v2291 = vld [vmem:[#allocation10 + $0x48] sm:$0xff]
    %v2292 = vld [vmem:[#allocation10 + $0x50] sm:$0xff]
    %v2293 = vld [vmem:[#allocation10 + $0x58] sm:$0xff]
    %v2294 = vld [vmem:[#allocation10 + $0x60] sm:$0xff]
    %v2295 = vld [vmem:[#allocation10 + $0x68] sm:$0xff]
    %v2296 = vld [vmem:[#allocation10 + $0x70] sm:$0xff]
    %v2297 = vld [vmem:[#allocation10 + $0x78] sm:$0xff]
    %v2298 = vpack.c.bf16 %v2281, %v2280
    %v2299 = vld [vmem:[#allocation4 + $0x1] sm:$0xff]
    %v2300 = vld [vmem:[#allocation4 + $0x11] sm:$0xff]
    %s2301 = scalar_lea.vmem [#allocation10], 128
    %v2302 = vld [vmem:[%s2301] sm:$0xff]
    %v2303 = vld [vmem:[%s2301 + $0x8] sm:$0xff]
    %v2304 = vld [vmem:[%s2301 + $0x10] sm:$0xff]
    %v2305 = vld [vmem:[%s2301 + $0x18] sm:$0xff]
    %v2306 = vld [vmem:[%s2301 + $0x20] sm:$0xff]
    %v2307 = vld [vmem:[%s2301 + $0x28] sm:$0xff]
    %v2308 = vld [vmem:[%s2301 + $0x30] sm:$0xff]
    %v2309 = vld [vmem:[%s2301 + $0x38] sm:$0xff]
    %v2310 = vld [vmem:[%s2301 + $0x40] sm:$0xff]
    %v2311 = vld [vmem:[%s2301 + $0x48] sm:$0xff]
    %v2312 = vld [vmem:[%s2301 + $0x50] sm:$0xff]
    %v2313 = vld [vmem:[%s2301 + $0x58] sm:$0xff]
    %v2314 = vld [vmem:[%s2301 + $0x60] sm:$0xff]
    %v2315 = vld [vmem:[%s2301 + $0x68] sm:$0xff]
    %v2316 = vld [vmem:[%s2301 + $0x70] sm:$0xff]
    %v2317 = vld [vmem:[%s2301 + $0x78] sm:$0xff]
    %v2318 = vpack.c.bf16 %v2300, %v2299
    %v2335 = vunpack.c.l.b16 %v2302
    %v2336 = vunpack.c.h.b16 %v2302
    %v2337 = vunpack.c.l.b16 %v2303
    %v2338 = vunpack.c.h.b16 %v2303
    %v2339 = vunpack.c.l.b16 %v2304
    %v2340 = vunpack.c.h.b16 %v2304
    %v2341 = vunpack.c.l.b16 %v2305
    %v2342 = vunpack.c.h.b16 %v2305
    %v2343 = vunpack.c.l.b16 %v2306
    %v2344 = vunpack.c.h.b16 %v2306
    %v2345 = vunpack.c.l.b16 %v2307
    %v2346 = vunpack.c.h.b16 %v2307
    %v2347 = vunpack.c.l.b16 %v2308
    %v2348 = vunpack.c.h.b16 %v2308
    %v2349 = vunpack.c.l.b16 %v2309
    %v2350 = vunpack.c.h.b16 %v2309
    %v2351 = vunpack.c.l.b16 %v2310
    %v2352 = vunpack.c.h.b16 %v2310
    %v2353 = vunpack.c.l.b16 %v2311
    %v2354 = vunpack.c.h.b16 %v2311
    %v2355 = vunpack.c.l.b16 %v2312
    %v2356 = vunpack.c.h.b16 %v2312
    %v2357 = vunpack.c.l.b16 %v2313
    %v2358 = vunpack.c.h.b16 %v2313
    %v2359 = vunpack.c.l.b16 %v2314
    %v2360 = vunpack.c.h.b16 %v2314
    %v2361 = vunpack.c.l.b16 %v2315
    %v2362 = vunpack.c.h.b16 %v2315
    %v2363 = vunpack.c.l.b16 %v2316
    %v2364 = vunpack.c.h.b16 %v2316
    %v2365 = vunpack.c.l.b16 %v2317
    %v2366 = vunpack.c.h.b16 %v2317
    %v2367 = vpack.c.b16 %v2337, %v2335
    %v2368 = vpack.c.b16 %v2338, %v2336
    %v2369 = vpack.c.b16 %v2341, %v2339
    %v2370 = vpack.c.b16 %v2342, %v2340
    %v2371 = vpack.c.b16 %v2345, %v2343
    %v2372 = vpack.c.b16 %v2346, %v2344
    %v2373 = vpack.c.b16 %v2349, %v2347
    %v2374 = vpack.c.b16 %v2350, %v2348
    %v2375 = vpack.c.b16 %v2353, %v2351
    %v2376 = vpack.c.b16 %v2354, %v2352
    %v2377 = vpack.c.b16 %v2357, %v2355
    %v2378 = vpack.c.b16 %v2358, %v2356
    %v2379 = vpack.c.b16 %v2361, %v2359
    %v2380 = vpack.c.b16 %v2362, %v2360
    %v2381 = vpack.c.b16 %v2365, %v2363
    %v2382 = vpack.c.b16 %v2366, %v2364
    %2399 = vmatprep.subr.bf16.mxu0 %v2382
    %2400 = vmatpush1.bf16.msra.mxu0 %v2381
    %2401 = vmatprep.subr.bf16.mxu0 %v2380
    %2402 = vmatpush1.bf16.msra.mxu0 %v2379
    %2403 = vmatprep.subr.bf16.mxu0 %v2378
    %2404 = vmatpush1.bf16.msra.mxu0 %v2377
    %2405 = vmatprep.subr.bf16.mxu0 %v2376
    %2406 = vmatpush1.bf16.msra.mxu0 %v2375
    %2407 = vmatprep.subr.bf16.mxu0 %v2374
    %2408 = vmatpush1.bf16.msra.mxu0 %v2373
    %2409 = vmatprep.subr.bf16.mxu0 %v2372
    %2410 = vmatpush1.bf16.msra.mxu0 %v2371
    %2411 = vmatprep.subr.bf16.mxu0 %v2370
    %2412 = vmatpush1.bf16.msra.mxu0 %v2369
    %2413 = vmatprep.subr.bf16.mxu0 %v2368
    %2414 = vmatpush1.bf16.msra.mxu0 %v2367
    %2415 = vmatprep.subr.bf16.mxu0 0
    %2416 = vmatpush2.bf16.msra.mxu0 0
    %2417 = vmatprep.subr.bf16.mxu0 0
    %2418 = vmatpush2.bf16.msra.mxu0 0
    %2419 = vmatprep.subr.bf16.mxu0 0
    %2420 = vmatpush2.bf16.msra.mxu0 0
    %2421 = vmatprep.subr.bf16.mxu0 0
    %2422 = vmatpush2.bf16.msra.mxu0 0
    %2423 = vmatprep.subr.bf16.mxu0 0
    %2424 = vmatpush2.bf16.msra.mxu0 0
    %2425 = vmatprep.subr.bf16.mxu0 0
    %2426 = vmatpush2.bf16.msra.mxu0 0
    %2427 = vmatprep.subr.bf16.mxu0 0
    %2428 = vmatpush2.bf16.msra.mxu0 0
    %2429 = vmatprep.subr.bf16.mxu0 0
    %2430 = vmatpush2.bf16.msra.mxu0 0
    %2431 = vmatprep.mubr.bf16.mxu0 0
    %2432 = vmatmul.mubr.bf16.gmra.mxu0 %v2318
    %v2433 = vpop.f32.mrf.mxu0
    %v2434 = vadd.f32 0.0, %v2433
    %v2435 = vpop.f32.mrf.mxu0
    %v2436 = vadd.f32 0.0, %v2435
    %v2437 = vpop.f32.mrf.mxu0
    %v2438 = vadd.f32 0.0, %v2437
    %v2439 = vpop.f32.mrf.mxu0
    %v2440 = vadd.f32 0.0, %v2439
    %2441 = vdwg.mxu0
    %v2458 = vunpack.c.l.b16 %v2282
    %v2459 = vunpack.c.h.b16 %v2282
    %v2460 = vunpack.c.l.b16 %v2283
    %v2461 = vunpack.c.h.b16 %v2283
    %v2462 = vunpack.c.l.b16 %v2284
    %v2463 = vunpack.c.h.b16 %v2284
    %v2464 = vunpack.c.l.b16 %v2285
    %v2465 = vunpack.c.h.b16 %v2285
    %v2466 = vunpack.c.l.b16 %v2286
    %v2467 = vunpack.c.h.b16 %v2286
    %v2468 = vunpack.c.l.b16 %v2287
    %v2469 = vunpack.c.h.b16 %v2287
    %v2470 = vunpack.c.l.b16 %v2288
    %v2471 = vunpack.c.h.b16 %v2288
    %v2472 = vunpack.c.l.b16 %v2289
    %v2473 = vunpack.c.h.b16 %v2289
    %v2474 = vunpack.c.l.b16 %v2290
    %v2475 = vunpack.c.h.b16 %v2290
    %v2476 = vunpack.c.l.b16 %v2291
    %v2477 = vunpack.c.h.b16 %v2291
    %v2478 = vunpack.c.l.b16 %v2292
    %v2479 = vunpack.c.h.b16 %v2292
    %v2480 = vunpack.c.l.b16 %v2293
    %v2481 = vunpack.c.h.b16 %v2293
    %v2482 = vunpack.c.l.b16 %v2294
    %v2483 = vunpack.c.h.b16 %v2294
    %v2484 = vunpack.c.l.b16 %v2295
    %v2485 = vunpack.c.h.b16 %v2295
    %v2486 = vunpack.c.l.b16 %v2296
    %v2487 = vunpack.c.h.b16 %v2296
    %v2488 = vunpack.c.l.b16 %v2297
    %v2489 = vunpack.c.h.b16 %v2297
    %v2490 = vpack.c.b16 %v2460, %v2458
    %v2491 = vpack.c.b16 %v2461, %v2459
    %v2492 = vpack.c.b16 %v2464, %v2462
    %v2493 = vpack.c.b16 %v2465, %v2463
    %v2494 = vpack.c.b16 %v2468, %v2466
    %v2495 = vpack.c.b16 %v2469, %v2467
    %v2496 = vpack.c.b16 %v2472, %v2470
    %v2497 = vpack.c.b16 %v2473, %v2471
    %v2498 = vpack.c.b16 %v2476, %v2474
    %v2499 = vpack.c.b16 %v2477, %v2475
    %v2500 = vpack.c.b16 %v2480, %v2478
    %v2501 = vpack.c.b16 %v2481, %v2479
    %v2502 = vpack.c.b16 %v2484, %v2482
    %v2503 = vpack.c.b16 %v2485, %v2483
    %v2504 = vpack.c.b16 %v2488, %v2486
    %v2505 = vpack.c.b16 %v2489, %v2487
    %2522 = vmatprep.subr.bf16.mxu0 %v2505
    %2523 = vmatpush1.bf16.msra.mxu0 %v2504
    %2524 = vmatprep.subr.bf16.mxu0 %v2503
    %2525 = vmatpush1.bf16.msra.mxu0 %v2502
    %2526 = vmatprep.subr.bf16.mxu0 %v2501
    %2527 = vmatpush1.bf16.msra.mxu0 %v2500
    %2528 = vmatprep.subr.bf16.mxu0 %v2499
    %2529 = vmatpush1.bf16.msra.mxu0 %v2498
    %2530 = vmatprep.subr.bf16.mxu0 %v2497
    %2531 = vmatpush1.bf16.msra.mxu0 %v2496
    %2532 = vmatprep.subr.bf16.mxu0 %v2495
    %2533 = vmatpush1.bf16.msra.mxu0 %v2494
    %2534 = vmatprep.subr.bf16.mxu0 %v2493
    %2535 = vmatpush1.bf16.msra.mxu0 %v2492
    %2536 = vmatprep.subr.bf16.mxu0 %v2491
    %2537 = vmatpush1.bf16.msra.mxu0 %v2490
    %2538 = vmatprep.subr.bf16.mxu0 0
    %2539 = vmatpush2.bf16.msra.mxu0 0
    %2540 = vmatprep.subr.bf16.mxu0 0
    %2541 = vmatpush2.bf16.msra.mxu0 0
    %2542 = vmatprep.subr.bf16.mxu0 0
    %2543 = vmatpush2.bf16.msra.mxu0 0
    %2544 = vmatprep.subr.bf16.mxu0 0
    %2545 = vmatpush2.bf16.msra.mxu0 0
    %2546 = vmatprep.subr.bf16.mxu0 0
    %2547 = vmatpush2.bf16.msra.mxu0 0
    %2548 = vmatprep.subr.bf16.mxu0 0
    %2549 = vmatpush2.bf16.msra.mxu0 0
    %2550 = vmatprep.subr.bf16.mxu0 0
    %2551 = vmatpush2.bf16.msra.mxu0 0
    %2552 = vmatprep.subr.bf16.mxu0 0
    %2553 = vmatpush2.bf16.msra.mxu0 0
    %2554 = vmatprep.mubr.bf16.mxu0 0
    %2555 = vmatmul.mubr.bf16.gmra.mxu0 %v2298
    %v2556 = vpop.f32.mrf.mxu0
    %v2557 = vadd.f32 %v2434, %v2556
    %v2558 = vpop.f32.mrf.mxu0
    %v2559 = vadd.f32 %v2436, %v2558
    %v2560 = vpop.f32.mrf.mxu0
    %v2561 = vadd.f32 %v2438, %v2560
    %v2562 = vpop.f32.mrf.mxu0
    %v2563 = vadd.f32 %v2440, %v2562
    %2564 = vdwg.mxu0
    %v2565 = vld [vmem:[#allocation4 + $0x2] sm:$0xff]
    %v2566 = vld [vmem:[#allocation4 + $0x12] sm:$0xff]
    %s2567 = scalar_lea.vmem [#allocation10], 256
    %v2568 = vld [vmem:[%s2567] sm:$0xff]
    %v2569 = vld [vmem:[%s2567 + $0x8] sm:$0xff]
    %v2570 = vld [vmem:[%s2567 + $0x10] sm:$0xff]
    %v2571 = vld [vmem:[%s2567 + $0x18] sm:$0xff]
    %v2572 = vld [vmem:[%s2567 + $0x20] sm:$0xff]
    %v2573 = vld [vmem:[%s2567 + $0x28] sm:$0xff]
    %v2574 = vld [vmem:[%s2567 + $0x30] sm:$0xff]
    %v2575 = vld [vmem:[%s2567 + $0x38] sm:$0xff]
    %v2576 = vld [vmem:[%s2567 + $0x40] sm:$0xff]
    %v2577 = vld [vmem:[%s2567 + $0x48] sm:$0xff]
    %v2578 = vld [vmem:[%s2567 + $0x50] sm:$0xff]
    %v2579 = vld [vmem:[%s2567 + $0x58] sm:$0xff]
    %v2580 = vld [vmem:[%s2567 + $0x60] sm:$0xff]
    %v2581 = vld [vmem:[%s2567 + $0x68] sm:$0xff]
    %v2582 = vld [vmem:[%s2567 + $0x70] sm:$0xff]
    %v2583 = vld [vmem:[%s2567 + $0x78] sm:$0xff]
    %v2584 = vpack.c.bf16 %v2566, %v2565
    %v2601 = vunpack.c.l.b16 %v2568
    %v2602 = vunpack.c.h.b16 %v2568
    %v2603 = vunpack.c.l.b16 %v2569
    %v2604 = vunpack.c.h.b16 %v2569
    %v2605 = vunpack.c.l.b16 %v2570
    %v2606 = vunpack.c.h.b16 %v2570
    %v2607 = vunpack.c.l.b16 %v2571
    %v2608 = vunpack.c.h.b16 %v2571
    %v2609 = vunpack.c.l.b16 %v2572
    %v2610 = vunpack.c.h.b16 %v2572
    %v2611 = vunpack.c.l.b16 %v2573
    %v2612 = vunpack.c.h.b16 %v2573
    %v2613 = vunpack.c.l.b16 %v2574
    %v2614 = vunpack.c.h.b16 %v2574
    %v2615 = vunpack.c.l.b16 %v2575
    %v2616 = vunpack.c.h.b16 %v2575
    %v2617 = vunpack.c.l.b16 %v2576
    %v2618 = vunpack.c.h.b16 %v2576
    %v2619 = vunpack.c.l.b16 %v2577
    %v2620 = vunpack.c.h.b16 %v2577
    %v2621 = vunpack.c.l.b16 %v2578
    %v2622 = vunpack.c.h.b16 %v2578
    %v2623 = vunpack.c.l.b16 %v2579
    %v2624 = vunpack.c.h.b16 %v2579
    %v2625 = vunpack.c.l.b16 %v2580
    %v2626 = vunpack.c.h.b16 %v2580
    %v2627 = vunpack.c.l.b16 %v2581
    %v2628 = vunpack.c.h.b16 %v2581
    %v2629 = vunpack.c.l.b16 %v2582
    %v2630 = vunpack.c.h.b16 %v2582
    %v2631 = vunpack.c.l.b16 %v2583
    %v2632 = vunpack.c.h.b16 %v2583
    %v2633 = vpack.c.b16 %v2603, %v2601
    %v2634 = vpack.c.b16 %v2604, %v2602
    %v2635 = vpack.c.b16 %v2607, %v2605
    %v2636 = vpack.c.b16 %v2608, %v2606
    %v2637 = vpack.c.b16 %v2611, %v2609
    %v2638 = vpack.c.b16 %v2612, %v2610
    %v2639 = vpack.c.b16 %v2615, %v2613
    %v2640 = vpack.c.b16 %v2616, %v2614
    %v2641 = vpack.c.b16 %v2619, %v2617
    %v2642 = vpack.c.b16 %v2620, %v2618
    %v2643 = vpack.c.b16 %v2623, %v2621
    %v2644 = vpack.c.b16 %v2624, %v2622
    %v2645 = vpack.c.b16 %v2627, %v2625
    %v2646 = vpack.c.b16 %v2628, %v2626
    %v2647 = vpack.c.b16 %v2631, %v2629
    %v2648 = vpack.c.b16 %v2632, %v2630
    %2665 = vmatprep.subr.bf16.mxu0 %v2648
    %2666 = vmatpush1.bf16.msra.mxu0 %v2647
    %2667 = vmatprep.subr.bf16.mxu0 %v2646
    %2668 = vmatpush1.bf16.msra.mxu0 %v2645
    %2669 = vmatprep.subr.bf16.mxu0 %v2644
    %2670 = vmatpush1.bf16.msra.mxu0 %v2643
    %2671 = vmatprep.subr.bf16.mxu0 %v2642
    %2672 = vmatpush1.bf16.msra.mxu0 %v2641
    %2673 = vmatprep.subr.bf16.mxu0 %v2640
    %2674 = vmatpush1.bf16.msra.mxu0 %v2639
    %2675 = vmatprep.subr.bf16.mxu0 %v2638
    %2676 = vmatpush1.bf16.msra.mxu0 %v2637
    %2677 = vmatprep.subr.bf16.mxu0 %v2636
    %2678 = vmatpush1.bf16.msra.mxu0 %v2635
    %2679 = vmatprep.subr.bf16.mxu0 %v2634
    %2680 = vmatpush1.bf16.msra.mxu0 %v2633
    %2681 = vmatprep.subr.bf16.mxu0 0
    %2682 = vmatpush2.bf16.msra.mxu0 0
    %2683 = vmatprep.subr.bf16.mxu0 0
    %2684 = vmatpush2.bf16.msra.mxu0 0
    %2685 = vmatprep.subr.bf16.mxu0 0
    %2686 = vmatpush2.bf16.msra.mxu0 0
    %2687 = vmatprep.subr.bf16.mxu0 0
    %2688 = vmatpush2.bf16.msra.mxu0 0
    %2689 = vmatprep.subr.bf16.mxu0 0
    %2690 = vmatpush2.bf16.msra.mxu0 0
    %2691 = vmatprep.subr.bf16.mxu0 0
    %2692 = vmatpush2.bf16.msra.mxu0 0
    %2693 = vmatprep.subr.bf16.mxu0 0
    %2694 = vmatpush2.bf16.msra.mxu0 0
    %2695 = vmatprep.subr.bf16.mxu0 0
    %2696 = vmatpush2.bf16.msra.mxu0 0
    %2697 = vmatprep.mubr.bf16.mxu0 0
    %2698 = vmatmul.mubr.bf16.gmra.mxu0 %v2584
    %v2699 = vpop.f32.mrf.mxu0
    %v2700 = vadd.f32 0.0, %v2699
    %v2701 = vpop.f32.mrf.mxu0
    %v2702 = vadd.f32 0.0, %v2701
    %v2703 = vpop.f32.mrf.mxu0
    %v2704 = vadd.f32 0.0, %v2703
    %v2705 = vpop.f32.mrf.mxu0
    %v2706 = vadd.f32 0.0, %v2705
    %2707 = vdwg.mxu0
    %v2708 = vadd.f32 %v2557, %v2700
    %v2709 = vadd.f32 %v2559, %v2702
    %v2710 = vadd.f32 %v2561, %v2704
    %v2711 = vadd.f32 %v2563, %v2706
    %v2712 = vld [vmem:[%s6] sm:$0x3]
    %v2714 = vlaneseq
    %v2715 = vshrl.u32 %v2714, 7
    %v2716 = vsub.s32 0, %v2715
    %v2717 = vrot.slane %v2712, %v2716
    %v2718 = vlaneseq
    %v2719 = vshrl.u32 %v2718, 7
    %v2720 = vsub.s32 1, %v2719
    %v2721 = vrot.slane %v2712, %v2720
    %v2724 = vadd.f32 %v2708, %v2717
    %v2725 = vadd.f32 %v2709, %v2721
    %v2726 = vadd.f32 %v2710, %v2717
    %v2727 = vadd.f32 %v2711, %v2721
    %v2732 = vcombine.low %v2724, %v2725
    %v2733 = vcombine.high %v2724, %v2725
    %v2735 = vunpack.c.l.s4 1983009808
    %v2736 = vunpack.c.0.s8 %v2735
    %v2737 = vlaneseq
    %v2738 = vshrl.u32 %v2737, 7
    %v2739 = vsub.s32 %v2736, %v2738
    %v2740 = vrot.slane %v2732, %v2739
    %v2742 = vunpack.c.l.s4 1983009808
    %v2743 = vunpack.c.0.s8 %v2742
    %v2744 = vlaneseq
    %v2745 = vshrl.u32 %v2744, 7
    %v2746 = vsub.s32 %v2743, %v2745
    %v2747 = vrot.slane %v2733, %v2746
    %v2748 = vcombine.high %v2740, %v2740
    %v2749 = vcombine.high %v2747, %v2747
    %v2750 = vcombine.low %v2726, %v2727
    %v2751 = vcombine.high %v2726, %v2727
    %v2753 = vunpack.c.l.s4 1983009808
    %v2754 = vunpack.c.0.s8 %v2753
    %v2755 = vlaneseq
    %v2756 = vshrl.u32 %v2755, 7
    %v2757 = vsub.s32 %v2754, %v2756
    %v2758 = vrot.slane %v2750, %v2757
    %v2760 = vunpack.c.l.s4 1983009808
    %v2761 = vunpack.c.0.s8 %v2760
    %v2762 = vlaneseq
    %v2763 = vshrl.u32 %v2762, 7
    %v2764 = vsub.s32 %v2761, %v2763
    %v2765 = vrot.slane %v2751, %v2764
    %v2766 = vcombine.high %v2758, %v2758
    %v2767 = vcombine.high %v2765, %v2765
    %v2776 = vrot.slane %v2740, 7
    %v2777 = vrot.slane %v2776, 2
    %v2778 = vrot.slane %v2748, 7
    %v2779 = vrot.slane %v2778, 2
    %v2780 = vrot.slane %v2747, 7
    %v2781 = vrot.slane %v2780, 2
    %v2782 = vrot.slane %v2749, 7
    %v2783 = vrot.slane %v2782, 2
    %v2784 = vrot.slane %v2758, 7
    %v2785 = vrot.slane %v2784, 2
    %v2786 = vrot.slane %v2766, 7
    %v2787 = vrot.slane %v2786, 2
    %v2788 = vrot.slane %v2765, 7
    %v2789 = vrot.slane %v2788, 2
    %v2790 = vrot.slane %v2767, 7
    %v2791 = vrot.slane %v2790, 2
    %v2800 = vmax.f32 %v2740, %v2777
    %v2801 = vmax.f32 %v2748, %v2779
    %v2802 = vmax.f32 %v2747, %v2781
    %v2803 = vmax.f32 %v2749, %v2783
    %v2804 = vmax.f32 %v2758, %v2785
    %v2805 = vmax.f32 %v2766, %v2787
    %v2806 = vmax.f32 %v2765, %v2789
    %v2807 = vmax.f32 %v2767, %v2791
    %v2816 = vrot.slane %v2800, 2
    %v2817 = vrot.slane %v2801, 2
    %v2818 = vrot.slane %v2802, 2
    %v2819 = vrot.slane %v2803, 2
    %v2820 = vrot.slane %v2804, 2
    %v2821 = vrot.slane %v2805, 2
    %v2822 = vrot.slane %v2806, 2
    %v2823 = vrot.slane %v2807, 2
    %v2832 = vmax.f32 %v2800, %v2816
    %v2833 = vmax.f32 %v2801, %v2817
    %v2834 = vmax.f32 %v2802, %v2818
    %v2835 = vmax.f32 %v2803, %v2819
    %v2836 = vmax.f32 %v2804, %v2820
    %v2837 = vmax.f32 %v2805, %v2821
    %v2838 = vmax.f32 %v2806, %v2822
    %v2839 = vmax.f32 %v2807, %v2823
    %v2840 = vmax.f32 %v2832, 0.0
    %v2841 = vmax.f32 %v2833, 0.0
    %v2842 = vmax.f32 %v2834, 0.0
    %v2843 = vmax.f32 %v2835, 0.0
    %v2844 = vmax.f32 %v2836, 0.0
    %v2845 = vmax.f32 %v2837, 0.0
    %v2846 = vmax.f32 %v2838, 0.0
    %v2847 = vmax.f32 %v2839, 0.0
    %v2848 = vld [vmem:[%s7] sm:$0xf]
    %v2849 = vld [vmem:[%s7 + $0x4] sm:$0xf]
    %v2850 = vld [vmem:[%s7 + $0x8] sm:$0xf]
    %v2851 = vld [vmem:[%s7 + $0xc] sm:$0xf]
    %v2852 = vld [vmem:[%s7 + $0x10] sm:$0xf]
    %v2853 = vld [vmem:[%s7 + $0x14] sm:$0xf]
    %v2854 = vld [vmem:[%s7 + $0x18] sm:$0xf]
    %v2855 = vld [vmem:[%s7 + $0x1c] sm:$0xf]
    %v2856 = vld [vmem:[%s7 + $0x20] sm:$0xf]
    %v2857 = vld [vmem:[%s7 + $0x24] sm:$0xf]
    %v2858 = vld [vmem:[%s7 + $0x28] sm:$0xf]
    %v2859 = vld [vmem:[%s7 + $0x2c] sm:$0xf]
    %v2860 = vld [vmem:[%s7 + $0x30] sm:$0xf]
    %v2861 = vld [vmem:[%s7 + $0x34] sm:$0xf]
    %v2862 = vld [vmem:[%s7 + $0x38] sm:$0xf]
    %v2863 = vld [vmem:[%s7 + $0x3c] sm:$0xf]
    %v2864 = vpack.c.bf16 %v2840, %v2840
    %v2865 = vpack.c.bf16 %v2844, %v2844
    %s2866 = scalar_lea.vmem %s7, 64
    %v2867 = vld [vmem:[%s2866] sm:$0xf]
    %v2868 = vld [vmem:[%s2866 + $0x4] sm:$0xf]
    %v2869 = vld [vmem:[%s2866 + $0x8] sm:$0xf]
    %v2870 = vld [vmem:[%s2866 + $0xc] sm:$0xf]
    %v2871 = vld [vmem:[%s2866 + $0x10] sm:$0xf]
    %v2872 = vld [vmem:[%s2866 + $0x14] sm:$0xf]
    %v2873 = vld [vmem:[%s2866 + $0x18] sm:$0xf]
    %v2874 = vld [vmem:[%s2866 + $0x1c] sm:$0xf]
    %v2875 = vld [vmem:[%s2866 + $0x20] sm:$0xf]
    %v2876 = vld [vmem:[%s2866 + $0x24] sm:$0xf]
    %v2877 = vld [vmem:[%s2866 + $0x28] sm:$0xf]
    %v2878 = vld [vmem:[%s2866 + $0x2c] sm:$0xf]
    %v2879 = vld [vmem:[%s2866 + $0x30] sm:$0xf]
    %v2880 = vld [vmem:[%s2866 + $0x34] sm:$0xf]
    %v2881 = vld [vmem:[%s2866 + $0x38] sm:$0xf]
    %v2882 = vld [vmem:[%s2866 + $0x3c] sm:$0xf]
    %v2883 = vpack.c.bf16 %v2841, %v2841
    %v2884 = vpack.c.bf16 %v2845, %v2845
    %v2887 = vunpack.c.l.b16 %v2883
    %v2888 = vunpack.c.l.b16 %v2884
    %v2889 = vrot.slane %v2888, 7
    %v2890 = vsel %vm1404, %v2889, %v2887
    %v2891 = vpack.c.b16 %v2890, %v2890
    %v2909 = vunpack.c.l.b16 %v2867
    %v2910 = vunpack.c.l.b16 %v2868
    %v2911 = vunpack.c.l.b16 %v2869
    %v2912 = vunpack.c.l.b16 %v2870
    %v2913 = vunpack.c.l.b16 %v2871
    %v2914 = vunpack.c.l.b16 %v2872
    %v2915 = vunpack.c.l.b16 %v2873
    %v2916 = vunpack.c.l.b16 %v2874
    %v2917 = vunpack.c.l.b16 %v2875
    %v2918 = vunpack.c.l.b16 %v2876
    %v2919 = vunpack.c.l.b16 %v2877
    %v2920 = vunpack.c.l.b16 %v2878
    %v2921 = vunpack.c.l.b16 %v2879
    %v2922 = vunpack.c.l.b16 %v2880
    %v2923 = vunpack.c.l.b16 %v2881
    %v2924 = vunpack.c.l.b16 %v2882
    %v2925 = vpack.c.b16 %v2910, %v2909
    %v2926 = vpack.c.b16 %v2912, %v2911
    %v2927 = vpack.c.b16 %v2914, %v2913
    %v2928 = vpack.c.b16 %v2916, %v2915
    %v2929 = vpack.c.b16 %v2918, %v2917
    %v2930 = vpack.c.b16 %v2920, %v2919
    %v2931 = vpack.c.b16 %v2922, %v2921
    %v2932 = vpack.c.b16 %v2924, %v2923
    %2941 = vmatprep.subr.bf16.mxu0 0
    %2942 = vmatpush1.bf16.msra.mxu0 %v2932
    %2943 = vmatprep.subr.bf16.mxu0 0
    %2944 = vmatpush1.bf16.msra.mxu0 %v2931
    %2945 = vmatprep.subr.bf16.mxu0 0
    %2946 = vmatpush1.bf16.msra.mxu0 %v2930
    %2947 = vmatprep.subr.bf16.mxu0 0
    %2948 = vmatpush1.bf16.msra.mxu0 %v2929
    %2949 = vmatprep.subr.bf16.mxu0 0
    %2950 = vmatpush1.bf16.msra.mxu0 %v2928
    %2951 = vmatprep.subr.bf16.mxu0 0
    %2952 = vmatpush1.bf16.msra.mxu0 %v2927
    %2953 = vmatprep.subr.bf16.mxu0 0
    %2954 = vmatpush1.bf16.msra.mxu0 %v2926
    %2955 = vmatprep.subr.bf16.mxu0 0
    %2956 = vmatpush1.bf16.msra.mxu0 %v2925
    %2957 = vmatprep.subr.bf16.mxu0 0
    %2958 = vmatpush2.bf16.msra.mxu0 0
    %2959 = vmatprep.subr.bf16.mxu0 0
    %2960 = vmatpush2.bf16.msra.mxu0 0
    %2961 = vmatprep.subr.bf16.mxu0 0
    %2962 = vmatpush2.bf16.msra.mxu0 0
    %2963 = vmatprep.subr.bf16.mxu0 0
    %2964 = vmatpush2.bf16.msra.mxu0 0
    %2965 = vmatprep.subr.bf16.mxu0 0
    %2966 = vmatpush2.bf16.msra.mxu0 0
    %2967 = vmatprep.subr.bf16.mxu0 0
    %2968 = vmatpush2.bf16.msra.mxu0 0
    %2969 = vmatprep.subr.bf16.mxu0 0
    %2970 = vmatpush2.bf16.msra.mxu0 0
    %2971 = vmatprep.subr.bf16.mxu0 0
    %2972 = vmatpush2.bf16.msra.mxu0 0
    %2973 = vmatprep.mubr.bf16.mxu0 0
    %2974 = vmatmul.mubr.bf16.gmra.mxu0 %v2891
    %v2975 = vpop.f32.mrf.mxu0
    %v2976 = vadd.f32 0.0, %v2975
    %v2977 = vpop.f32.mrf.mxu0
    %v2978 = vpop.f32.mrf.mxu0
    %v2979 = vpop.f32.mrf.mxu0
    %2980 = vdwg.mxu0
    %v2983 = vunpack.c.l.b16 %v2864
    %v2984 = vunpack.c.l.b16 %v2865
    %v2985 = vrot.slane %v2984, 7
    %v2986 = vsel %vm1404, %v2985, %v2983
    %v2987 = vpack.c.b16 %v2986, %v2986
    %v3005 = vunpack.c.l.b16 %v2848
    %v3006 = vunpack.c.l.b16 %v2849
    %v3007 = vunpack.c.l.b16 %v2850
    %v3008 = vunpack.c.l.b16 %v2851
    %v3009 = vunpack.c.l.b16 %v2852
    %v3010 = vunpack.c.l.b16 %v2853
    %v3011 = vunpack.c.l.b16 %v2854
    %v3012 = vunpack.c.l.b16 %v2855
    %v3013 = vunpack.c.l.b16 %v2856
    %v3014 = vunpack.c.l.b16 %v2857
    %v3015 = vunpack.c.l.b16 %v2858
    %v3016 = vunpack.c.l.b16 %v2859
    %v3017 = vunpack.c.l.b16 %v2860
    %v3018 = vunpack.c.l.b16 %v2861
    %v3019 = vunpack.c.l.b16 %v2862
    %v3020 = vunpack.c.l.b16 %v2863
    %v3021 = vpack.c.b16 %v3006, %v3005
    %v3022 = vpack.c.b16 %v3008, %v3007
    %v3023 = vpack.c.b16 %v3010, %v3009
    %v3024 = vpack.c.b16 %v3012, %v3011
    %v3025 = vpack.c.b16 %v3014, %v3013
    %v3026 = vpack.c.b16 %v3016, %v3015
    %v3027 = vpack.c.b16 %v3018, %v3017
    %v3028 = vpack.c.b16 %v3020, %v3019
    %3037 = vmatprep.subr.bf16.mxu0 0
    %3038 = vmatpush1.bf16.msra.mxu0 %v3028
    %3039 = vmatprep.subr.bf16.mxu0 0
    %3040 = vmatpush1.bf16.msra.mxu0 %v3027
    %3041 = vmatprep.subr.bf16.mxu0 0
    %3042 = vmatpush1.bf16.msra.mxu0 %v3026
    %3043 = vmatprep.subr.bf16.mxu0 0
    %3044 = vmatpush1.bf16.msra.mxu0 %v3025
    %3045 = vmatprep.subr.bf16.mxu0 0
    %3046 = vmatpush1.bf16.msra.mxu0 %v3024
    %3047 = vmatprep.subr.bf16.mxu0 0
    %3048 = vmatpush1.bf16.msra.mxu0 %v3023
    %3049 = vmatprep.subr.bf16.mxu0 0
    %3050 = vmatpush1.bf16.msra.mxu0 %v3022
    %3051 = vmatprep.subr.bf16.mxu0 0
    %3052 = vmatpush1.bf16.msra.mxu0 %v3021
    %3053 = vmatprep.subr.bf16.mxu0 0
    %3054 = vmatpush2.bf16.msra.mxu0 0
    %3055 = vmatprep.subr.bf16.mxu0 0
    %3056 = vmatpush2.bf16.msra.mxu0 0
    %3057 = vmatprep.subr.bf16.mxu0 0
    %3058 = vmatpush2.bf16.msra.mxu0 0
    %3059 = vmatprep.subr.bf16.mxu0 0
    %3060 = vmatpush2.bf16.msra.mxu0 0
    %3061 = vmatprep.subr.bf16.mxu0 0
    %3062 = vmatpush2.bf16.msra.mxu0 0
    %3063 = vmatprep.subr.bf16.mxu0 0
    %3064 = vmatpush2.bf16.msra.mxu0 0
    %3065 = vmatprep.subr.bf16.mxu0 0
    %3066 = vmatpush2.bf16.msra.mxu0 0
    %3067 = vmatprep.subr.bf16.mxu0 0
    %3068 = vmatpush2.bf16.msra.mxu0 0
    %3069 = vmatprep.mubr.bf16.mxu0 0
    %3070 = vmatmul.mubr.bf16.gmra.mxu0 %v2987
    %v3071 = vpop.f32.mrf.mxu0
    %v3072 = vadd.f32 %v2976, %v3071
    %v3073 = vpop.f32.mrf.mxu0
    %v3074 = vpop.f32.mrf.mxu0
    %v3075 = vpop.f32.mrf.mxu0
    %3076 = vdwg.mxu0
    %s3077 = scalar_lea.vmem %s7, 128
    %v3078 = vld [vmem:[%s3077] sm:$0xf]
    %v3079 = vld [vmem:[%s3077 + $0x4] sm:$0xf]
    %v3080 = vld [vmem:[%s3077 + $0x8] sm:$0xf]
    %v3081 = vld [vmem:[%s3077 + $0xc] sm:$0xf]
    %v3082 = vld [vmem:[%s3077 + $0x10] sm:$0xf]
    %v3083 = vld [vmem:[%s3077 + $0x14] sm:$0xf]
    %v3084 = vld [vmem:[%s3077 + $0x18] sm:$0xf]
    %v3085 = vld [vmem:[%s3077 + $0x1c] sm:$0xf]
    %v3086 = vld [vmem:[%s3077 + $0x20] sm:$0xf]
    %v3087 = vld [vmem:[%s3077 + $0x24] sm:$0xf]
    %v3088 = vld [vmem:[%s3077 + $0x28] sm:$0xf]
    %v3089 = vld [vmem:[%s3077 + $0x2c] sm:$0xf]
    %v3090 = vld [vmem:[%s3077 + $0x30] sm:$0xf]
    %v3091 = vld [vmem:[%s3077 + $0x34] sm:$0xf]
    %v3092 = vld [vmem:[%s3077 + $0x38] sm:$0xf]
    %v3093 = vld [vmem:[%s3077 + $0x3c] sm:$0xf]
    %v3094 = vpack.c.bf16 %v2842, %v2842
    %v3095 = vpack.c.bf16 %v2846, %v2846
    %v3098 = vunpack.c.l.b16 %v3094
    %v3099 = vunpack.c.l.b16 %v3095
    %v3100 = vrot.slane %v3099, 7
    %v3101 = vsel %vm1404, %v3100, %v3098
    %v3102 = vpack.c.b16 %v3101, %v3101
    %v3120 = vunpack.c.l.b16 %v3078
    %v3121 = vunpack.c.l.b16 %v3079
    %v3122 = vunpack.c.l.b16 %v3080
    %v3123 = vunpack.c.l.b16 %v3081
    %v3124 = vunpack.c.l.b16 %v3082
    %v3125 = vunpack.c.l.b16 %v3083
    %v3126 = vunpack.c.l.b16 %v3084
    %v3127 = vunpack.c.l.b16 %v3085
    %v3128 = vunpack.c.l.b16 %v3086
    %v3129 = vunpack.c.l.b16 %v3087
    %v3130 = vunpack.c.l.b16 %v3088
    %v3131 = vunpack.c.l.b16 %v3089
    %v3132 = vunpack.c.l.b16 %v3090
    %v3133 = vunpack.c.l.b16 %v3091
    %v3134 = vunpack.c.l.b16 %v3092
    %v3135 = vunpack.c.l.b16 %v3093
    %v3136 = vpack.c.b16 %v3121, %v3120
    %v3137 = vpack.c.b16 %v3123, %v3122
    %v3138 = vpack.c.b16 %v3125, %v3124
    %v3139 = vpack.c.b16 %v3127, %v3126
    %v3140 = vpack.c.b16 %v3129, %v3128
    %v3141 = vpack.c.b16 %v3131, %v3130
    %v3142 = vpack.c.b16 %v3133, %v3132
    %v3143 = vpack.c.b16 %v3135, %v3134
    %3152 = vmatprep.subr.bf16.mxu0 0
    %3153 = vmatpush1.bf16.msra.mxu0 %v3143
    %3154 = vmatprep.subr.bf16.mxu0 0
    %3155 = vmatpush1.bf16.msra.mxu0 %v3142
    %3156 = vmatprep.subr.bf16.mxu0 0
    %3157 = vmatpush1.bf16.msra.mxu0 %v3141
    %3158 = vmatprep.subr.bf16.mxu0 0
    %3159 = vmatpush1.bf16.msra.mxu0 %v3140
    %3160 = vmatprep.subr.bf16.mxu0 0
    %3161 = vmatpush1.bf16.msra.mxu0 %v3139
    %3162 = vmatprep.subr.bf16.mxu0 0
    %3163 = vmatpush1.bf16.msra.mxu0 %v3138
    %3164 = vmatprep.subr.bf16.mxu0 0
    %3165 = vmatpush1.bf16.msra.mxu0 %v3137
    %3166 = vmatprep.subr.bf16.mxu0 0
    %3167 = vmatpush1.bf16.msra.mxu0 %v3136
    %3168 = vmatprep.subr.bf16.mxu0 0
    %3169 = vmatpush2.bf16.msra.mxu0 0
    %3170 = vmatprep.subr.bf16.mxu0 0
    %3171 = vmatpush2.bf16.msra.mxu0 0
    %3172 = vmatprep.subr.bf16.mxu0 0
    %3173 = vmatpush2.bf16.msra.mxu0 0
    %3174 = vmatprep.subr.bf16.mxu0 0
    %3175 = vmatpush2.bf16.msra.mxu0 0
    %3176 = vmatprep.subr.bf16.mxu0 0
    %3177 = vmatpush2.bf16.msra.mxu0 0
    %3178 = vmatprep.subr.bf16.mxu0 0
    %3179 = vmatpush2.bf16.msra.mxu0 0
    %3180 = vmatprep.subr.bf16.mxu0 0
    %3181 = vmatpush2.bf16.msra.mxu0 0
    %3182 = vmatprep.subr.bf16.mxu0 0
    %3183 = vmatpush2.bf16.msra.mxu0 0
    %3184 = vmatprep.mubr.bf16.mxu0 0
    %3185 = vmatmul.mubr.bf16.gmra.mxu0 %v3102
    %v3186 = vpop.f32.mrf.mxu0
    %v3187 = vadd.f32 0.0, %v3186
    %v3188 = vpop.f32.mrf.mxu0
    %v3189 = vpop.f32.mrf.mxu0
    %v3190 = vpop.f32.mrf.mxu0
    %3191 = vdwg.mxu0
    %v3192 = vadd.f32 %v3072, %v3187
    %s3193 = scalar_lea.vmem %s7, 192
    %v3194 = vld [vmem:[%s3193] sm:$0xf]
    %v3195 = vld [vmem:[%s3193 + $0x4] sm:$0xf]
    %v3196 = vld [vmem:[%s3193 + $0x8] sm:$0xf]
    %v3197 = vld [vmem:[%s3193 + $0xc] sm:$0xf]
    %v3198 = vld [vmem:[%s3193 + $0x10] sm:$0xf]
    %v3199 = vld [vmem:[%s3193 + $0x14] sm:$0xf]
    %v3200 = vld [vmem:[%s3193 + $0x18] sm:$0xf]
    %v3201 = vld [vmem:[%s3193 + $0x1c] sm:$0xf]
    %v3202 = vld [vmem:[%s3193 + $0x20] sm:$0xf]
    %v3203 = vld [vmem:[%s3193 + $0x24] sm:$0xf]
    %v3204 = vld [vmem:[%s3193 + $0x28] sm:$0xf]
    %v3205 = vld [vmem:[%s3193 + $0x2c] sm:$0xf]
    %v3206 = vld [vmem:[%s3193 + $0x30] sm:$0xf]
    %v3207 = vld [vmem:[%s3193 + $0x34] sm:$0xf]
    %v3208 = vld [vmem:[%s3193 + $0x38] sm:$0xf]
    %v3209 = vld [vmem:[%s3193 + $0x3c] sm:$0xf]
    %v3210 = vpack.c.bf16 %v2843, %v2843
    %v3211 = vpack.c.bf16 %v2847, %v2847
    %v3214 = vunpack.c.l.b16 %v3210
    %v3215 = vunpack.c.l.b16 %v3211
    %v3216 = vrot.slane %v3215, 7
    %v3217 = vsel %vm1404, %v3216, %v3214
    %v3218 = vpack.c.b16 %v3217, %v3217
    %v3236 = vunpack.c.l.b16 %v3194
    %v3237 = vunpack.c.l.b16 %v3195
    %v3238 = vunpack.c.l.b16 %v3196
    %v3239 = vunpack.c.l.b16 %v3197
    %v3240 = vunpack.c.l.b16 %v3198
    %v3241 = vunpack.c.l.b16 %v3199
    %v3242 = vunpack.c.l.b16 %v3200
    %v3243 = vunpack.c.l.b16 %v3201
    %v3244 = vunpack.c.l.b16 %v3202
    %v3245 = vunpack.c.l.b16 %v3203
    %v3246 = vunpack.c.l.b16 %v3204
    %v3247 = vunpack.c.l.b16 %v3205
    %v3248 = vunpack.c.l.b16 %v3206
    %v3249 = vunpack.c.l.b16 %v3207
    %v3250 = vunpack.c.l.b16 %v3208
    %v3251 = vunpack.c.l.b16 %v3209
    %v3252 = vpack.c.b16 %v3237, %v3236
    %v3253 = vpack.c.b16 %v3239, %v3238
    %v3254 = vpack.c.b16 %v3241, %v3240
    %v3255 = vpack.c.b16 %v3243, %v3242
    %v3256 = vpack.c.b16 %v3245, %v3244
    %v3257 = vpack.c.b16 %v3247, %v3246
    %v3258 = vpack.c.b16 %v3249, %v3248
    %v3259 = vpack.c.b16 %v3251, %v3250
    %3268 = vmatprep.subr.bf16.mxu0 0
    %3269 = vmatpush1.bf16.msra.mxu0 %v3259
    %3270 = vmatprep.subr.bf16.mxu0 0
    %3271 = vmatpush1.bf16.msra.mxu0 %v3258
    %3272 = vmatprep.subr.bf16.mxu0 0
    %3273 = vmatpush1.bf16.msra.mxu0 %v3257
    %3274 = vmatprep.subr.bf16.mxu0 0
    %3275 = vmatpush1.bf16.msra.mxu0 %v3256
    %3276 = vmatprep.subr.bf16.mxu0 0
    %3277 = vmatpush1.bf16.msra.mxu0 %v3255
    %3278 = vmatprep.subr.bf16.mxu0 0
    %3279 = vmatpush1.bf16.msra.mxu0 %v3254
    %3280 = vmatprep.subr.bf16.mxu0 0
    %3281 = vmatpush1.bf16.msra.mxu0 %v3253
    %3282 = vmatprep.subr.bf16.mxu0 0
    %3283 = vmatpush1.bf16.msra.mxu0 %v3252
    %3284 = vmatprep.subr.bf16.mxu0 0
    %3285 = vmatpush2.bf16.msra.mxu0 0
    %3286 = vmatprep.subr.bf16.mxu0 0
    %3287 = vmatpush2.bf16.msra.mxu0 0
    %3288 = vmatprep.subr.bf16.mxu0 0
    %3289 = vmatpush2.bf16.msra.mxu0 0
    %3290 = vmatprep.subr.bf16.mxu0 0
    %3291 = vmatpush2.bf16.msra.mxu0 0
    %3292 = vmatprep.subr.bf16.mxu0 0
    %3293 = vmatpush2.bf16.msra.mxu0 0
    %3294 = vmatprep.subr.bf16.mxu0 0
    %3295 = vmatpush2.bf16.msra.mxu0 0
    %3296 = vmatprep.subr.bf16.mxu0 0
    %3297 = vmatpush2.bf16.msra.mxu0 0
    %3298 = vmatprep.subr.bf16.mxu0 0
    %3299 = vmatpush2.bf16.msra.mxu0 0
    %3300 = vmatprep.mubr.bf16.mxu0 0
    %3301 = vmatmul.mubr.bf16.gmra.mxu0 %v3218
    %v3302 = vpop.f32.mrf.mxu0
    %v3303 = vadd.f32 0.0, %v3302
    %v3304 = vpop.f32.mrf.mxu0
    %v3305 = vpop.f32.mrf.mxu0
    %v3306 = vpop.f32.mrf.mxu0
    %3307 = vdwg.mxu0
    %v3308 = vadd.f32 %v3192, %v3303
    %v3309 = vld [vmem:[%s8] sm:$0x1]
    %v3311 = vlaneseq
    %v3312 = vshrl.u32 %v3311, 7
    %v3313 = vsub.s32 0, %v3312
    %v3314 = vrot.slane %v3309, %v3313
    %v3316 = vadd.f32 %v3308, %v3314
    %v3317 = vmax.f32 %v3316, 0.0
    %v3318 = vld [vmem:[%s9] sm:$0xf]
    %v3319 = vld [vmem:[%s9 + $0x4] sm:$0xf]
    %v3320 = vld [vmem:[%s9 + $0x8] sm:$0xf]
    %v3321 = vld [vmem:[%s9 + $0xc] sm:$0xf]
    %v3322 = vpack.c.bf16 %v3317, %v3317
    %v3323 = vld [vmem:[%s10] sm:$0x1]
    %v3325 = vlaneseq
    %v3326 = vshrl.u32 %v3325, 7
    %v3327 = vsub.s32 0, %v3326
    %v3328 = vrot.slane %v3323, %v3327
    %v3334 = vunpack.c.l.b16 %v3318
    %v3335 = vunpack.c.l.b16 %v3319
    %v3336 = vunpack.c.l.b16 %v3320
    %v3337 = vunpack.c.l.b16 %v3321
    %v3338 = vpack.c.b16 %v3335, %v3334
    %v3339 = vpack.c.b16 %v3337, %v3336
    %v3343 = vsel %vm184, %v3322, 0
    %3345 = vmatprep.subr.bf16.mxu0 0
    %3346 = vmatpush1.bf16.msra.mxu0 0
    %3347 = vmatprep.subr.bf16.mxu0 0
    %3348 = vmatpush1.bf16.msra.mxu0 0
    %3349 = vmatprep.subr.bf16.mxu0 0
    %3350 = vmatpush1.bf16.msra.mxu0 0
    %3351 = vmatprep.subr.bf16.mxu0 0
    %3352 = vmatpush1.bf16.msra.mxu0 0
    %3353 = vmatprep.subr.bf16.mxu0 0
    %3354 = vmatpush1.bf16.msra.mxu0 0
    %3355 = vmatprep.subr.bf16.mxu0 0
    %3356 = vmatpush1.bf16.msra.mxu0 0
    %3357 = vmatprep.subr.bf16.mxu0 0
    %3358 = vmatpush1.bf16.msra.mxu0 %v3339
    %3359 = vmatprep.subr.bf16.mxu0 0
    %3360 = vmatpush1.bf16.msra.mxu0 %v3338
    %3361 = vmatprep.subr.bf16.mxu0 0
    %3362 = vmatpush2.bf16.msra.mxu0 0
    %3363 = vmatprep.subr.bf16.mxu0 0
    %3364 = vmatpush2.bf16.msra.mxu0 0
    %3365 = vmatprep.subr.bf16.mxu0 0
    %3366 = vmatpush2.bf16.msra.mxu0 0
    %3367 = vmatprep.subr.bf16.mxu0 0
    %3368 = vmatpush2.bf16.msra.mxu0 0
    %3369 = vmatprep.subr.bf16.mxu0 0
    %3370 = vmatpush2.bf16.msra.mxu0 0
    %3371 = vmatprep.subr.bf16.mxu0 0
    %3372 = vmatpush2.bf16.msra.mxu0 0
    %3373 = vmatprep.subr.bf16.mxu0 0
    %3374 = vmatpush2.bf16.msra.mxu0 0
    %3375 = vmatprep.subr.bf16.mxu0 0
    %3376 = vmatpush2.bf16.msra.mxu0 0
    %3377 = vmatprep.mubr.bf16.mxu0 0
    %3378 = vmatmul.mubr.bf16.gmra.mxu0 %v3343
    %v3379 = vpop.f32.mrf.mxu0
    %v3380 = vadd.f32 %v3328, %v3379
    %v3381 = vpop.f32.mrf.mxu0
    %v3382 = vpop.f32.mrf.mxu0
    %v3383 = vpop.f32.mrf.mxu0
    %3384 = vdwg.mxu0
    %3385 = vst [vmem:[#allocation11] sm:$0x3] %v3380
    // Predicated region
    $region58: #{student_net_forward.1} parent=1 // pred_check
      _
    $region59: #{student_net_forward.1} parent=1 // pred_check_branch
      %3387 = sbr.rel (0) target = $region61
    $region60: #{student_net_forward.1} parent=1 // pred_region
      %s3389 = ssub.s32 32, 32
      %3390 = vsyncadd [#allocation7], %s3389
      %s3392 = sshll.u32 [#allocation11], 4
      %s3393 = int_to_ptr.vmem [resolvable:$true] %s3392
      %3395 = dma.vmem_to_hbm [thread:$0]  %s3393, 32, %s11, [#allocation7]
    $region61: #{student_net_forward.1} parent=1 // pred_fallthru
      _
    // Predicated region
    $region62: #{student_net_forward.1} parent=1 // pred_check
      _
    $region63: #{student_net_forward.1} parent=1 // pred_check_branch
      %3397 = sbr.rel (0) target = $region65
    $region64: #{student_net_forward.1} parent=1 // pred_region
      %3398 = dma.done [#allocation7], 32
    $region65: #{student_net_forward.1} parent=1 // pred_fallthru
      _
    %3399 = vsyncpa [#allocation6], 1
    %3400 = vsyncpa [#allocation9], 1
    %3401 = vsyncpa [#allocation7], 1

</llo_original>
